<compile_context>
chip_gen: v6e
topology: v6e:2x2x1
jax: 0.10.0
libtpu: 0.0.40
codegen_flags: <defaults>
</compile_context>

<pallas_src>
import math

import jax
import jax.numpy as jnp
from jax.experimental import pallas as pl
from jax.experimental.pallas import tpu as pltpu

# ------------------------- problem sizes (small) -----------------------------
B = 2            # batch
LV = 8           # number of video clips (attention "query" length)
LQ = 8           # query-sentence length (attention "key/value" length)
E = 32           # cfg.MODEL.FUSION.EMB_DIM
NUM_HEAD = 4     # cfg.MODEL.FUSION.NUM_HEAD
NUM_LAYERS = 2   # cfg.MODEL.FUSION.NUM_LAYERS
KSIZE = 3        # cfg.MODEL.FUSION.CONVBNRELU.KERNEL_SIZE (padding = 1)
BN_EPS = 1e-5


# ------------------------------ Pallas kernel --------------------------------
def make_fusion_kernel(num_heads, num_layers, ksize):
    def kernel(vid_ref, qry_ref, bias_ref,
               wq_ref, bq_ref, wk_ref, bk_ref, wv_ref, bv_ref,
               wo_ref, bo_ref, conv_ref, bns_ref, bnb_ref,
               out_ref, pad_scr):
        """vid_ref: (B,LV,E)  qry_ref: (B,LQ,E)  bias_ref: (B,LQ) additive mask.

        Stacked per-layer weights (already transposed for right-multiplication):
          wq/wk/wv/wo: (L,E,E)   bq/bk/bv/bo: (L,1,E)
          conv: (L,ksize,E,E)    bns/bnb: (L,1,E)  (BN eval affine, conv bias folded)
        """
        Bn, Lv, En = vid_ref.shape
        Lq = qry_ref.shape[1]
        hd = En // num_heads

        x_kv2 = qry_ref[...].reshape(Bn * Lq, En)          # shared K/V source
        bias = bias_ref[...]                               # (B, LQ)

        pad_scr[...] = jnp.zeros_like(pad_scr)             # zero halo rows once

        v = vid_ref[...]                                   # (B, LV, E) layer state
        for l in range(num_layers):
            # ---- projections (flattened 2D matmuls, f32 MXU accumulation) ----
            v2 = v.reshape(Bn * Lv, En)
            Q = (jnp.dot(v2, wq_ref[l], preferred_element_type=jnp.float32)
                 + bq_ref[l]).reshape(Bn, Lv, En)          # q-scale pre-folded
            K = (jnp.dot(x_kv2, wk_ref[l], preferred_element_type=jnp.float32)
                 + bk_ref[l]).reshape(Bn, Lq, En)
            Vv = (jnp.dot(x_kv2, wv_ref[l], preferred_element_type=jnp.float32)
                  + bv_ref[l]).reshape(Bn, Lq, En)

            # ---- multi-head attention; out-projection split per head ----
            wo_l = wo_ref[l]                               # (E, E)
            acc = jnp.zeros((Bn * Lv, En), jnp.float32)
            for h in range(num_heads):
                sl = slice(h * hd, (h + 1) * hd)
                Qh, Kh, Vh = Q[:, :, sl], K[:, :, sl], Vv[:, :, sl]
                S = jnp.einsum('bqd,bkd->bqk', Qh, Kh,
                               preferred_element_type=jnp.float32)   # (B,LV,LQ)
                S = S + bias[:, None, :]
                S = S - jnp.max(S, axis=-1, keepdims=True)
                P = jnp.exp(S)
                P = P / jnp.sum(P, axis=-1, keepdims=True)
                Oh = jnp.einsum('bqk,bkd->bqd', P, Vh,
                                preferred_element_type=jnp.float32)  # (B,LV,hd)
                acc = acc + jnp.dot(Oh.reshape(Bn * Lv, hd), wo_l[sl, :],
                                    preferred_element_type=jnp.float32)
            attn = (acc + bo_ref[l]).reshape(Bn, Lv, En)   # (B, LV, E)

            # ---- Conv1d(k=3,pad=1) as 3 shifted matmuls via padded scratch ----
            pad_scr[:, 1:1 + Lv, :] = attn
            conv = jnp.zeros((Bn * Lv, En), jnp.float32)
            for k in range(ksize):
                tap = pad_scr[:, k:k + Lv, :].reshape(Bn * Lv, En)
                conv = conv + jnp.dot(tap, conv_ref[l, k],
                                      preferred_element_type=jnp.float32)

            # ---- folded BatchNorm (eval) + ReLU + residual ----
            y = conv * bns_ref[l] + bnb_ref[l]
            v = jnp.maximum(y, 0.0).reshape(Bn, Lv, En) + v

        out_ref[...] = v.astype(out_ref.dtype)

    return kernel


# ------------------------------- wrapper --------------------------------------
def simple_fusion_forward(query_feats, query_masks, vid_feats, params_list,
                          num_heads=NUM_HEAD):
    """query_feats: (B,LQ,E)  query_masks: (B,LQ) {0,1}  vid_feats: (B,LV,E)."""
    Bn, Lv, En = vid_feats.shape
    Lq = query_feats.shape[1]
    L = len(params_list)
    hd = En // num_heads
    scale = 1.0 / math.sqrt(hd)

    f32 = jnp.float32
    # Additive key-padding bias (PyTorch: key_padding_mask = query_masks < 0.1).
    attn_bias = jnp.where(query_masks.astype(f32) < 0.1, -1e30, 0.0).astype(f32)

    # Pre-transpose / pre-fold all weights (layer-stacked).
    wqT = jnp.stack([p["wq"].T * scale for p in params_list])          # (L,E,E)
    bq = jnp.stack([(p["bq"] * scale).reshape(1, En) for p in params_list])
    wkT = jnp.stack([p["wk"].T for p in params_list])
    bk = jnp.stack([p["bk"].reshape(1, En) for p in params_list])
    wvT = jnp.stack([p["wv"].T for p in params_list])
    bv = jnp.stack([p["bv"].reshape(1, En) for p in params_list])
    woT = jnp.stack([p["wo"].T for p in params_list])
    bo = jnp.stack([p["bo"].reshape(1, En) for p in params_list])
    # conv_w: (E_out, E_in, k) -> (k, E_in, E_out) for right multiplication.
    convT = jnp.stack([jnp.transpose(p["conv_w"], (2, 1, 0)) for p in params_list])
    bn_s = jnp.stack([(p["gamma"] / jnp.sqrt(p["var"] + BN_EPS)).reshape(1, En)
                      for p in params_list])
    bn_b = jnp.stack([((p["conv_b"] - p["mean"])
                       * (p["gamma"] / jnp.sqrt(p["var"] + BN_EPS))
                       + p["beta"]).reshape(1, En) for p in params_list])

    kernel = make_fusion_kernel(num_heads, L, KSIZE)
    vmem = pl.BlockSpec(memory_space=pltpu.MemorySpace.VMEM)

    return pl.pallas_call(
        kernel,
        out_shape=jax.ShapeDtypeStruct((Bn, Lv, En), f32),
        in_specs=[vmem] * 14,
        out_specs=vmem,
        scratch_shapes=[pltpu.VMEM((Bn, Lv + 2, En), f32)],   # zero-padded conv buffer
    )(vid_feats.astype(f32), query_feats.astype(f32), attn_bias,
      wqT, bq, wkT, bk, wvT, bv, woT, bo, convT, bn_s, bn_b)


# --------------------------- deterministic params -----------------------------
def init_params(key, num_layers, emb_dim):
    params = []
    s = 1.0 / math.sqrt(emb_dim)
    sc = 1.0 / math.sqrt(KSIZE * emb_dim)
    u = lambda k, shape, a: jax.random.uniform(k, shape, jnp.float32, -a, a)
    for _ in range(num_layers):
        key, *ks = jax.random.split(key, 15)
        params.append({
            "wq": u(ks[0], (emb_dim, emb_dim), s), "bq": u(ks[1], (emb_dim,), s),
            "wk": u(ks[2], (emb_dim, emb_dim), s), "bk": u(ks[3], (emb_dim,), s),
            "wv": u(ks[4], (emb_dim, emb_dim), s), "bv": u(ks[5], (emb_dim,), s),
            "wo": u(ks[6], (emb_dim, emb_dim), s), "bo": u(ks[7], (emb_dim,), s),
            "conv_w": u(ks[8], (emb_dim, emb_dim, KSIZE), sc),
            "conv_b": u(ks[9], (emb_dim,), sc),
            "gamma": 1.0 + 0.1 * jax.random.normal(ks[10], (emb_dim,), jnp.float32),
            "beta": 0.1 * jax.random.normal(ks[11], (emb_dim,), jnp.float32),
            "mean": 0.1 * jax.random.normal(ks[12], (emb_dim,), jnp.float32),
            "var": jax.random.uniform(ks[13], (emb_dim,), jnp.float32, 0.5, 1.5),
        })
    return params


# ------------------------------ pure-JAX reference ----------------------------
def reference(query_feats, query_masks, vid_feats, params_list, num_heads=NUM_HEAD):
    Bn, Lv, En = vid_feats.shape
    Lq = query_feats.shape[1]
    hd = En // num_heads
    bias = jnp.where(query_masks.astype(jnp.float32) < 0.1, -1e30, 0.0)

    v = vid_feats.astype(jnp.float32)
    q = query_feats.astype(jnp.float32)
    for p in params_list:
        Q = v @ p["wq"].T + p["bq"]
        K = q @ p["wk"].T + p["bk"]
        V = q @ p["wv"].T + p["bv"]
        Qh = Q.reshape(Bn, Lv, num_heads, hd).transpose(0, 2, 1, 3)
        Kh = K.reshape(Bn, Lq, num_heads, hd).transpose(0, 2, 1, 3)
        Vh = V.reshape(Bn, Lq, num_heads, hd).transpose(0, 2, 1, 3)
        S = jnp.einsum('bhid,bhjd->bhij', Qh, Kh) / math.sqrt(hd)
        S = S + bias[:, None, None, :]
        P = jax.nn.softmax(S, axis=-1)
        O = jnp.einsum('bhij,bhjd->bhid', P, Vh)
        O = O.transpose(0, 2, 1, 3).reshape(Bn, Lv, En)
        attn = O @ p["wo"].T + p["bo"]

        xp = jnp.pad(attn, ((0, 0), (1, 1), (0, 0)))
        conv = jnp.zeros_like(attn)
        for k in range(KSIZE):
            conv = conv + jnp.einsum('btc,oc->bto', xp[:, k:k + Lv, :],
                                     p["conv_w"][:, :, k])
        conv = conv + p["conv_b"]
        s = p["gamma"] / jnp.sqrt(p["var"] + BN_EPS)
        bn = (conv - p["mean"]) * s + p["beta"]
        v = jnp.maximum(bn, 0.0) + v
    return v


# ----------------------------------- main --------------------------------------
if __name__ == "__main__":
    key = jax.random.PRNGKey(0)
    k_vid, k_qry, k_par = jax.random.split(key, 3)

    vid_feats = jax.random.normal(k_vid, (B, LV, E), jnp.float32)
    query_feats = jax.random.normal(k_qry, (B, LQ, E), jnp.float32)
    q_lengths = jnp.array([LQ, 5], dtype=jnp.int32)                    # ragged query lengths
    query_masks = (jnp.arange(LQ)[None, :] < q_lengths[:, None]).astype(jnp.float32)  # (B,LQ)

    params_list = init_params(k_par, NUM_LAYERS, E)

    out = simple_fusion_forward(query_feats, query_masks, vid_feats, params_list)
    out = jax.block_until_ready(out)

    ref = reference(query_feats, query_masks, vid_feats, params_list)
    assert out.shape == (B, LV, E), out.shape
    max_err = float(jnp.max(jnp.abs(out - ref)))
    assert max_err < 1e-4, f"mismatch vs reference: {max_err}"

    print("KERNEL_OK")
</pallas_src>

<mosaic_0001>
module attributes {stable_mosaic.version = 11 : i64} {
  func.func @kernel(%arg0: memref<2x8x32xf32, #tpu.memory_space<vmem>>, %arg1: memref<2x8x32xf32, #tpu.memory_space<vmem>>, %arg2: memref<2x8xf32, #tpu.memory_space<vmem>>, %arg3: memref<2x32x32xf32, #tpu.memory_space<vmem>>, %arg4: memref<2x1x32xf32, #tpu.memory_space<vmem>>, %arg5: memref<2x32x32xf32, #tpu.memory_space<vmem>>, %arg6: memref<2x1x32xf32, #tpu.memory_space<vmem>>, %arg7: memref<2x32x32xf32, #tpu.memory_space<vmem>>, %arg8: memref<2x1x32xf32, #tpu.memory_space<vmem>>, %arg9: memref<2x32x32xf32, #tpu.memory_space<vmem>>, %arg10: memref<2x1x32xf32, #tpu.memory_space<vmem>>, %arg11: memref<2x3x32x32xf32, #tpu.memory_space<vmem>>, %arg12: memref<2x1x32xf32, #tpu.memory_space<vmem>>, %arg13: memref<2x1x32xf32, #tpu.memory_space<vmem>>, %arg14: memref<2x8x32xf32, #tpu.memory_space<vmem>>, %arg15: memref<2x10x32xf32, #tpu.memory_space<vmem>>) attributes {dimension_semantics = [], scalar_prefetch = 0 : i64, scratch_operands = 1 : i64, tpu.core_type = #tpu.core_type<tc>} {
    %c0 = arith.constant 0 : index
    %c0_0 = arith.constant 0 : index
    %c0_1 = arith.constant 0 : index
    %0 = vector.load %arg1[%c0, %c0_0, %c0_1] : memref<2x8x32xf32, #tpu.memory_space<vmem>>, vector<2x8x32xf32>
    %1 = vector.shape_cast %0 : vector<2x8x32xf32> to vector<16x32xf32>
    %c0_2 = arith.constant 0 : index
    %c0_3 = arith.constant 0 : index
    %2 = vector.load %arg2[%c0_2, %c0_3] : memref<2x8xf32, #tpu.memory_space<vmem>>, vector<2x8xf32>
    %cst = arith.constant 0.000000e+00 : f32
    %3 = vector.broadcast %cst : f32 to vector<2x10x32xf32>
    %c0_4 = arith.constant 0 : index
    %c0_5 = arith.constant 0 : index
    %c0_6 = arith.constant 0 : index
    %4 = vector.load %arg15[%c0_4, %c0_5, %c0_6] : memref<2x10x32xf32, #tpu.memory_space<vmem>>, vector<2x10x32xf32>
    tpu.vector_store %arg15[%c0_4, %c0_5, %c0_6], %3 {strides = array<i32>} : memref<2x10x32xf32, #tpu.memory_space<vmem>>, vector<2x10x32xf32>,
    %c0_7 = arith.constant 0 : index
    %c0_8 = arith.constant 0 : index
    %c0_9 = arith.constant 0 : index
    %5 = vector.load %arg0[%c0_7, %c0_8, %c0_9] : memref<2x8x32xf32, #tpu.memory_space<vmem>>, vector<2x8x32xf32>
    %6 = vector.shape_cast %5 : vector<2x8x32xf32> to vector<16x32xf32>
    %c0_10 = arith.constant 0 : index
    %c0_11 = arith.constant 0 : index
    %c0_12 = arith.constant 0 : index
    %7 = vector.load %arg3[%c0_10, %c0_11, %c0_12] : memref<2x32x32xf32, #tpu.memory_space<vmem>>, vector<1x32x32xf32>
    %8 = vector.shape_cast %7 : vector<1x32x32xf32> to vector<32x32xf32>
    %cst_13 = arith.constant dense<0.000000e+00> : vector<16x32xf32>
    %9 = tpu.matmul %6, %8, %cst_13 {dimension_numbers = #tpu.dot_dimension_numbers<[1], [0], [0], [1], [0, 0, 1, 1], [], []>} : vector<16x32xf32>, vector<32x32xf32>, vector<16x32xf32> -> vector<16x32xf32>
    %c0_14 = arith.constant 0 : index
    %c0_15 = arith.constant 0 : index
    %c0_16 = arith.constant 0 : index
    %10 = vector.load %arg4[%c0_14, %c0_15, %c0_16] : memref<2x1x32xf32, #tpu.memory_space<vmem>>, vector<1x1x32xf32>
    %11 = vector.shape_cast %10 : vector<1x1x32xf32> to vector<1x32xf32>
    %12 = vector.broadcast %11 : vector<1x32xf32> to vector<16x32xf32>
    %13 = arith.addf %9, %12 : vector<16x32xf32>
    %14 = vector.shape_cast %13 : vector<16x32xf32> to vector<2x8x32xf32>
    %c0_17 = arith.constant 0 : index
    %c0_18 = arith.constant 0 : index
    %c0_19 = arith.constant 0 : index
    %15 = vector.load %arg5[%c0_17, %c0_18, %c0_19] : memref<2x32x32xf32, #tpu.memory_space<vmem>>, vector<1x32x32xf32>
    %16 = vector.shape_cast %15 : vector<1x32x32xf32> to vector<32x32xf32>
    %cst_20 = arith.constant dense<0.000000e+00> : vector<16x32xf32>
    %17 = tpu.matmul %1, %16, %cst_20 {dimension_numbers = #tpu.dot_dimension_numbers<[1], [0], [0], [1], [0, 0, 1, 1], [], []>} : vector<16x32xf32>, vector<32x32xf32>, vector<16x32xf32> -> vector<16x32xf32>
    %c0_21 = arith.constant 0 : index
    %c0_22 = arith.constant 0 : index
    %c0_23 = arith.constant 0 : index
    %18 = vector.load %arg6[%c0_21, %c0_22, %c0_23] : memref<2x1x32xf32, #tpu.memory_space<vmem>>, vector<1x1x32xf32>
    %19 = vector.shape_cast %18 : vector<1x1x32xf32> to vector<1x32xf32>
    %20 = vector.broadcast %19 : vector<1x32xf32> to vector<16x32xf32>
    %21 = arith.addf %17, %20 : vector<16x32xf32>
    %22 = vector.shape_cast %21 : vector<16x32xf32> to vector<2x8x32xf32>
    %c0_24 = arith.constant 0 : index
    %c0_25 = arith.constant 0 : index
    %c0_26 = arith.constant 0 : index
    %23 = vector.load %arg7[%c0_24, %c0_25, %c0_26] : memref<2x32x32xf32, #tpu.memory_space<vmem>>, vector<1x32x32xf32>
    %24 = vector.shape_cast %23 : vector<1x32x32xf32> to vector<32x32xf32>
    %cst_27 = arith.constant dense<0.000000e+00> : vector<16x32xf32>
    %25 = tpu.matmul %1, %24, %cst_27 {dimension_numbers = #tpu.dot_dimension_numbers<[1], [0], [0], [1], [0, 0, 1, 1], [], []>} : vector<16x32xf32>, vector<32x32xf32>, vector<16x32xf32> -> vector<16x32xf32>
    %c0_28 = arith.constant 0 : index
    %c0_29 = arith.constant 0 : index
    %c0_30 = arith.constant 0 : index
    %26 = vector.load %arg8[%c0_28, %c0_29, %c0_30] : memref<2x1x32xf32, #tpu.memory_space<vmem>>, vector<1x1x32xf32>
    %27 = vector.shape_cast %26 : vector<1x1x32xf32> to vector<1x32xf32>
    %28 = vector.broadcast %27 : vector<1x32xf32> to vector<16x32xf32>
    %29 = arith.addf %25, %28 : vector<16x32xf32>
    %30 = vector.shape_cast %29 : vector<16x32xf32> to vector<2x8x32xf32>
    %c0_31 = arith.constant 0 : index
    %c0_32 = arith.constant 0 : index
    %c0_33 = arith.constant 0 : index
    %31 = vector.load %arg9[%c0_31, %c0_32, %c0_33] : memref<2x32x32xf32, #tpu.memory_space<vmem>>, vector<1x32x32xf32>
    %32 = vector.shape_cast %31 : vector<1x32x32xf32> to vector<32x32xf32>
    %cst_34 = arith.constant 0.000000e+00 : f32
    %33 = vector.broadcast %cst_34 : f32 to vector<16x32xf32>
    %34 = vector.extract_strided_slice %14 {offsets = [0, 0, 0], sizes = [2, 8, 8], strides = [1, 1, 1]} : vector<2x8x32xf32> to vector<2x8x8xf32>
    %35 = vector.extract_strided_slice %22 {offsets = [0, 0, 0], sizes = [2, 8, 8], strides = [1, 1, 1]} : vector<2x8x32xf32> to vector<2x8x8xf32>
    %36 = vector.extract_strided_slice %30 {offsets = [0, 0, 0], sizes = [2, 8, 8], strides = [1, 1, 1]} : vector<2x8x32xf32> to vector<2x8x8xf32>
    "tpu.trace_start"() <{level = 10 : i32, message = "bqd,bkd->bqk"}> : () -> ()
    %cst_35 = arith.constant dense<0.000000e+00> : vector<2x8x8xf32>
    %37 = tpu.matmul %34, %35, %cst_35 {dimension_numbers = #tpu.dot_dimension_numbers<[2], [2], [1], [1], [0, 0, 0, 1, 1, 1], [0], [0]>} : vector<2x8x8xf32>, vector<2x8x8xf32>, vector<2x8x8xf32> -> vector<2x8x8xf32>
    "tpu.trace_stop"() : () -> ()
    %38 = vector.shape_cast %2 : vector<2x8xf32> to vector<2x1x8xf32>
    %39 = vector.broadcast %38 : vector<2x1x8xf32> to vector<2x8x8xf32>
    %40 = arith.addf %37, %39 : vector<2x8x8xf32>
    %cst_36 = arith.constant dense<0xFF800000> : vector<2x8xf32>
    %41 = vector.multi_reduction <maximumf>, %40, %cst_36 [2] : vector<2x8x8xf32> to vector<2x8xf32>
    %42 = vector.shape_cast %41 : vector<2x8xf32> to vector<2x8x1xf32>
    %43 = vector.broadcast %42 : vector<2x8x1xf32> to vector<2x8x8xf32>
    %44 = arith.subf %40, %43 : vector<2x8x8xf32>
    %45 = math.exp %44 : vector<2x8x8xf32>
    %cst_37 = arith.constant dense<0.000000e+00> : vector<2x8xf32>
    %46 = vector.multi_reduction <add>, %45, %cst_37 [2] : vector<2x8x8xf32> to vector<2x8xf32>
    %47 = vector.shape_cast %46 : vector<2x8xf32> to vector<2x8x1xf32>
    %48 = vector.broadcast %47 : vector<2x8x1xf32> to vector<2x8x8xf32>
    %49 = arith.divf %45, %48 : vector<2x8x8xf32>
    "tpu.trace_start"() <{level = 10 : i32, message = "bqk,bkd->bqd"}> : () -> ()
    %cst_38 = arith.constant dense<0.000000e+00> : vector<2x8x8xf32>
    %50 = tpu.matmul %49, %36, %cst_38 {dimension_numbers = #tpu.dot_dimension_numbers<[2], [1], [1], [2], [0, 0, 0, 1, 1, 2], [0], [0]>} : vector<2x8x8xf32>, vector<2x8x8xf32>, vector<2x8x8xf32> -> vector<2x8x8xf32>
    "tpu.trace_stop"() : () -> ()
    %51 = vector.shape_cast %50 : vector<2x8x8xf32> to vector<16x8xf32>
    %52 = vector.extract_strided_slice %32 {offsets = [0, 0], sizes = [8, 32], strides = [1, 1]} : vector<32x32xf32> to vector<8x32xf32>
    %cst_39 = arith.constant dense<0.000000e+00> : vector<16x32xf32>
    %53 = tpu.matmul %51, %52, %cst_39 {dimension_numbers = #tpu.dot_dimension_numbers<[1], [0], [0], [1], [0, 0, 1, 1], [], []>} : vector<16x8xf32>, vector<8x32xf32>, vector<16x32xf32> -> vector<16x32xf32>
    %54 = arith.addf %33, %53 : vector<16x32xf32>
    %55 = vector.extract_strided_slice %14 {offsets = [0, 0, 8], sizes = [2, 8, 8], strides = [1, 1, 1]} : vector<2x8x32xf32> to vector<2x8x8xf32>
    %56 = vector.extract_strided_slice %22 {offsets = [0, 0, 8], sizes = [2, 8, 8], strides = [1, 1, 1]} : vector<2x8x32xf32> to vector<2x8x8xf32>
    %57 = vector.extract_strided_slice %30 {offsets = [0, 0, 8], sizes = [2, 8, 8], strides = [1, 1, 1]} : vector<2x8x32xf32> to vector<2x8x8xf32>
    "tpu.trace_start"() <{level = 10 : i32, message = "bqd,bkd->bqk"}> : () -> ()
    %cst_40 = arith.constant dense<0.000000e+00> : vector<2x8x8xf32>
    %58 = tpu.matmul %55, %56, %cst_40 {dimension_numbers = #tpu.dot_dimension_numbers<[2], [2], [1], [1], [0, 0, 0, 1, 1, 1], [0], [0]>} : vector<2x8x8xf32>, vector<2x8x8xf32>, vector<2x8x8xf32> -> vector<2x8x8xf32>
    "tpu.trace_stop"() : () -> ()
    %59 = vector.shape_cast %2 : vector<2x8xf32> to vector<2x1x8xf32>
    %60 = vector.broadcast %59 : vector<2x1x8xf32> to vector<2x8x8xf32>
    %61 = arith.addf %58, %60 : vector<2x8x8xf32>
    %cst_41 = arith.constant dense<0xFF800000> : vector<2x8xf32>
    %62 = vector.multi_reduction <maximumf>, %61, %cst_41 [2] : vector<2x8x8xf32> to vector<2x8xf32>
    %63 = vector.shape_cast %62 : vector<2x8xf32> to vector<2x8x1xf32>
    %64 = vector.broadcast %63 : vector<2x8x1xf32> to vector<2x8x8xf32>
    %65 = arith.subf %61, %64 : vector<2x8x8xf32>
    %66 = math.exp %65 : vector<2x8x8xf32>
    %cst_42 = arith.constant dense<0.000000e+00> : vector<2x8xf32>
    %67 = vector.multi_reduction <add>, %66, %cst_42 [2] : vector<2x8x8xf32> to vector<2x8xf32>
    %68 = vector.shape_cast %67 : vector<2x8xf32> to vector<2x8x1xf32>
    %69 = vector.broadcast %68 : vector<2x8x1xf32> to vector<2x8x8xf32>
    %70 = arith.divf %66, %69 : vector<2x8x8xf32>
    "tpu.trace_start"() <{level = 10 : i32, message = "bqk,bkd->bqd"}> : () -> ()
    %cst_43 = arith.constant dense<0.000000e+00> : vector<2x8x8xf32>
    %71 = tpu.matmul %70, %57, %cst_43 {dimension_numbers = #tpu.dot_dimension_numbers<[2], [1], [1], [2], [0, 0, 0, 1, 1, 2], [0], [0]>} : vector<2x8x8xf32>, vector<2x8x8xf32>, vector<2x8x8xf32> -> vector<2x8x8xf32>
    "tpu.trace_stop"() : () -> ()
    %72 = vector.shape_cast %71 : vector<2x8x8xf32> to vector<16x8xf32>
    %73 = vector.extract_strided_slice %32 {offsets = [8, 0], sizes = [8, 32], strides = [1, 1]} : vector<32x32xf32> to vector<8x32xf32>
    %cst_44 = arith.constant dense<0.000000e+00> : vector<16x32xf32>
    %74 = tpu.matmul %72, %73, %cst_44 {dimension_numbers = #tpu.dot_dimension_numbers<[1], [0], [0], [1], [0, 0, 1, 1], [], []>} : vector<16x8xf32>, vector<8x32xf32>, vector<16x32xf32> -> vector<16x32xf32>
    %75 = arith.addf %54, %74 : vector<16x32xf32>
    %76 = vector.extract_strided_slice %14 {offsets = [0, 0, 16], sizes = [2, 8, 8], strides = [1, 1, 1]} : vector<2x8x32xf32> to vector<2x8x8xf32>
    %77 = vector.extract_strided_slice %22 {offsets = [0, 0, 16], sizes = [2, 8, 8], strides = [1, 1, 1]} : vector<2x8x32xf32> to vector<2x8x8xf32>
    %78 = vector.extract_strided_slice %30 {offsets = [0, 0, 16], sizes = [2, 8, 8], strides = [1, 1, 1]} : vector<2x8x32xf32> to vector<2x8x8xf32>
    "tpu.trace_start"() <{level = 10 : i32, message = "bqd,bkd->bqk"}> : () -> ()
    %cst_45 = arith.constant dense<0.000000e+00> : vector<2x8x8xf32>
    %79 = tpu.matmul %76, %77, %cst_45 {dimension_numbers = #tpu.dot_dimension_numbers<[2], [2], [1], [1], [0, 0, 0, 1, 1, 1], [0], [0]>} : vector<2x8x8xf32>, vector<2x8x8xf32>, vector<2x8x8xf32> -> vector<2x8x8xf32>
    "tpu.trace_stop"() : () -> ()
    %80 = vector.shape_cast %2 : vector<2x8xf32> to vector<2x1x8xf32>
    %81 = vector.broadcast %80 : vector<2x1x8xf32> to vector<2x8x8xf32>
    %82 = arith.addf %79, %81 : vector<2x8x8xf32>
    %cst_46 = arith.constant dense<0xFF800000> : vector<2x8xf32>
    %83 = vector.multi_reduction <maximumf>, %82, %cst_46 [2] : vector<2x8x8xf32> to vector<2x8xf32>
    %84 = vector.shape_cast %83 : vector<2x8xf32> to vector<2x8x1xf32>
    %85 = vector.broadcast %84 : vector<2x8x1xf32> to vector<2x8x8xf32>
    %86 = arith.subf %82, %85 : vector<2x8x8xf32>
    %87 = math.exp %86 : vector<2x8x8xf32>
    %cst_47 = arith.constant dense<0.000000e+00> : vector<2x8xf32>
    %88 = vector.multi_reduction <add>, %87, %cst_47 [2] : vector<2x8x8xf32> to vector<2x8xf32>
    %89 = vector.shape_cast %88 : vector<2x8xf32> to vector<2x8x1xf32>
    %90 = vector.broadcast %89 : vector<2x8x1xf32> to vector<2x8x8xf32>
    %91 = arith.divf %87, %90 : vector<2x8x8xf32>
    "tpu.trace_start"() <{level = 10 : i32, message = "bqk,bkd->bqd"}> : () -> ()
    %cst_48 = arith.constant dense<0.000000e+00> : vector<2x8x8xf32>
    %92 = tpu.matmul %91, %78, %cst_48 {dimension_numbers = #tpu.dot_dimension_numbers<[2], [1], [1], [2], [0, 0, 0, 1, 1, 2], [0], [0]>} : vector<2x8x8xf32>, vector<2x8x8xf32>, vector<2x8x8xf32> -> vector<2x8x8xf32>
    "tpu.trace_stop"() : () -> ()
    %93 = vector.shape_cast %92 : vector<2x8x8xf32> to vector<16x8xf32>
    %94 = vector.extract_strided_slice %32 {offsets = [16, 0], sizes = [8, 32], strides = [1, 1]} : vector<32x32xf32> to vector<8x32xf32>
    %cst_49 = arith.constant dense<0.000000e+00> : vector<16x32xf32>
    %95 = tpu.matmul %93, %94, %cst_49 {dimension_numbers = #tpu.dot_dimension_numbers<[1], [0], [0], [1], [0, 0, 1, 1], [], []>} : vector<16x8xf32>, vector<8x32xf32>, vector<16x32xf32> -> vector<16x32xf32>
    %96 = arith.addf %75, %95 : vector<16x32xf32>
    %97 = vector.extract_strided_slice %14 {offsets = [0, 0, 24], sizes = [2, 8, 8], strides = [1, 1, 1]} : vector<2x8x32xf32> to vector<2x8x8xf32>
    %98 = vector.extract_strided_slice %22 {offsets = [0, 0, 24], sizes = [2, 8, 8], strides = [1, 1, 1]} : vector<2x8x32xf32> to vector<2x8x8xf32>
    %99 = vector.extract_strided_slice %30 {offsets = [0, 0, 24], sizes = [2, 8, 8], strides = [1, 1, 1]} : vector<2x8x32xf32> to vector<2x8x8xf32>
    "tpu.trace_start"() <{level = 10 : i32, message = "bqd,bkd->bqk"}> : () -> ()
    %cst_50 = arith.constant dense<0.000000e+00> : vector<2x8x8xf32>
    %100 = tpu.matmul %97, %98, %cst_50 {dimension_numbers = #tpu.dot_dimension_numbers<[2], [2], [1], [1], [0, 0, 0, 1, 1, 1], [0], [0]>} : vector<2x8x8xf32>, vector<2x8x8xf32>, vector<2x8x8xf32> -> vector<2x8x8xf32>
    "tpu.trace_stop"() : () -> ()
    %101 = vector.shape_cast %2 : vector<2x8xf32> to vector<2x1x8xf32>
    %102 = vector.broadcast %101 : vector<2x1x8xf32> to vector<2x8x8xf32>
    %103 = arith.addf %100, %102 : vector<2x8x8xf32>
    %cst_51 = arith.constant dense<0xFF800000> : vector<2x8xf32>
    %104 = vector.multi_reduction <maximumf>, %103, %cst_51 [2] : vector<2x8x8xf32> to vector<2x8xf32>
    %105 = vector.shape_cast %104 : vector<2x8xf32> to vector<2x8x1xf32>
    %106 = vector.broadcast %105 : vector<2x8x1xf32> to vector<2x8x8xf32>
    %107 = arith.subf %103, %106 : vector<2x8x8xf32>
    %108 = math.exp %107 : vector<2x8x8xf32>
    %cst_52 = arith.constant dense<0.000000e+00> : vector<2x8xf32>
    %109 = vector.multi_reduction <add>, %108, %cst_52 [2] : vector<2x8x8xf32> to vector<2x8xf32>
    %110 = vector.shape_cast %109 : vector<2x8xf32> to vector<2x8x1xf32>
    %111 = vector.broadcast %110 : vector<2x8x1xf32> to vector<2x8x8xf32>
    %112 = arith.divf %108, %111 : vector<2x8x8xf32>
    "tpu.trace_start"() <{level = 10 : i32, message = "bqk,bkd->bqd"}> : () -> ()
    %cst_53 = arith.constant dense<0.000000e+00> : vector<2x8x8xf32>
    %113 = tpu.matmul %112, %99, %cst_53 {dimension_numbers = #tpu.dot_dimension_numbers<[2], [1], [1], [2], [0, 0, 0, 1, 1, 2], [0], [0]>} : vector<2x8x8xf32>, vector<2x8x8xf32>, vector<2x8x8xf32> -> vector<2x8x8xf32>
    "tpu.trace_stop"() : () -> ()
    %114 = vector.shape_cast %113 : vector<2x8x8xf32> to vector<16x8xf32>
    %115 = vector.extract_strided_slice %32 {offsets = [24, 0], sizes = [8, 32], strides = [1, 1]} : vector<32x32xf32> to vector<8x32xf32>
    %cst_54 = arith.constant dense<0.000000e+00> : vector<16x32xf32>
    %116 = tpu.matmul %114, %115, %cst_54 {dimension_numbers = #tpu.dot_dimension_numbers<[1], [0], [0], [1], [0, 0, 1, 1], [], []>} : vector<16x8xf32>, vector<8x32xf32>, vector<16x32xf32> -> vector<16x32xf32>
    %117 = arith.addf %96, %116 : vector<16x32xf32>
    %c0_55 = arith.constant 0 : index
    %c0_56 = arith.constant 0 : index
    %c0_57 = arith.constant 0 : index
    %118 = vector.load %arg10[%c0_55, %c0_56, %c0_57] : memref<2x1x32xf32, #tpu.memory_space<vmem>>, vector<1x1x32xf32>
    %119 = vector.shape_cast %118 : vector<1x1x32xf32> to vector<1x32xf32>
    %120 = vector.broadcast %119 : vector<1x32xf32> to vector<16x32xf32>
    %121 = arith.addf %117, %120 : vector<16x32xf32>
    %122 = vector.shape_cast %121 : vector<16x32xf32> to vector<2x8x32xf32>
    %c0_58 = arith.constant 0 : index
    %c1 = arith.constant 1 : index
    %c0_59 = arith.constant 0 : index
    %123 = vector.load %arg15[%c0_58, %c1, %c0_59] : memref<2x10x32xf32, #tpu.memory_space<vmem>>, vector<2x8x32xf32>
    tpu.vector_store %arg15[%c0_58, %c1, %c0_59], %122 {strides = array<i32>} : memref<2x10x32xf32, #tpu.memory_space<vmem>>, vector<2x8x32xf32>,
    %cst_60 = arith.constant 0.000000e+00 : f32
    %124 = vector.broadcast %cst_60 : f32 to vector<16x32xf32>
    %c0_61 = arith.constant 0 : index
    %c0_62 = arith.constant 0 : index
    %c0_63 = arith.constant 0 : index
    %125 = vector.load %arg15[%c0_61, %c0_62, %c0_63] : memref<2x10x32xf32, #tpu.memory_space<vmem>>, vector<2x8x32xf32>
    %126 = vector.shape_cast %125 : vector<2x8x32xf32> to vector<16x32xf32>
    %c0_64 = arith.constant 0 : index
    %c0_65 = arith.constant 0 : index
    %c0_66 = arith.constant 0 : index
    %c0_67 = arith.constant 0 : index
    %127 = vector.load %arg11[%c0_64, %c0_65, %c0_66, %c0_67] : memref<2x3x32x32xf32, #tpu.memory_space<vmem>>, vector<1x1x32x32xf32>
    %128 = vector.shape_cast %127 : vector<1x1x32x32xf32> to vector<32x32xf32>
    %cst_68 = arith.constant dense<0.000000e+00> : vector<16x32xf32>
    %129 = tpu.matmul %126, %128, %cst_68 {dimension_numbers = #tpu.dot_dimension_numbers<[1], [0], [0], [1], [0, 0, 1, 1], [], []>} : vector<16x32xf32>, vector<32x32xf32>, vector<16x32xf32> -> vector<16x32xf32>
    %130 = arith.addf %124, %129 : vector<16x32xf32>
    %c0_69 = arith.constant 0 : index
    %c1_70 = arith.constant 1 : index
    %c0_71 = arith.constant 0 : index
    %131 = vector.load %arg15[%c0_69, %c1_70, %c0_71] : memref<2x10x32xf32, #tpu.memory_space<vmem>>, vector<2x8x32xf32>
    %132 = vector.shape_cast %131 : vector<2x8x32xf32> to vector<16x32xf32>
    %c0_72 = arith.constant 0 : index
    %c1_73 = arith.constant 1 : index
    %c0_74 = arith.constant 0 : index
    %c0_75 = arith.constant 0 : index
    %133 = vector.load %arg11[%c0_72, %c1_73, %c0_74, %c0_75] : memref<2x3x32x32xf32, #tpu.memory_space<vmem>>, vector<1x1x32x32xf32>
    %134 = vector.shape_cast %133 : vector<1x1x32x32xf32> to vector<32x32xf32>
    %cst_76 = arith.constant dense<0.000000e+00> : vector<16x32xf32>
    %135 = tpu.matmul %132, %134, %cst_76 {dimension_numbers = #tpu.dot_dimension_numbers<[1], [0], [0], [1], [0, 0, 1, 1], [], []>} : vector<16x32xf32>, vector<32x32xf32>, vector<16x32xf32> -> vector<16x32xf32>
    %136 = arith.addf %130, %135 : vector<16x32xf32>
    %c0_77 = arith.constant 0 : index
    %c2 = arith.constant 2 : index
    %c0_78 = arith.constant 0 : index
    %137 = vector.load %arg15[%c0_77, %c2, %c0_78] : memref<2x10x32xf32, #tpu.memory_space<vmem>>, vector<2x8x32xf32>
    %138 = vector.shape_cast %137 : vector<2x8x32xf32> to vector<16x32xf32>
    %c0_79 = arith.constant 0 : index
    %c2_80 = arith.constant 2 : index
    %c0_81 = arith.constant 0 : index
    %c0_82 = arith.constant 0 : index
    %139 = vector.load %arg11[%c0_79, %c2_80, %c0_81, %c0_82] : memref<2x3x32x32xf32, #tpu.memory_space<vmem>>, vector<1x1x32x32xf32>
    %140 = vector.shape_cast %139 : vector<1x1x32x32xf32> to vector<32x32xf32>
    %cst_83 = arith.constant dense<0.000000e+00> : vector<16x32xf32>
    %141 = tpu.matmul %138, %140, %cst_83 {dimension_numbers = #tpu.dot_dimension_numbers<[1], [0], [0], [1], [0, 0, 1, 1], [], []>} : vector<16x32xf32>, vector<32x32xf32>, vector<16x32xf32> -> vector<16x32xf32>
    %142 = arith.addf %136, %141 : vector<16x32xf32>
    %c0_84 = arith.constant 0 : index
    %c0_85 = arith.constant 0 : index
    %c0_86 = arith.constant 0 : index
    %143 = vector.load %arg12[%c0_84, %c0_85, %c0_86] : memref<2x1x32xf32, #tpu.memory_space<vmem>>, vector<1x1x32xf32>
    %144 = vector.shape_cast %143 : vector<1x1x32xf32> to vector<1x32xf32>
    %145 = vector.broadcast %144 : vector<1x32xf32> to vector<16x32xf32>
    %146 = arith.mulf %142, %145 : vector<16x32xf32>
    %c0_87 = arith.constant 0 : index
    %c0_88 = arith.constant 0 : index
    %c0_89 = arith.constant 0 : index
    %147 = vector.load %arg13[%c0_87, %c0_88, %c0_89] : memref<2x1x32xf32, #tpu.memory_space<vmem>>, vector<1x1x32xf32>
    %148 = vector.shape_cast %147 : vector<1x1x32xf32> to vector<1x32xf32>
    %149 = vector.broadcast %148 : vector<1x32xf32> to vector<16x32xf32>
    %150 = arith.addf %146, %149 : vector<16x32xf32>
    %cst_90 = arith.constant 0.000000e+00 : f32
    %151 = vector.broadcast %cst_90 : f32 to vector<16x32xf32>
    %152 = arith.maximumf %150, %151 : vector<16x32xf32>
    %153 = vector.shape_cast %152 : vector<16x32xf32> to vector<2x8x32xf32>
    %154 = arith.addf %153, %5 : vector<2x8x32xf32>
    %155 = vector.shape_cast %154 : vector<2x8x32xf32> to vector<16x32xf32>
    %c1_91 = arith.constant 1 : index
    %c0_92 = arith.constant 0 : index
    %c0_93 = arith.constant 0 : index
    %156 = vector.load %arg3[%c1_91, %c0_92, %c0_93] : memref<2x32x32xf32, #tpu.memory_space<vmem>>, vector<1x32x32xf32>
    %157 = vector.shape_cast %156 : vector<1x32x32xf32> to vector<32x32xf32>
    %cst_94 = arith.constant dense<0.000000e+00> : vector<16x32xf32>
    %158 = tpu.matmul %155, %157, %cst_94 {dimension_numbers = #tpu.dot_dimension_numbers<[1], [0], [0], [1], [0, 0, 1, 1], [], []>} : vector<16x32xf32>, vector<32x32xf32>, vector<16x32xf32> -> vector<16x32xf32>
    %c1_95 = arith.constant 1 : index
    %c0_96 = arith.constant 0 : index
    %c0_97 = arith.constant 0 : index
    %159 = vector.load %arg4[%c1_95, %c0_96, %c0_97] : memref<2x1x32xf32, #tpu.memory_space<vmem>>, vector<1x1x32xf32>
    %160 = vector.shape_cast %159 : vector<1x1x32xf32> to vector<1x32xf32>
    %161 = vector.broadcast %160 : vector<1x32xf32> to vector<16x32xf32>
    %162 = arith.addf %158, %161 : vector<16x32xf32>
    %163 = vector.shape_cast %162 : vector<16x32xf32> to vector<2x8x32xf32>
    %c1_98 = arith.constant 1 : index
    %c0_99 = arith.constant 0 : index
    %c0_100 = arith.constant 0 : index
    %164 = vector.load %arg5[%c1_98, %c0_99, %c0_100] : memref<2x32x32xf32, #tpu.memory_space<vmem>>, vector<1x32x32xf32>
    %165 = vector.shape_cast %164 : vector<1x32x32xf32> to vector<32x32xf32>
    %cst_101 = arith.constant dense<0.000000e+00> : vector<16x32xf32>
    %166 = tpu.matmul %1, %165, %cst_101 {dimension_numbers = #tpu.dot_dimension_numbers<[1], [0], [0], [1], [0, 0, 1, 1], [], []>} : vector<16x32xf32>, vector<32x32xf32>, vector<16x32xf32> -> vector<16x32xf32>
    %c1_102 = arith.constant 1 : index
    %c0_103 = arith.constant 0 : index
    %c0_104 = arith.constant 0 : index
    %167 = vector.load %arg6[%c1_102, %c0_103, %c0_104] : memref<2x1x32xf32, #tpu.memory_space<vmem>>, vector<1x1x32xf32>
    %168 = vector.shape_cast %167 : vector<1x1x32xf32> to vector<1x32xf32>
    %169 = vector.broadcast %168 : vector<1x32xf32> to vector<16x32xf32>
    %170 = arith.addf %166, %169 : vector<16x32xf32>
    %171 = vector.shape_cast %170 : vector<16x32xf32> to vector<2x8x32xf32>
    %c1_105 = arith.constant 1 : index
    %c0_106 = arith.constant 0 : index
    %c0_107 = arith.constant 0 : index
    %172 = vector.load %arg7[%c1_105, %c0_106, %c0_107] : memref<2x32x32xf32, #tpu.memory_space<vmem>>, vector<1x32x32xf32>
    %173 = vector.shape_cast %172 : vector<1x32x32xf32> to vector<32x32xf32>
    %cst_108 = arith.constant dense<0.000000e+00> : vector<16x32xf32>
    %174 = tpu.matmul %1, %173, %cst_108 {dimension_numbers = #tpu.dot_dimension_numbers<[1], [0], [0], [1], [0, 0, 1, 1], [], []>} : vector<16x32xf32>, vector<32x32xf32>, vector<16x32xf32> -> vector<16x32xf32>
    %c1_109 = arith.constant 1 : index
    %c0_110 = arith.constant 0 : index
    %c0_111 = arith.constant 0 : index
    %175 = vector.load %arg8[%c1_109, %c0_110, %c0_111] : memref<2x1x32xf32, #tpu.memory_space<vmem>>, vector<1x1x32xf32>
    %176 = vector.shape_cast %175 : vector<1x1x32xf32> to vector<1x32xf32>
    %177 = vector.broadcast %176 : vector<1x32xf32> to vector<16x32xf32>
    %178 = arith.addf %174, %177 : vector<16x32xf32>
    %179 = vector.shape_cast %178 : vector<16x32xf32> to vector<2x8x32xf32>
    %c1_112 = arith.constant 1 : index
    %c0_113 = arith.constant 0 : index
    %c0_114 = arith.constant 0 : index
    %180 = vector.load %arg9[%c1_112, %c0_113, %c0_114] : memref<2x32x32xf32, #tpu.memory_space<vmem>>, vector<1x32x32xf32>
    %181 = vector.shape_cast %180 : vector<1x32x32xf32> to vector<32x32xf32>
    %cst_115 = arith.constant 0.000000e+00 : f32
    %182 = vector.broadcast %cst_115 : f32 to vector<16x32xf32>
    %183 = vector.extract_strided_slice %163 {offsets = [0, 0, 0], sizes = [2, 8, 8], strides = [1, 1, 1]} : vector<2x8x32xf32> to vector<2x8x8xf32>
    %184 = vector.extract_strided_slice %171 {offsets = [0, 0, 0], sizes = [2, 8, 8], strides = [1, 1, 1]} : vector<2x8x32xf32> to vector<2x8x8xf32>
    %185 = vector.extract_strided_slice %179 {offsets = [0, 0, 0], sizes = [2, 8, 8], strides = [1, 1, 1]} : vector<2x8x32xf32> to vector<2x8x8xf32>
    "tpu.trace_start"() <{level = 10 : i32, message = "bqd,bkd->bqk"}> : () -> ()
    %cst_116 = arith.constant dense<0.000000e+00> : vector<2x8x8xf32>
    %186 = tpu.matmul %183, %184, %cst_116 {dimension_numbers = #tpu.dot_dimension_numbers<[2], [2], [1], [1], [0, 0, 0, 1, 1, 1], [0], [0]>} : vector<2x8x8xf32>, vector<2x8x8xf32>, vector<2x8x8xf32> -> vector<2x8x8xf32>
    "tpu.trace_stop"() : () -> ()
    %187 = vector.shape_cast %2 : vector<2x8xf32> to vector<2x1x8xf32>
    %188 = vector.broadcast %187 : vector<2x1x8xf32> to vector<2x8x8xf32>
    %189 = arith.addf %186, %188 : vector<2x8x8xf32>
    %cst_117 = arith.constant dense<0xFF800000> : vector<2x8xf32>
    %190 = vector.multi_reduction <maximumf>, %189, %cst_117 [2] : vector<2x8x8xf32> to vector<2x8xf32>
    %191 = vector.shape_cast %190 : vector<2x8xf32> to vector<2x8x1xf32>
    %192 = vector.broadcast %191 : vector<2x8x1xf32> to vector<2x8x8xf32>
    %193 = arith.subf %189, %192 : vector<2x8x8xf32>
    %194 = math.exp %193 : vector<2x8x8xf32>
    %cst_118 = arith.constant dense<0.000000e+00> : vector<2x8xf32>
    %195 = vector.multi_reduction <add>, %194, %cst_118 [2] : vector<2x8x8xf32> to vector<2x8xf32>
    %196 = vector.shape_cast %195 : vector<2x8xf32> to vector<2x8x1xf32>
    %197 = vector.broadcast %196 : vector<2x8x1xf32> to vector<2x8x8xf32>
    %198 = arith.divf %194, %197 : vector<2x8x8xf32>
    "tpu.trace_start"() <{level = 10 : i32, message = "bqk,bkd->bqd"}> : () -> ()
    %cst_119 = arith.constant dense<0.000000e+00> : vector<2x8x8xf32>
    %199 = tpu.matmul %198, %185, %cst_119 {dimension_numbers = #tpu.dot_dimension_numbers<[2], [1], [1], [2], [0, 0, 0, 1, 1, 2], [0], [0]>} : vector<2x8x8xf32>, vector<2x8x8xf32>, vector<2x8x8xf32> -> vector<2x8x8xf32>
    "tpu.trace_stop"() : () -> ()
    %200 = vector.shape_cast %199 : vector<2x8x8xf32> to vector<16x8xf32>
    %201 = vector.extract_strided_slice %181 {offsets = [0, 0], sizes = [8, 32], strides = [1, 1]} : vector<32x32xf32> to vector<8x32xf32>
    %cst_120 = arith.constant dense<0.000000e+00> : vector<16x32xf32>
    %202 = tpu.matmul %200, %201, %cst_120 {dimension_numbers = #tpu.dot_dimension_numbers<[1], [0], [0], [1], [0, 0, 1, 1], [], []>} : vector<16x8xf32>, vector<8x32xf32>, vector<16x32xf32> -> vector<16x32xf32>
    %203 = arith.addf %182, %202 : vector<16x32xf32>
    %204 = vector.extract_strided_slice %163 {offsets = [0, 0, 8], sizes = [2, 8, 8], strides = [1, 1, 1]} : vector<2x8x32xf32> to vector<2x8x8xf32>
    %205 = vector.extract_strided_slice %171 {offsets = [0, 0, 8], sizes = [2, 8, 8], strides = [1, 1, 1]} : vector<2x8x32xf32> to vector<2x8x8xf32>
    %206 = vector.extract_strided_slice %179 {offsets = [0, 0, 8], sizes = [2, 8, 8], strides = [1, 1, 1]} : vector<2x8x32xf32> to vector<2x8x8xf32>
    "tpu.trace_start"() <{level = 10 : i32, message = "bqd,bkd->bqk"}> : () -> ()
    %cst_121 = arith.constant dense<0.000000e+00> : vector<2x8x8xf32>
    %207 = tpu.matmul %204, %205, %cst_121 {dimension_numbers = #tpu.dot_dimension_numbers<[2], [2], [1], [1], [0, 0, 0, 1, 1, 1], [0], [0]>} : vector<2x8x8xf32>, vector<2x8x8xf32>, vector<2x8x8xf32> -> vector<2x8x8xf32>
    "tpu.trace_stop"() : () -> ()
    %208 = vector.shape_cast %2 : vector<2x8xf32> to vector<2x1x8xf32>
    %209 = vector.broadcast %208 : vector<2x1x8xf32> to vector<2x8x8xf32>
    %210 = arith.addf %207, %209 : vector<2x8x8xf32>
    %cst_122 = arith.constant dense<0xFF800000> : vector<2x8xf32>
    %211 = vector.multi_reduction <maximumf>, %210, %cst_122 [2] : vector<2x8x8xf32> to vector<2x8xf32>
    %212 = vector.shape_cast %211 : vector<2x8xf32> to vector<2x8x1xf32>
    %213 = vector.broadcast %212 : vector<2x8x1xf32> to vector<2x8x8xf32>
    %214 = arith.subf %210, %213 : vector<2x8x8xf32>
    %215 = math.exp %214 : vector<2x8x8xf32>
    %cst_123 = arith.constant dense<0.000000e+00> : vector<2x8xf32>
    %216 = vector.multi_reduction <add>, %215, %cst_123 [2] : vector<2x8x8xf32> to vector<2x8xf32>
    %217 = vector.shape_cast %216 : vector<2x8xf32> to vector<2x8x1xf32>
    %218 = vector.broadcast %217 : vector<2x8x1xf32> to vector<2x8x8xf32>
    %219 = arith.divf %215, %218 : vector<2x8x8xf32>
    "tpu.trace_start"() <{level = 10 : i32, message = "bqk,bkd->bqd"}> : () -> ()
    %cst_124 = arith.constant dense<0.000000e+00> : vector<2x8x8xf32>
    %220 = tpu.matmul %219, %206, %cst_124 {dimension_numbers = #tpu.dot_dimension_numbers<[2], [1], [1], [2], [0, 0, 0, 1, 1, 2], [0], [0]>} : vector<2x8x8xf32>, vector<2x8x8xf32>, vector<2x8x8xf32> -> vector<2x8x8xf32>
    "tpu.trace_stop"() : () -> ()
    %221 = vector.shape_cast %220 : vector<2x8x8xf32> to vector<16x8xf32>
    %222 = vector.extract_strided_slice %181 {offsets = [8, 0], sizes = [8, 32], strides = [1, 1]} : vector<32x32xf32> to vector<8x32xf32>
    %cst_125 = arith.constant dense<0.000000e+00> : vector<16x32xf32>
    %223 = tpu.matmul %221, %222, %cst_125 {dimension_numbers = #tpu.dot_dimension_numbers<[1], [0], [0], [1], [0, 0, 1, 1], [], []>} : vector<16x8xf32>, vector<8x32xf32>, vector<16x32xf32> -> vector<16x32xf32>
    %224 = arith.addf %203, %223 : vector<16x32xf32>
    %225 = vector.extract_strided_slice %163 {offsets = [0, 0, 16], sizes = [2, 8, 8], strides = [1, 1, 1]} : vector<2x8x32xf32> to vector<2x8x8xf32>
    %226 = vector.extract_strided_slice %171 {offsets = [0, 0, 16], sizes = [2, 8, 8], strides = [1, 1, 1]} : vector<2x8x32xf32> to vector<2x8x8xf32>
    %227 = vector.extract_strided_slice %179 {offsets = [0, 0, 16], sizes = [2, 8, 8], strides = [1, 1, 1]} : vector<2x8x32xf32> to vector<2x8x8xf32>
    "tpu.trace_start"() <{level = 10 : i32, message = "bqd,bkd->bqk"}> : () -> ()
    %cst_126 = arith.constant dense<0.000000e+00> : vector<2x8x8xf32>
    %228 = tpu.matmul %225, %226, %cst_126 {dimension_numbers = #tpu.dot_dimension_numbers<[2], [2], [1], [1], [0, 0, 0, 1, 1, 1], [0], [0]>} : vector<2x8x8xf32>, vector<2x8x8xf32>, vector<2x8x8xf32> -> vector<2x8x8xf32>
    "tpu.trace_stop"() : () -> ()
    %229 = vector.shape_cast %2 : vector<2x8xf32> to vector<2x1x8xf32>
    %230 = vector.broadcast %229 : vector<2x1x8xf32> to vector<2x8x8xf32>
    %231 = arith.addf %228, %230 : vector<2x8x8xf32>
    %cst_127 = arith.constant dense<0xFF800000> : vector<2x8xf32>
    %232 = vector.multi_reduction <maximumf>, %231, %cst_127 [2] : vector<2x8x8xf32> to vector<2x8xf32>
    %233 = vector.shape_cast %232 : vector<2x8xf32> to vector<2x8x1xf32>
    %234 = vector.broadcast %233 : vector<2x8x1xf32> to vector<2x8x8xf32>
    %235 = arith.subf %231, %234 : vector<2x8x8xf32>
    %236 = math.exp %235 : vector<2x8x8xf32>
    %cst_128 = arith.constant dense<0.000000e+00> : vector<2x8xf32>
    %237 = vector.multi_reduction <add>, %236, %cst_128 [2] : vector<2x8x8xf32> to vector<2x8xf32>
    %238 = vector.shape_cast %237 : vector<2x8xf32> to vector<2x8x1xf32>
    %239 = vector.broadcast %238 : vector<2x8x1xf32> to vector<2x8x8xf32>
    %240 = arith.divf %236, %239 : vector<2x8x8xf32>
    "tpu.trace_start"() <{level = 10 : i32, message = "bqk,bkd->bqd"}> : () -> ()
    %cst_129 = arith.constant dense<0.000000e+00> : vector<2x8x8xf32>
    %241 = tpu.matmul %240, %227, %cst_129 {dimension_numbers = #tpu.dot_dimension_numbers<[2], [1], [1], [2], [0, 0, 0, 1, 1, 2], [0], [0]>} : vector<2x8x8xf32>, vector<2x8x8xf32>, vector<2x8x8xf32> -> vector<2x8x8xf32>
    "tpu.trace_stop"() : () -> ()
    %242 = vector.shape_cast %241 : vector<2x8x8xf32> to vector<16x8xf32>
    %243 = vector.extract_strided_slice %181 {offsets = [16, 0], sizes = [8, 32], strides = [1, 1]} : vector<32x32xf32> to vector<8x32xf32>
    %cst_130 = arith.constant dense<0.000000e+00> : vector<16x32xf32>
    %244 = tpu.matmul %242, %243, %cst_130 {dimension_numbers = #tpu.dot_dimension_numbers<[1], [0], [0], [1], [0, 0, 1, 1], [], []>} : vector<16x8xf32>, vector<8x32xf32>, vector<16x32xf32> -> vector<16x32xf32>
    %245 = arith.addf %224, %244 : vector<16x32xf32>
    %246 = vector.extract_strided_slice %163 {offsets = [0, 0, 24], sizes = [2, 8, 8], strides = [1, 1, 1]} : vector<2x8x32xf32> to vector<2x8x8xf32>
    %247 = vector.extract_strided_slice %171 {offsets = [0, 0, 24], sizes = [2, 8, 8], strides = [1, 1, 1]} : vector<2x8x32xf32> to vector<2x8x8xf32>
    %248 = vector.extract_strided_slice %179 {offsets = [0, 0, 24], sizes = [2, 8, 8], strides = [1, 1, 1]} : vector<2x8x32xf32> to vector<2x8x8xf32>
    "tpu.trace_start"() <{level = 10 : i32, message = "bqd,bkd->bqk"}> : () -> ()
    %cst_131 = arith.constant dense<0.000000e+00> : vector<2x8x8xf32>
    %249 = tpu.matmul %246, %247, %cst_131 {dimension_numbers = #tpu.dot_dimension_numbers<[2], [2], [1], [1], [0, 0, 0, 1, 1, 1], [0], [0]>} : vector<2x8x8xf32>, vector<2x8x8xf32>, vector<2x8x8xf32> -> vector<2x8x8xf32>
    "tpu.trace_stop"() : () -> ()
    %250 = vector.shape_cast %2 : vector<2x8xf32> to vector<2x1x8xf32>
    %251 = vector.broadcast %250 : vector<2x1x8xf32> to vector<2x8x8xf32>
    %252 = arith.addf %249, %251 : vector<2x8x8xf32>
    %cst_132 = arith.constant dense<0xFF800000> : vector<2x8xf32>
    %253 = vector.multi_reduction <maximumf>, %252, %cst_132 [2] : vector<2x8x8xf32> to vector<2x8xf32>
    %254 = vector.shape_cast %253 : vector<2x8xf32> to vector<2x8x1xf32>
    %255 = vector.broadcast %254 : vector<2x8x1xf32> to vector<2x8x8xf32>
    %256 = arith.subf %252, %255 : vector<2x8x8xf32>
    %257 = math.exp %256 : vector<2x8x8xf32>
    %cst_133 = arith.constant dense<0.000000e+00> : vector<2x8xf32>
    %258 = vector.multi_reduction <add>, %257, %cst_133 [2] : vector<2x8x8xf32> to vector<2x8xf32>
    %259 = vector.shape_cast %258 : vector<2x8xf32> to vector<2x8x1xf32>
    %260 = vector.broadcast %259 : vector<2x8x1xf32> to vector<2x8x8xf32>
    %261 = arith.divf %257, %260 : vector<2x8x8xf32>
    "tpu.trace_start"() <{level = 10 : i32, message = "bqk,bkd->bqd"}> : () -> ()
    %cst_134 = arith.constant dense<0.000000e+00> : vector<2x8x8xf32>
    %262 = tpu.matmul %261, %248, %cst_134 {dimension_numbers = #tpu.dot_dimension_numbers<[2], [1], [1], [2], [0, 0, 0, 1, 1, 2], [0], [0]>} : vector<2x8x8xf32>, vector<2x8x8xf32>, vector<2x8x8xf32> -> vector<2x8x8xf32>
    "tpu.trace_stop"() : () -> ()
    %263 = vector.shape_cast %262 : vector<2x8x8xf32> to vector<16x8xf32>
    %264 = vector.extract_strided_slice %181 {offsets = [24, 0], sizes = [8, 32], strides = [1, 1]} : vector<32x32xf32> to vector<8x32xf32>
    %cst_135 = arith.constant dense<0.000000e+00> : vector<16x32xf32>
    %265 = tpu.matmul %263, %264, %cst_135 {dimension_numbers = #tpu.dot_dimension_numbers<[1], [0], [0], [1], [0, 0, 1, 1], [], []>} : vector<16x8xf32>, vector<8x32xf32>, vector<16x32xf32> -> vector<16x32xf32>
    %266 = arith.addf %245, %265 : vector<16x32xf32>
    %c1_136 = arith.constant 1 : index
    %c0_137 = arith.constant 0 : index
    %c0_138 = arith.constant 0 : index
    %267 = vector.load %arg10[%c1_136, %c0_137, %c0_138] : memref<2x1x32xf32, #tpu.memory_space<vmem>>, vector<1x1x32xf32>
    %268 = vector.shape_cast %267 : vector<1x1x32xf32> to vector<1x32xf32>
    %269 = vector.broadcast %268 : vector<1x32xf32> to vector<16x32xf32>
    %270 = arith.addf %266, %269 : vector<16x32xf32>
    %271 = vector.shape_cast %270 : vector<16x32xf32> to vector<2x8x32xf32>
    %c0_139 = arith.constant 0 : index
    %c1_140 = arith.constant 1 : index
    %c0_141 = arith.constant 0 : index
    %272 = vector.load %arg15[%c0_139, %c1_140, %c0_141] : memref<2x10x32xf32, #tpu.memory_space<vmem>>, vector<2x8x32xf32>
    tpu.vector_store %arg15[%c0_139, %c1_140, %c0_141], %271 {strides = array<i32>} : memref<2x10x32xf32, #tpu.memory_space<vmem>>, vector<2x8x32xf32>,
    %cst_142 = arith.constant 0.000000e+00 : f32
    %273 = vector.broadcast %cst_142 : f32 to vector<16x32xf32>
    %c0_143 = arith.constant 0 : index
    %c0_144 = arith.constant 0 : index
    %c0_145 = arith.constant 0 : index
    %274 = vector.load %arg15[%c0_143, %c0_144, %c0_145] : memref<2x10x32xf32, #tpu.memory_space<vmem>>, vector<2x8x32xf32>
    %275 = vector.shape_cast %274 : vector<2x8x32xf32> to vector<16x32xf32>
    %c1_146 = arith.constant 1 : index
    %c0_147 = arith.constant 0 : index
    %c0_148 = arith.constant 0 : index
    %c0_149 = arith.constant 0 : index
    %276 = vector.load %arg11[%c1_146, %c0_147, %c0_148, %c0_149] : memref<2x3x32x32xf32, #tpu.memory_space<vmem>>, vector<1x1x32x32xf32>
    %277 = vector.shape_cast %276 : vector<1x1x32x32xf32> to vector<32x32xf32>
    %cst_150 = arith.constant dense<0.000000e+00> : vector<16x32xf32>
    %278 = tpu.matmul %275, %277, %cst_150 {dimension_numbers = #tpu.dot_dimension_numbers<[1], [0], [0], [1], [0, 0, 1, 1], [], []>} : vector<16x32xf32>, vector<32x32xf32>, vector<16x32xf32> -> vector<16x32xf32>
    %279 = arith.addf %273, %278 : vector<16x32xf32>
    %c0_151 = arith.constant 0 : index
    %c1_152 = arith.constant 1 : index
    %c0_153 = arith.constant 0 : index
    %280 = vector.load %arg15[%c0_151, %c1_152, %c0_153] : memref<2x10x32xf32, #tpu.memory_space<vmem>>, vector<2x8x32xf32>
    %281 = vector.shape_cast %280 : vector<2x8x32xf32> to vector<16x32xf32>
    %c1_154 = arith.constant 1 : index
    %c1_155 = arith.constant 1 : index
    %c0_156 = arith.constant 0 : index
    %c0_157 = arith.constant 0 : index
    %282 = vector.load %arg11[%c1_154, %c1_155, %c0_156, %c0_157] : memref<2x3x32x32xf32, #tpu.memory_space<vmem>>, vector<1x1x32x32xf32>
    %283 = vector.shape_cast %282 : vector<1x1x32x32xf32> to vector<32x32xf32>
    %cst_158 = arith.constant dense<0.000000e+00> : vector<16x32xf32>
    %284 = tpu.matmul %281, %283, %cst_158 {dimension_numbers = #tpu.dot_dimension_numbers<[1], [0], [0], [1], [0, 0, 1, 1], [], []>} : vector<16x32xf32>, vector<32x32xf32>, vector<16x32xf32> -> vector<16x32xf32>
    %285 = arith.addf %279, %284 : vector<16x32xf32>
    %c0_159 = arith.constant 0 : index
    %c2_160 = arith.constant 2 : index
    %c0_161 = arith.constant 0 : index
    %286 = vector.load %arg15[%c0_159, %c2_160, %c0_161] : memref<2x10x32xf32, #tpu.memory_space<vmem>>, vector<2x8x32xf32>
    %287 = vector.shape_cast %286 : vector<2x8x32xf32> to vector<16x32xf32>
    %c1_162 = arith.constant 1 : index
    %c2_163 = arith.constant 2 : index
    %c0_164 = arith.constant 0 : index
    %c0_165 = arith.constant 0 : index
    %288 = vector.load %arg11[%c1_162, %c2_163, %c0_164, %c0_165] : memref<2x3x32x32xf32, #tpu.memory_space<vmem>>, vector<1x1x32x32xf32>
    %289 = vector.shape_cast %288 : vector<1x1x32x32xf32> to vector<32x32xf32>
    %cst_166 = arith.constant dense<0.000000e+00> : vector<16x32xf32>
    %290 = tpu.matmul %287, %289, %cst_166 {dimension_numbers = #tpu.dot_dimension_numbers<[1], [0], [0], [1], [0, 0, 1, 1], [], []>} : vector<16x32xf32>, vector<32x32xf32>, vector<16x32xf32> -> vector<16x32xf32>
    %291 = arith.addf %285, %290 : vector<16x32xf32>
    %c1_167 = arith.constant 1 : index
    %c0_168 = arith.constant 0 : index
    %c0_169 = arith.constant 0 : index
    %292 = vector.load %arg12[%c1_167, %c0_168, %c0_169] : memref<2x1x32xf32, #tpu.memory_space<vmem>>, vector<1x1x32xf32>
    %293 = vector.shape_cast %292 : vector<1x1x32xf32> to vector<1x32xf32>
    %294 = vector.broadcast %293 : vector<1x32xf32> to vector<16x32xf32>
    %295 = arith.mulf %291, %294 : vector<16x32xf32>
    %c1_170 = arith.constant 1 : index
    %c0_171 = arith.constant 0 : index
    %c0_172 = arith.constant 0 : index
    %296 = vector.load %arg13[%c1_170, %c0_171, %c0_172] : memref<2x1x32xf32, #tpu.memory_space<vmem>>, vector<1x1x32xf32>
    %297 = vector.shape_cast %296 : vector<1x1x32xf32> to vector<1x32xf32>
    %298 = vector.broadcast %297 : vector<1x32xf32> to vector<16x32xf32>
    %299 = arith.addf %295, %298 : vector<16x32xf32>
    %cst_173 = arith.constant 0.000000e+00 : f32
    %300 = vector.broadcast %cst_173 : f32 to vector<16x32xf32>
    %301 = arith.maximumf %299, %300 : vector<16x32xf32>
    %302 = vector.shape_cast %301 : vector<16x32xf32> to vector<2x8x32xf32>
    %303 = arith.addf %302, %154 : vector<2x8x32xf32>
    %c0_174 = arith.constant 0 : index
    %c0_175 = arith.constant 0 : index
    %c0_176 = arith.constant 0 : index
    %304 = vector.load %arg14[%c0_174, %c0_175, %c0_176] : memref<2x8x32xf32, #tpu.memory_space<vmem>>, vector<2x8x32xf32>
    tpu.vector_store %arg14[%c0_174, %c0_175, %c0_176], %303 {strides = array<i32>} : memref<2x8x32xf32, #tpu.memory_space<vmem>>, vector<2x8x32xf32>,
    return
  }
}

</mosaic_0001>

<llo_original>
// kernel: tpu_custom_call.1
$region0: #{tpu_custom_call.1}
  #allocation0 [shape = 'u32[]', space=smem, size = 0x4, offset = 0x4, fixed_abs, tag = 'smem constant byte address 0x4 - core index']
  #allocation1 [shape = 'u32[144,128]{1,0:T(1,128)}', space=vmem, size = 0x12000, scoped, tag = 'internal scratch']
  #allocation2 [shape = 'f32[2,10,32]{2,1,0:T(8,128)}', space=vmem, size = 0x4000, scoped, tag = 'scratch operand']
  %s0 = inlined_call_operand.hbm [shape: f32[2,8,32], index: 0, kind: input, shape index: {}]
  %s1 = inlined_call_operand.hbm [shape: f32[2,8,32], index: 1, kind: input, shape index: {}]
  %s2 = inlined_call_operand.vmem [shape: f32[2,8], index: 2, kind: input, shape index: {}]
  %s3 = inlined_call_operand.hbm [shape: f32[2,32,32], index: 3, kind: input, shape index: {}]
  %s4 = inlined_call_operand.vmem [shape: f32[2,1,32], index: 4, kind: input, shape index: {}]
  %s5 = inlined_call_operand.hbm [shape: f32[2,32,32], index: 5, kind: input, shape index: {}]
  %s6 = inlined_call_operand.vmem [shape: f32[2,1,32], index: 6, kind: input, shape index: {}]
  %s7 = inlined_call_operand.hbm [shape: f32[2,32,32], index: 7, kind: input, shape index: {}]
  %s8 = inlined_call_operand.vmem [shape: f32[2,1,32], index: 8, kind: input, shape index: {}]
  %s9 = inlined_call_operand.hbm [shape: f32[2,32,32], index: 9, kind: input, shape index: {}]
  %s10 = inlined_call_operand.vmem [shape: f32[2,1,32], index: 10, kind: input, shape index: {}]
  %s11 = inlined_call_operand.hbm [shape: f32[2,3,32,32], index: 11, kind: input, shape index: {}]
  %s12 = inlined_call_operand.vmem [shape: f32[2,1,32], index: 12, kind: input, shape index: {}]
  %s13 = inlined_call_operand.vmem [shape: f32[2,1,32], index: 13, kind: input, shape index: {}]
  %s14 = inlined_call_operand.hbm [shape: f32[2,8,32], index: 14, kind: output, shape index: {}]
  %s15 = sld [smem:[#allocation0]]
  $region94: #{tpu_custom_call.1} parent=0
    _
  %s17 = ssub.s32 1, %s15
  %s18 = scalar_select 0, %s17, %s15
  $region1: #{tpu_custom_call.1} parent=0
    #allocation3 [shape = 'u8[8192]{0}', space=vmem, size = 0x2000, scoped, tag = 'input window, operand 0, single buffered']
    #allocation4 [shape = 's32[1]{0}', space=sflag, size = 0x4, scoped, tag = 'scoped memory for tpu_custom_call.1']
    #allocation5 [shape = 's32[1]{0}', space=sflag, size = 0x4, scoped, tag = 'scoped memory for tpu_custom_call.1']
    #allocation6 [shape = 'u8[8192]{0}', space=vmem, size = 0x2000, scoped, tag = 'input window, operand 1, single buffered']
    #allocation7 [shape = 's32[1]{0}', space=sflag, size = 0x4, scoped, tag = 'scoped memory for tpu_custom_call.1']
    #allocation8 [shape = 'u8[32768]{0}', space=vmem, size = 0x8000, scoped, tag = 'input window, operand 3, single buffered']
    #allocation9 [shape = 'u8[32768]{0}', space=vmem, size = 0x8000, scoped, tag = 'input window, operand 5, single buffered']
    #allocation10 [shape = 's32[1]{0}', space=sflag, size = 0x4, scoped, tag = 'scoped memory for tpu_custom_call.1']
    #allocation11 [shape = 'u8[32768]{0}', space=vmem, size = 0x8000, scoped, tag = 'input window, operand 7, single buffered']
    #allocation12 [shape = 'u8[32768]{0}', space=vmem, size = 0x8000, scoped, tag = 'input window, operand 9, single buffered']
    #allocation13 [shape = 's32[1]{0}', space=sflag, size = 0x4, scoped, tag = 'scoped memory for tpu_custom_call.1']
    #allocation14 [shape = 'u8[98304]{0}', space=vmem, size = 0x18000, scoped, tag = 'input window, operand 11, single buffered']
    #allocation15 [shape = 'u8[8192]{0}', space=vmem, size = 0x2000, scoped, tag = 'output window, operand 0, single buffered']
    %19 = vsyncpa [#allocation4], 0
    %20 = vsyncpa [#allocation7], 0
    %21 = vsyncpa [#allocation10], 0
    %22 = vsyncpa [#allocation13], 0
    %23 = vsyncpa [#allocation5], 0
    // Predicated region
    $region2: #{tpu_custom_call.1} parent=1 // pred_check
      _
    $region3: #{tpu_custom_call.1} parent=1 // pred_check_branch
      %25 = sbr.rel (0) target = $region5
    $region4: #{tpu_custom_call.1} parent=1 // pred_region
      %s27 = ssub.s32 256, 256
      %28 = vsyncadd [#allocation4], %s27
      %s29 = sshll.u32 [#allocation3], 4
      %s30 = int_to_ptr.vmem [resolvable:$true] %s29
      %35 = dma.hbm_to_vmem [thread:$0]  %s0, 256, %s30, [#allocation4], 128, 128, 8
    $region5: #{tpu_custom_call.1} parent=1 // pred_fallthru
      _
    // Predicated region
    $region6: #{tpu_custom_call.1} parent=1 // pred_check
      _
    $region7: #{tpu_custom_call.1} parent=1 // pred_check_branch
      %37 = sbr.rel (0) target = $region9
    $region8: #{tpu_custom_call.1} parent=1 // pred_region
      %s39 = ssub.s32 256, 256
      %40 = vsyncadd [#allocation7], %s39
      %s41 = sshll.u32 [#allocation6], 4
      %s42 = int_to_ptr.vmem [resolvable:$true] %s41
      %47 = dma.hbm_to_vmem [thread:$0]  %s1, 256, %s42, [#allocation7], 128, 128, 8
    $region9: #{tpu_custom_call.1} parent=1 // pred_fallthru
      _
    // Predicated region
    $region10: #{tpu_custom_call.1} parent=1 // pred_check
      _
    $region11: #{tpu_custom_call.1} parent=1 // pred_check_branch
      %49 = sbr.rel (0) target = $region13
    $region12: #{tpu_custom_call.1} parent=1 // pred_region
      _
    $region13: #{tpu_custom_call.1} parent=1 // pred_fallthru
      _
    // Predicated region
    $region14: #{tpu_custom_call.1} parent=1 // pred_check
      _
    $region15: #{tpu_custom_call.1} parent=1 // pred_check_branch
      %51 = sbr.rel (0) target = $region17
    $region16: #{tpu_custom_call.1} parent=1 // pred_region
      %s53 = ssub.s32 1024, 1024
      %54 = vsyncadd [#allocation7], %s53
      %s55 = sshll.u32 [#allocation8], 4
      %s56 = int_to_ptr.vmem [resolvable:$true] %s55
      %61 = dma.hbm_to_vmem [thread:$0]  %s3, 1024, %s56, [#allocation7], 128, 128, 8
    $region17: #{tpu_custom_call.1} parent=1 // pred_fallthru
      _
    // Predicated region
    $region18: #{tpu_custom_call.1} parent=1 // pred_check
      _
    $region19: #{tpu_custom_call.1} parent=1 // pred_check_branch
      %63 = sbr.rel (0) target = $region21
    $region20: #{tpu_custom_call.1} parent=1 // pred_region
      _
    $region21: #{tpu_custom_call.1} parent=1 // pred_fallthru
      _
    // Predicated region
    $region22: #{tpu_custom_call.1} parent=1 // pred_check
      _
    $region23: #{tpu_custom_call.1} parent=1 // pred_check_branch
      %65 = sbr.rel (0) target = $region25
    $region24: #{tpu_custom_call.1} parent=1 // pred_region
      %s67 = ssub.s32 1024, 1024
      %68 = vsyncadd [#allocation10], %s67
      %s69 = sshll.u32 [#allocation9], 4
      %s70 = int_to_ptr.vmem [resolvable:$true] %s69
      %75 = dma.hbm_to_vmem [thread:$0]  %s5, 1024, %s70, [#allocation10], 128, 128, 8
    $region25: #{tpu_custom_call.1} parent=1 // pred_fallthru
      _
    // Predicated region
    $region26: #{tpu_custom_call.1} parent=1 // pred_check
      _
    $region27: #{tpu_custom_call.1} parent=1 // pred_check_branch
      %77 = sbr.rel (0) target = $region29
    $region28: #{tpu_custom_call.1} parent=1 // pred_region
      _
    $region29: #{tpu_custom_call.1} parent=1 // pred_fallthru
      _
    // Predicated region
    $region30: #{tpu_custom_call.1} parent=1 // pred_check
      _
    $region31: #{tpu_custom_call.1} parent=1 // pred_check_branch
      %79 = sbr.rel (0) target = $region33
    $region32: #{tpu_custom_call.1} parent=1 // pred_region
      %s81 = ssub.s32 1024, 1024
      %82 = vsyncadd [#allocation10], %s81
      %s83 = sshll.u32 [#allocation11], 4
      %s84 = int_to_ptr.vmem [resolvable:$true] %s83
      %89 = dma.hbm_to_vmem [thread:$0]  %s7, 1024, %s84, [#allocation10], 128, 128, 8
    $region33: #{tpu_custom_call.1} parent=1 // pred_fallthru
      _
    // Predicated region
    $region34: #{tpu_custom_call.1} parent=1 // pred_check
      _
    $region35: #{tpu_custom_call.1} parent=1 // pred_check_branch
      %91 = sbr.rel (0) target = $region37
    $region36: #{tpu_custom_call.1} parent=1 // pred_region
      _
    $region37: #{tpu_custom_call.1} parent=1 // pred_fallthru
      _
    // Predicated region
    $region38: #{tpu_custom_call.1} parent=1 // pred_check
      _
    $region39: #{tpu_custom_call.1} parent=1 // pred_check_branch
      %93 = sbr.rel (0) target = $region41
    $region40: #{tpu_custom_call.1} parent=1 // pred_region
      %s95 = ssub.s32 1024, 1024
      %96 = vsyncadd [#allocation13], %s95
      %s97 = sshll.u32 [#allocation12], 4
      %s98 = int_to_ptr.vmem [resolvable:$true] %s97
      %103 = dma.hbm_to_vmem [thread:$0]  %s9, 1024, %s98, [#allocation13], 128, 128, 8
    $region41: #{tpu_custom_call.1} parent=1 // pred_fallthru
      _
    // Predicated region
    $region42: #{tpu_custom_call.1} parent=1 // pred_check
      _
    $region43: #{tpu_custom_call.1} parent=1 // pred_check_branch
      %105 = sbr.rel (0) target = $region45
    $region44: #{tpu_custom_call.1} parent=1 // pred_region
      _
    $region45: #{tpu_custom_call.1} parent=1 // pred_fallthru
      _
    // Predicated region
    $region46: #{tpu_custom_call.1} parent=1 // pred_check
      _
    $region47: #{tpu_custom_call.1} parent=1 // pred_check_branch
      %107 = sbr.rel (0) target = $region49
    $region48: #{tpu_custom_call.1} parent=1 // pred_region
      %s109 = ssub.s32 3072, 3072
      %110 = vsyncadd [#allocation13], %s109
      %s111 = sshll.u32 [#allocation14], 4
      %s112 = int_to_ptr.vmem [resolvable:$true] %s111
      %117 = dma.hbm_to_vmem [thread:$0]  %s11, 3072, %s112, [#allocation13], 128, 128, 8
    $region49: #{tpu_custom_call.1} parent=1 // pred_fallthru
      _
    // Predicated region
    $region50: #{tpu_custom_call.1} parent=1 // pred_check
      _
    $region51: #{tpu_custom_call.1} parent=1 // pred_check_branch
      %119 = sbr.rel (0) target = $region53
    $region52: #{tpu_custom_call.1} parent=1 // pred_region
      _
    $region53: #{tpu_custom_call.1} parent=1 // pred_fallthru
      _
    // Predicated region
    $region54: #{tpu_custom_call.1} parent=1 // pred_check
      _
    $region55: #{tpu_custom_call.1} parent=1 // pred_check_branch
      %121 = sbr.rel (0) target = $region57
    $region56: #{tpu_custom_call.1} parent=1 // pred_region
      _
    $region57: #{tpu_custom_call.1} parent=1 // pred_fallthru
      _
    // Predicated region
    $region58: #{tpu_custom_call.1} parent=1 // pred_check
      _
    $region59: #{tpu_custom_call.1} parent=1 // pred_check_branch
      %123 = sbr.rel (0) target = $region61
    $region60: #{tpu_custom_call.1} parent=1 // pred_region
      %124 = dma.done [#allocation4], 256
    $region61: #{tpu_custom_call.1} parent=1 // pred_fallthru
      _
    // Predicated region
    $region62: #{tpu_custom_call.1} parent=1 // pred_check
      _
    $region63: #{tpu_custom_call.1} parent=1 // pred_check_branch
      %126 = sbr.rel (0) target = $region65
    $region64: #{tpu_custom_call.1} parent=1 // pred_region
      %127 = dma.done [#allocation7], 256
    $region65: #{tpu_custom_call.1} parent=1 // pred_fallthru
      _
    // Predicated region
    $region66: #{tpu_custom_call.1} parent=1 // pred_check
      _
    $region67: #{tpu_custom_call.1} parent=1 // pred_check_branch
      %129 = sbr.rel (0) target = $region69
    $region68: #{tpu_custom_call.1} parent=1 // pred_region
      %130 = dma.done [#allocation7], 1024
    $region69: #{tpu_custom_call.1} parent=1 // pred_fallthru
      _
    // Predicated region
    $region70: #{tpu_custom_call.1} parent=1 // pred_check
      _
    $region71: #{tpu_custom_call.1} parent=1 // pred_check_branch
      %132 = sbr.rel (0) target = $region73
    $region72: #{tpu_custom_call.1} parent=1 // pred_region
      %133 = dma.done [#allocation10], 1024
    $region73: #{tpu_custom_call.1} parent=1 // pred_fallthru
      _
    // Predicated region
    $region74: #{tpu_custom_call.1} parent=1 // pred_check
      _
    $region75: #{tpu_custom_call.1} parent=1 // pred_check_branch
      %135 = sbr.rel (0) target = $region77
    $region76: #{tpu_custom_call.1} parent=1 // pred_region
      %136 = dma.done [#allocation10], 1024
    $region77: #{tpu_custom_call.1} parent=1 // pred_fallthru
      _
    // Predicated region
    $region78: #{tpu_custom_call.1} parent=1 // pred_check
      _
    $region79: #{tpu_custom_call.1} parent=1 // pred_check_branch
      %138 = sbr.rel (0) target = $region81
    $region80: #{tpu_custom_call.1} parent=1 // pred_region
      %139 = dma.done [#allocation13], 1024
    $region81: #{tpu_custom_call.1} parent=1 // pred_fallthru
      _
    // Predicated region
    $region82: #{tpu_custom_call.1} parent=1 // pred_check
      _
    $region83: #{tpu_custom_call.1} parent=1 // pred_check_branch
      %141 = sbr.rel (0) target = $region85
    $region84: #{tpu_custom_call.1} parent=1 // pred_region
      %142 = dma.done [#allocation13], 3072
    $region85: #{tpu_custom_call.1} parent=1 // pred_fallthru
      _
    %v143 = vld [vmem:[#allocation6] sm:$0xff]
    %v144 = vld [vmem:[#allocation6 + $0x8] sm:$0xff]
    %v145 = vld [vmem:[%s2] sm:$0x3]
    %vm146 = vcmask 261120
    %147 = vst.msk [vmem:[#allocation2] sm:$0xff] %vm146, 0.0
    %vm148 = vcmask 254976
    %149 = vst.msk [vmem:[#allocation2 + $0x8] sm:$0x3] %vm148, 0.0
    %150 = vst.msk [vmem:[#allocation2 + $0x10] sm:$0xff] %vm146, 0.0
    %151 = vst.msk [vmem:[#allocation2 + $0x18] sm:$0x3] %vm148, 0.0
    %v152 = vld [vmem:[#allocation3] sm:$0xff]
    %v153 = vld [vmem:[#allocation3 + $0x8] sm:$0xff]
    %v154 = vld [vmem:[#allocation8] sm:$0xff]
    %v155 = vld [vmem:[#allocation8 + $0x8] sm:$0xff]
    %v156 = vld [vmem:[#allocation8 + $0x10] sm:$0xff]
    %v157 = vld [vmem:[#allocation8 + $0x18] sm:$0xff]
    %v158 = vld [vmem:[%s4] sm:$0x1]
    %v160 = vlaneseq
    %v161 = vshrl.u32 %v160, 7
    %v162 = vsub.s32 0, %v161
    %v163 = vrot.slane %v158, %v162
    %v166 = vsel %vm146, %v152, 0
    %v169 = vsel %vm146, %v153, 0
    %171 = vmatprep.subr.mxu0 0.0
    %172 = vmatpush1.msra.mxu0 0.0
    %173 = vmatprep.subr.mxu0 0.0
    %174 = vmatpush1.msra.mxu0 0.0
    %175 = vmatprep.subr.mxu0 0.0
    %176 = vmatpush1.msra.mxu0 0.0
    %177 = vmatprep.subr.mxu0 0.0
    %178 = vmatpush1.msra.mxu0 0.0
    %179 = vmatprep.subr.mxu0 0.0
    %180 = vmatpush1.msra.mxu0 0.0
    %181 = vmatprep.subr.mxu0 0.0
    %182 = vmatpush1.msra.mxu0 0.0
    %183 = vmatprep.subr.mxu0 0.0
    %184 = vmatpush1.msra.mxu0 0.0
    %185 = vmatprep.subr.mxu0 0.0
    %186 = vmatpush1.msra.mxu0 0.0
    %187 = vmatprep.subr.mxu0 0.0
    %188 = vmatpush1.msra.mxu0 0.0
    %189 = vmatprep.subr.mxu0 0.0
    %190 = vmatpush1.msra.mxu0 0.0
    %191 = vmatprep.subr.mxu0 0.0
    %192 = vmatpush1.msra.mxu0 0.0
    %193 = vmatprep.subr.mxu0 0.0
    %194 = vmatpush1.msra.mxu0 0.0
    %195 = vmatprep.subr.mxu0 0.0
    %196 = vmatpush1.msra.mxu0 %v157
    %197 = vmatprep.subr.mxu0 0.0
    %198 = vmatpush1.msra.mxu0 %v156
    %199 = vmatprep.subr.mxu0 0.0
    %200 = vmatpush1.msra.mxu0 %v155
    %201 = vmatprep.subr.mxu0 0.0
    %202 = vmatpush1.msra.mxu0 %v154
    %203 = vmatprep.subr.mxu0 0.0
    %204 = vmatpush2.msra.mxu0 0.0
    %205 = vmatprep.subr.mxu0 0.0
    %206 = vmatpush2.msra.mxu0 0.0
    %207 = vmatprep.subr.mxu0 0.0
    %208 = vmatpush2.msra.mxu0 0.0
    %209 = vmatprep.subr.mxu0 0.0
    %210 = vmatpush2.msra.mxu0 0.0
    %211 = vmatprep.subr.mxu0 0.0
    %212 = vmatpush2.msra.mxu0 0.0
    %213 = vmatprep.subr.mxu0 0.0
    %214 = vmatpush2.msra.mxu0 0.0
    %215 = vmatprep.subr.mxu0 0.0
    %216 = vmatpush2.msra.mxu0 0.0
    %217 = vmatprep.subr.mxu0 0.0
    %218 = vmatpush2.msra.mxu0 0.0
    %219 = vmatprep.subr.mxu0 0.0
    %220 = vmatpush2.msra.mxu0 0.0
    %221 = vmatprep.subr.mxu0 0.0
    %222 = vmatpush2.msra.mxu0 0.0
    %223 = vmatprep.subr.mxu0 0.0
    %224 = vmatpush2.msra.mxu0 0.0
    %225 = vmatprep.subr.mxu0 0.0
    %226 = vmatpush2.msra.mxu0 0.0
    %227 = vmatprep.subr.mxu0 0.0
    %228 = vmatpush2.msra.mxu0 0.0
    %229 = vmatprep.subr.mxu0 0.0
    %230 = vmatpush2.msra.mxu0 0.0
    %231 = vmatprep.subr.mxu0 0.0
    %232 = vmatpush2.msra.mxu0 0.0
    %233 = vmatprep.subr.mxu0 0.0
    %234 = vmatpush2.msra.mxu0 0.0
    %235 = vmatprep.mubr.f32.mxu0 0.0
    %236 = vmatmul.mubr.f32.gmra.mxu0 %v166
    %v237 = vpop.f32.mrf.mxu0
    %v238 = vadd.f32 %v163, %v237
    %v239 = vpop.f32.mrf.mxu0
    %240 = vmatprep.mubr.f32.mxu0 0.0
    %241 = vmatmul.mubr.f32.gmra.mxu0 %v169
    %v242 = vpop.f32.mrf.mxu0
    %v243 = vadd.f32 %v163, %v242
    %v244 = vpop.f32.mrf.mxu0
    %245 = vdwg.mxu0
    %v246 = vld [vmem:[#allocation9] sm:$0xff]
    %v247 = vld [vmem:[#allocation9 + $0x8] sm:$0xff]
    %v248 = vld [vmem:[#allocation9 + $0x10] sm:$0xff]
    %v249 = vld [vmem:[#allocation9 + $0x18] sm:$0xff]
    %v250 = vld [vmem:[%s6] sm:$0x1]
    %v252 = vlaneseq
    %v253 = vshrl.u32 %v252, 7
    %v254 = vsub.s32 0, %v253
    %v255 = vrot.slane %v250, %v254
    %v258 = vsel %vm146, %v143, 0
    %v261 = vsel %vm146, %v144, 0
    %263 = vmatprep.subr.mxu0 0.0
    %264 = vmatpush1.msra.mxu0 0.0
    %265 = vmatprep.subr.mxu0 0.0
    %266 = vmatpush1.msra.mxu0 0.0
    %267 = vmatprep.subr.mxu0 0.0
    %268 = vmatpush1.msra.mxu0 0.0
    %269 = vmatprep.subr.mxu0 0.0
    %270 = vmatpush1.msra.mxu0 0.0
    %271 = vmatprep.subr.mxu0 0.0
    %272 = vmatpush1.msra.mxu0 0.0
    %273 = vmatprep.subr.mxu0 0.0
    %274 = vmatpush1.msra.mxu0 0.0
    %275 = vmatprep.subr.mxu0 0.0
    %276 = vmatpush1.msra.mxu0 0.0
    %277 = vmatprep.subr.mxu0 0.0
    %278 = vmatpush1.msra.mxu0 0.0
    %279 = vmatprep.subr.mxu0 0.0
    %280 = vmatpush1.msra.mxu0 0.0
    %281 = vmatprep.subr.mxu0 0.0
    %282 = vmatpush1.msra.mxu0 0.0
    %283 = vmatprep.subr.mxu0 0.0
    %284 = vmatpush1.msra.mxu0 0.0
    %285 = vmatprep.subr.mxu0 0.0
    %286 = vmatpush1.msra.mxu0 0.0
    %287 = vmatprep.subr.mxu0 0.0
    %288 = vmatpush1.msra.mxu0 %v249
    %289 = vmatprep.subr.mxu0 0.0
    %290 = vmatpush1.msra.mxu0 %v248
    %291 = vmatprep.subr.mxu0 0.0
    %292 = vmatpush1.msra.mxu0 %v247
    %293 = vmatprep.subr.mxu0 0.0
    %294 = vmatpush1.msra.mxu0 %v246
    %295 = vmatprep.subr.mxu0 0.0
    %296 = vmatpush2.msra.mxu0 0.0
    %297 = vmatprep.subr.mxu0 0.0
    %298 = vmatpush2.msra.mxu0 0.0
    %299 = vmatprep.subr.mxu0 0.0
    %300 = vmatpush2.msra.mxu0 0.0
    %301 = vmatprep.subr.mxu0 0.0
    %302 = vmatpush2.msra.mxu0 0.0
    %303 = vmatprep.subr.mxu0 0.0
    %304 = vmatpush2.msra.mxu0 0.0
    %305 = vmatprep.subr.mxu0 0.0
    %306 = vmatpush2.msra.mxu0 0.0
    %307 = vmatprep.subr.mxu0 0.0
    %308 = vmatpush2.msra.mxu0 0.0
    %309 = vmatprep.subr.mxu0 0.0
    %310 = vmatpush2.msra.mxu0 0.0
    %311 = vmatprep.subr.mxu0 0.0
    %312 = vmatpush2.msra.mxu0 0.0
    %313 = vmatprep.subr.mxu0 0.0
    %314 = vmatpush2.msra.mxu0 0.0
    %315 = vmatprep.subr.mxu0 0.0
    %316 = vmatpush2.msra.mxu0 0.0
    %317 = vmatprep.subr.mxu0 0.0
    %318 = vmatpush2.msra.mxu0 0.0
    %319 = vmatprep.subr.mxu0 0.0
    %320 = vmatpush2.msra.mxu0 0.0
    %321 = vmatprep.subr.mxu0 0.0
    %322 = vmatpush2.msra.mxu0 0.0
    %323 = vmatprep.subr.mxu0 0.0
    %324 = vmatpush2.msra.mxu0 0.0
    %325 = vmatprep.subr.mxu0 0.0
    %326 = vmatpush2.msra.mxu0 0.0
    %327 = vmatprep.mubr.f32.mxu0 0.0
    %328 = vmatmul.mubr.f32.gmra.mxu0 %v258
    %v329 = vpop.f32.mrf.mxu0
    %v330 = vadd.f32 %v255, %v329
    %v331 = vpop.f32.mrf.mxu0
    %332 = vmatprep.mubr.f32.mxu0 0.0
    %333 = vmatmul.mubr.f32.gmra.mxu0 %v261
    %v334 = vpop.f32.mrf.mxu0
    %v335 = vadd.f32 %v255, %v334
    %v336 = vpop.f32.mrf.mxu0
    %337 = vdwg.mxu0
    %v338 = vld [vmem:[#allocation11] sm:$0xff]
    %v339 = vld [vmem:[#allocation11 + $0x8] sm:$0xff]
    %v340 = vld [vmem:[#allocation11 + $0x10] sm:$0xff]
    %v341 = vld [vmem:[#allocation11 + $0x18] sm:$0xff]
    %v342 = vld [vmem:[%s8] sm:$0x1]
    %v344 = vlaneseq
    %v345 = vshrl.u32 %v344, 7
    %v346 = vsub.s32 0, %v345
    %v347 = vrot.slane %v342, %v346
    %349 = vmatprep.subr.mxu0 0.0
    %350 = vmatpush1.msra.mxu0 0.0
    %351 = vmatprep.subr.mxu0 0.0
    %352 = vmatpush1.msra.mxu0 0.0
    %353 = vmatprep.subr.mxu0 0.0
    %354 = vmatpush1.msra.mxu0 0.0
    %355 = vmatprep.subr.mxu0 0.0
    %356 = vmatpush1.msra.mxu0 0.0
    %357 = vmatprep.subr.mxu0 0.0
    %358 = vmatpush1.msra.mxu0 0.0
    %359 = vmatprep.subr.mxu0 0.0
    %360 = vmatpush1.msra.mxu0 0.0
    %361 = vmatprep.subr.mxu0 0.0
    %362 = vmatpush1.msra.mxu0 0.0
    %363 = vmatprep.subr.mxu0 0.0
    %364 = vmatpush1.msra.mxu0 0.0
    %365 = vmatprep.subr.mxu0 0.0
    %366 = vmatpush1.msra.mxu0 0.0
    %367 = vmatprep.subr.mxu0 0.0
    %368 = vmatpush1.msra.mxu0 0.0
    %369 = vmatprep.subr.mxu0 0.0
    %370 = vmatpush1.msra.mxu0 0.0
    %371 = vmatprep.subr.mxu0 0.0
    %372 = vmatpush1.msra.mxu0 0.0
    %373 = vmatprep.subr.mxu0 0.0
    %374 = vmatpush1.msra.mxu0 %v341
    %375 = vmatprep.subr.mxu0 0.0
    %376 = vmatpush1.msra.mxu0 %v340
    %377 = vmatprep.subr.mxu0 0.0
    %378 = vmatpush1.msra.mxu0 %v339
    %379 = vmatprep.subr.mxu0 0.0
    %380 = vmatpush1.msra.mxu0 %v338
    %381 = vmatprep.subr.mxu0 0.0
    %382 = vmatpush2.msra.mxu0 0.0
    %383 = vmatprep.subr.mxu0 0.0
    %384 = vmatpush2.msra.mxu0 0.0
    %385 = vmatprep.subr.mxu0 0.0
    %386 = vmatpush2.msra.mxu0 0.0
    %387 = vmatprep.subr.mxu0 0.0
    %388 = vmatpush2.msra.mxu0 0.0
    %389 = vmatprep.subr.mxu0 0.0
    %390 = vmatpush2.msra.mxu0 0.0
    %391 = vmatprep.subr.mxu0 0.0
    %392 = vmatpush2.msra.mxu0 0.0
    %393 = vmatprep.subr.mxu0 0.0
    %394 = vmatpush2.msra.mxu0 0.0
    %395 = vmatprep.subr.mxu0 0.0
    %396 = vmatpush2.msra.mxu0 0.0
    %397 = vmatprep.subr.mxu0 0.0
    %398 = vmatpush2.msra.mxu0 0.0
    %399 = vmatprep.subr.mxu0 0.0
    %400 = vmatpush2.msra.mxu0 0.0
    %401 = vmatprep.subr.mxu0 0.0
    %402 = vmatpush2.msra.mxu0 0.0
    %403 = vmatprep.subr.mxu0 0.0
    %404 = vmatpush2.msra.mxu0 0.0
    %405 = vmatprep.subr.mxu0 0.0
    %406 = vmatpush2.msra.mxu0 0.0
    %407 = vmatprep.subr.mxu0 0.0
    %408 = vmatpush2.msra.mxu0 0.0
    %409 = vmatprep.subr.mxu0 0.0
    %410 = vmatpush2.msra.mxu0 0.0
    %411 = vmatprep.subr.mxu0 0.0
    %412 = vmatpush2.msra.mxu0 0.0
    %413 = vmatprep.mubr.f32.mxu0 0.0
    %414 = vmatmul.mubr.f32.gmra.mxu0 %v258
    %v415 = vpop.f32.mrf.mxu0
    %v416 = vadd.f32 %v347, %v415
    %v417 = vpop.f32.mrf.mxu0
    %418 = vmatprep.mubr.f32.mxu0 0.0
    %419 = vmatmul.mubr.f32.gmra.mxu0 %v261
    %v420 = vpop.f32.mrf.mxu0
    %v421 = vadd.f32 %v347, %v420
    %v422 = vpop.f32.mrf.mxu0
    %423 = vdwg.mxu0
    %v424 = vld [vmem:[#allocation12] sm:$0xff]
    %v425 = vld [vmem:[#allocation12 + $0x8] sm:$0xff]
    %v426 = vld [vmem:[#allocation12 + $0x10] sm:$0xff]
    %v427 = vld [vmem:[#allocation12 + $0x18] sm:$0xff]
    %v430 = vunpack.c.l.s4 1966171168
    %v431 = vunpack.c.0.s8 %v430
    %v432 = vlaneseq
    %v433 = vshrl.u32 %v432, 7
    %v434 = vsub.s32 %v431, %v433
    %v435 = vrot.slane %v145, %v434
    %v436 = vcombine.high %v435, %v435
    %v438 = vunpack.c.l.s4 1966171168
    %v439 = vunpack.c.0.s8 %v438
    %v440 = vlaneseq
    %v441 = vshrl.u32 %v440, 7
    %v442 = vsub.s32 %v439, %v441
    %v443 = vrot.slane %v435, %v442
    %v445 = vunpack.c.l.s4 1966171168
    %v446 = vunpack.c.0.s8 %v445
    %v447 = vlaneseq
    %v448 = vshrl.u32 %v447, 7
    %v449 = vsub.s32 %v446, %v448
    %v450 = vrot.slane %v436, %v449
    %v451 = vlaneseq
    %v452 = vshrl.u32 %v451, 7
    %v453 = vsub.s32 0, %v452
    %v454 = vrot.slane %v443, %v453
    %v455 = vlaneseq
    %v456 = vshrl.u32 %v455, 7
    %v457 = vsub.s32 0, %v456
    %v458 = vrot.slane %v450, %v457
    %vm461 = vcmask 64512
    %v463 = vsel %vm461, %v238, 0
    %v466 = vsel %vm461, %v330, 0
    %468 = vmatprep.subr.mxu0 0.0
    %469 = vmatpush1.xpose.msra.mxu0 0.0
    %470 = vmatprep.subr.mxu0 0.0
    %471 = vmatpush1.xpose.msra.mxu0 0.0
    %472 = vmatprep.subr.mxu0 0.0
    %473 = vmatpush1.xpose.msra.mxu0 0.0
    %474 = vmatprep.subr.mxu0 0.0
    %475 = vmatpush1.xpose.msra.mxu0 0.0
    %476 = vmatprep.subr.mxu0 0.0
    %477 = vmatpush1.xpose.msra.mxu0 0.0
    %478 = vmatprep.subr.mxu0 0.0
    %479 = vmatpush1.xpose.msra.mxu0 0.0
    %480 = vmatprep.subr.mxu0 0.0
    %481 = vmatpush1.xpose.msra.mxu0 0.0
    %482 = vmatprep.subr.mxu0 0.0
    %483 = vmatpush1.xpose.msra.mxu0 0.0
    %484 = vmatprep.subr.mxu0 0.0
    %485 = vmatpush1.xpose.msra.mxu0 0.0
    %486 = vmatprep.subr.mxu0 0.0
    %487 = vmatpush1.xpose.msra.mxu0 0.0
    %488 = vmatprep.subr.mxu0 0.0
    %489 = vmatpush1.xpose.msra.mxu0 0.0
    %490 = vmatprep.subr.mxu0 0.0
    %491 = vmatpush1.xpose.msra.mxu0 0.0
    %492 = vmatprep.subr.mxu0 0.0
    %493 = vmatpush1.xpose.msra.mxu0 0.0
    %494 = vmatprep.subr.mxu0 0.0
    %495 = vmatpush1.xpose.msra.mxu0 0.0
    %496 = vmatprep.subr.mxu0 0.0
    %497 = vmatpush1.xpose.msra.mxu0 0.0
    %498 = vmatprep.subr.mxu0 0.0
    %499 = vmatpush1.xpose.msra.mxu0 %v466
    %500 = vmatprep.subr.mxu0 0.0
    %501 = vmatpush2.xpose.msra.mxu0 0.0
    %502 = vmatprep.subr.mxu0 0.0
    %503 = vmatpush2.xpose.msra.mxu0 0.0
    %504 = vmatprep.subr.mxu0 0.0
    %505 = vmatpush2.xpose.msra.mxu0 0.0
    %506 = vmatprep.subr.mxu0 0.0
    %507 = vmatpush2.xpose.msra.mxu0 0.0
    %508 = vmatprep.subr.mxu0 0.0
    %509 = vmatpush2.xpose.msra.mxu0 0.0
    %510 = vmatprep.subr.mxu0 0.0
    %511 = vmatpush2.xpose.msra.mxu0 0.0
    %512 = vmatprep.subr.mxu0 0.0
    %513 = vmatpush2.xpose.msra.mxu0 0.0
    %514 = vmatprep.subr.mxu0 0.0
    %515 = vmatpush2.xpose.msra.mxu0 0.0
    %516 = vmatprep.subr.mxu0 0.0
    %517 = vmatpush2.xpose.msra.mxu0 0.0
    %518 = vmatprep.subr.mxu0 0.0
    %519 = vmatpush2.xpose.msra.mxu0 0.0
    %520 = vmatprep.subr.mxu0 0.0
    %521 = vmatpush2.xpose.msra.mxu0 0.0
    %522 = vmatprep.subr.mxu0 0.0
    %523 = vmatpush2.xpose.msra.mxu0 0.0
    %524 = vmatprep.subr.mxu0 0.0
    %525 = vmatpush2.xpose.msra.mxu0 0.0
    %526 = vmatprep.subr.mxu0 0.0
    %527 = vmatpush2.xpose.msra.mxu0 0.0
    %528 = vmatprep.subr.mxu0 0.0
    %529 = vmatpush2.xpose.msra.mxu0 0.0
    %530 = vmatprep.subr.mxu0 0.0
    %531 = vmatpush2.xpose.msra.mxu0 0.0
    %532 = vmatprep.mubr.f32.mxu0 0.0
    %533 = vmatmul.mubr.f32.gmra.mxu0 %v463
    %v534 = vpop.f32.mrf.mxu0
    %v535 = vadd.f32 %v454, %v534
    %v536 = vpop.f32.mrf.mxu0
    %537 = vdwg.mxu0
    %v539 = vsel %vm461, %v243, 0
    %v542 = vsel %vm461, %v335, 0
    %544 = vmatprep.subr.mxu0 0.0
    %545 = vmatpush1.xpose.msra.mxu0 0.0
    %546 = vmatprep.subr.mxu0 0.0
    %547 = vmatpush1.xpose.msra.mxu0 0.0
    %548 = vmatprep.subr.mxu0 0.0
    %549 = vmatpush1.xpose.msra.mxu0 0.0
    %550 = vmatprep.subr.mxu0 0.0
    %551 = vmatpush1.xpose.msra.mxu0 0.0
    %552 = vmatprep.subr.mxu0 0.0
    %553 = vmatpush1.xpose.msra.mxu0 0.0
    %554 = vmatprep.subr.mxu0 0.0
    %555 = vmatpush1.xpose.msra.mxu0 0.0
    %556 = vmatprep.subr.mxu0 0.0
    %557 = vmatpush1.xpose.msra.mxu0 0.0
    %558 = vmatprep.subr.mxu0 0.0
    %559 = vmatpush1.xpose.msra.mxu0 0.0
    %560 = vmatprep.subr.mxu0 0.0
    %561 = vmatpush1.xpose.msra.mxu0 0.0
    %562 = vmatprep.subr.mxu0 0.0
    %563 = vmatpush1.xpose.msra.mxu0 0.0
    %564 = vmatprep.subr.mxu0 0.0
    %565 = vmatpush1.xpose.msra.mxu0 0.0
    %566 = vmatprep.subr.mxu0 0.0
    %567 = vmatpush1.xpose.msra.mxu0 0.0
    %568 = vmatprep.subr.mxu0 0.0
    %569 = vmatpush1.xpose.msra.mxu0 0.0
    %570 = vmatprep.subr.mxu0 0.0
    %571 = vmatpush1.xpose.msra.mxu0 0.0
    %572 = vmatprep.subr.mxu0 0.0
    %573 = vmatpush1.xpose.msra.mxu0 0.0
    %574 = vmatprep.subr.mxu0 0.0
    %575 = vmatpush1.xpose.msra.mxu0 %v542
    %576 = vmatprep.subr.mxu0 0.0
    %577 = vmatpush2.xpose.msra.mxu0 0.0
    %578 = vmatprep.subr.mxu0 0.0
    %579 = vmatpush2.xpose.msra.mxu0 0.0
    %580 = vmatprep.subr.mxu0 0.0
    %581 = vmatpush2.xpose.msra.mxu0 0.0
    %582 = vmatprep.subr.mxu0 0.0
    %583 = vmatpush2.xpose.msra.mxu0 0.0
    %584 = vmatprep.subr.mxu0 0.0
    %585 = vmatpush2.xpose.msra.mxu0 0.0
    %586 = vmatprep.subr.mxu0 0.0
    %587 = vmatpush2.xpose.msra.mxu0 0.0
    %588 = vmatprep.subr.mxu0 0.0
    %589 = vmatpush2.xpose.msra.mxu0 0.0
    %590 = vmatprep.subr.mxu0 0.0
    %591 = vmatpush2.xpose.msra.mxu0 0.0
    %592 = vmatprep.subr.mxu0 0.0
    %593 = vmatpush2.xpose.msra.mxu0 0.0
    %594 = vmatprep.subr.mxu0 0.0
    %595 = vmatpush2.xpose.msra.mxu0 0.0
    %596 = vmatprep.subr.mxu0 0.0
    %597 = vmatpush2.xpose.msra.mxu0 0.0
    %598 = vmatprep.subr.mxu0 0.0
    %599 = vmatpush2.xpose.msra.mxu0 0.0
    %600 = vmatprep.subr.mxu0 0.0
    %601 = vmatpush2.xpose.msra.mxu0 0.0
    %602 = vmatprep.subr.mxu0 0.0
    %603 = vmatpush2.xpose.msra.mxu0 0.0
    %604 = vmatprep.subr.mxu0 0.0
    %605 = vmatpush2.xpose.msra.mxu0 0.0
    %606 = vmatprep.subr.mxu0 0.0
    %607 = vmatpush2.xpose.msra.mxu0 0.0
    %608 = vmatprep.mubr.f32.mxu0 0.0
    %609 = vmatmul.mubr.f32.gmra.mxu0 %v539
    %v610 = vpop.f32.mrf.mxu0
    %v611 = vadd.f32 %v458, %v610
    %v612 = vpop.f32.mrf.mxu0
    %613 = vdwg.mxu0
    %v614 = vsel %vm461, %v535, -inf
    %615 = vmax.xlane.f32.xlu0 %v614
    %v616 = vpop.xlane.xlu0 %615
    %v617 = vsel %vm461, %v611, -inf
    %618 = vmax.xlane.f32.xlu0 %v617
    %v619 = vpop.xlane.xlu0 %618
    %v620 = vsub.f32 %v535, %v616
    %v621 = vsub.f32 %v611, %v619
    %v622 = vmul.f32 %v620, 1.442695
    %v623 = vpow.pop %v622
    %v624 = vmul.f32 %v621, 1.442695
    %v625 = vpow.pop %v624
    %v626 = vsel %vm461, %v623, 0.0
    %627 = vadd.xlane.f32.xlu0 %v626
    %v628 = vpop.xlane.xlu0 %627
    %v629 = vsel %vm461, %v625, 0.0
    %630 = vadd.xlane.f32.xlu0 %v629
    %v631 = vpop.xlane.xlu0 %630
    %v632 = vrcp.pop %v628
    %v633 = vmul.f32 %v623, %v632
    %v634 = vrcp.pop %v631
    %v635 = vmul.f32 %v625, %v634
    %v637 = vsel %vm461, %v633, 0
    %639 = vmatprep.subr.mxu0 0.0
    %640 = vmatpush1.msra.mxu0 0.0
    %641 = vmatprep.subr.mxu0 0.0
    %642 = vmatpush1.msra.mxu0 0.0
    %643 = vmatprep.subr.mxu0 0.0
    %644 = vmatpush1.msra.mxu0 0.0
    %645 = vmatprep.subr.mxu0 0.0
    %646 = vmatpush1.msra.mxu0 0.0
    %647 = vmatprep.subr.mxu0 0.0
    %648 = vmatpush1.msra.mxu0 0.0
    %649 = vmatprep.subr.mxu0 0.0
    %650 = vmatpush1.msra.mxu0 0.0
    %651 = vmatprep.subr.mxu0 0.0
    %652 = vmatpush1.msra.mxu0 0.0
    %653 = vmatprep.subr.mxu0 0.0
    %654 = vmatpush1.msra.mxu0 0.0
    %655 = vmatprep.subr.mxu0 0.0
    %656 = vmatpush1.msra.mxu0 0.0
    %657 = vmatprep.subr.mxu0 0.0
    %658 = vmatpush1.msra.mxu0 0.0
    %659 = vmatprep.subr.mxu0 0.0
    %660 = vmatpush1.msra.mxu0 0.0
    %661 = vmatprep.subr.mxu0 0.0
    %662 = vmatpush1.msra.mxu0 0.0
    %663 = vmatprep.subr.mxu0 0.0
    %664 = vmatpush1.msra.mxu0 0.0
    %665 = vmatprep.subr.mxu0 0.0
    %666 = vmatpush1.msra.mxu0 0.0
    %667 = vmatprep.subr.mxu0 0.0
    %668 = vmatpush1.msra.mxu0 0.0
    %669 = vmatprep.subr.mxu0 0.0
    %670 = vmatpush1.msra.mxu0 %v416
    %671 = vmatprep.subr.mxu0 0.0
    %672 = vmatpush2.msra.mxu0 0.0
    %673 = vmatprep.subr.mxu0 0.0
    %674 = vmatpush2.msra.mxu0 0.0
    %675 = vmatprep.subr.mxu0 0.0
    %676 = vmatpush2.msra.mxu0 0.0
    %677 = vmatprep.subr.mxu0 0.0
    %678 = vmatpush2.msra.mxu0 0.0
    %679 = vmatprep.subr.mxu0 0.0
    %680 = vmatpush2.msra.mxu0 0.0
    %681 = vmatprep.subr.mxu0 0.0
    %682 = vmatpush2.msra.mxu0 0.0
    %683 = vmatprep.subr.mxu0 0.0
    %684 = vmatpush2.msra.mxu0 0.0
    %685 = vmatprep.subr.mxu0 0.0
    %686 = vmatpush2.msra.mxu0 0.0
    %687 = vmatprep.subr.mxu0 0.0
    %688 = vmatpush2.msra.mxu0 0.0
    %689 = vmatprep.subr.mxu0 0.0
    %690 = vmatpush2.msra.mxu0 0.0
    %691 = vmatprep.subr.mxu0 0.0
    %692 = vmatpush2.msra.mxu0 0.0
    %693 = vmatprep.subr.mxu0 0.0
    %694 = vmatpush2.msra.mxu0 0.0
    %695 = vmatprep.subr.mxu0 0.0
    %696 = vmatpush2.msra.mxu0 0.0
    %697 = vmatprep.subr.mxu0 0.0
    %698 = vmatpush2.msra.mxu0 0.0
    %699 = vmatprep.subr.mxu0 0.0
    %700 = vmatpush2.msra.mxu0 0.0
    %701 = vmatprep.subr.mxu0 0.0
    %702 = vmatpush2.msra.mxu0 0.0
    %703 = vmatprep.mubr.f32.mxu0 0.0
    %704 = vmatmul.mubr.f32.gmra.mxu0 %v637
    %v705 = vpop.f32.mrf.mxu0
    %v706 = vadd.f32 0.0, %v705
    %v707 = vpop.f32.mrf.mxu0
    %708 = vdwg.mxu0
    %v710 = vsel %vm461, %v635, 0
    %712 = vmatprep.subr.mxu0 0.0
    %713 = vmatpush1.msra.mxu0 0.0
    %714 = vmatprep.subr.mxu0 0.0
    %715 = vmatpush1.msra.mxu0 0.0
    %716 = vmatprep.subr.mxu0 0.0
    %717 = vmatpush1.msra.mxu0 0.0
    %718 = vmatprep.subr.mxu0 0.0
    %719 = vmatpush1.msra.mxu0 0.0
    %720 = vmatprep.subr.mxu0 0.0
    %721 = vmatpush1.msra.mxu0 0.0
    %722 = vmatprep.subr.mxu0 0.0
    %723 = vmatpush1.msra.mxu0 0.0
    %724 = vmatprep.subr.mxu0 0.0
    %725 = vmatpush1.msra.mxu0 0.0
    %726 = vmatprep.subr.mxu0 0.0
    %727 = vmatpush1.msra.mxu0 0.0
    %728 = vmatprep.subr.mxu0 0.0
    %729 = vmatpush1.msra.mxu0 0.0
    %730 = vmatprep.subr.mxu0 0.0
    %731 = vmatpush1.msra.mxu0 0.0
    %732 = vmatprep.subr.mxu0 0.0
    %733 = vmatpush1.msra.mxu0 0.0
    %734 = vmatprep.subr.mxu0 0.0
    %735 = vmatpush1.msra.mxu0 0.0
    %736 = vmatprep.subr.mxu0 0.0
    %737 = vmatpush1.msra.mxu0 0.0
    %738 = vmatprep.subr.mxu0 0.0
    %739 = vmatpush1.msra.mxu0 0.0
    %740 = vmatprep.subr.mxu0 0.0
    %741 = vmatpush1.msra.mxu0 0.0
    %742 = vmatprep.subr.mxu0 0.0
    %743 = vmatpush1.msra.mxu0 %v421
    %744 = vmatprep.subr.mxu0 0.0
    %745 = vmatpush2.msra.mxu0 0.0
    %746 = vmatprep.subr.mxu0 0.0
    %747 = vmatpush2.msra.mxu0 0.0
    %748 = vmatprep.subr.mxu0 0.0
    %749 = vmatpush2.msra.mxu0 0.0
    %750 = vmatprep.subr.mxu0 0.0
    %751 = vmatpush2.msra.mxu0 0.0
    %752 = vmatprep.subr.mxu0 0.0
    %753 = vmatpush2.msra.mxu0 0.0
    %754 = vmatprep.subr.mxu0 0.0
    %755 = vmatpush2.msra.mxu0 0.0
    %756 = vmatprep.subr.mxu0 0.0
    %757 = vmatpush2.msra.mxu0 0.0
    %758 = vmatprep.subr.mxu0 0.0
    %759 = vmatpush2.msra.mxu0 0.0
    %760 = vmatprep.subr.mxu0 0.0
    %761 = vmatpush2.msra.mxu0 0.0
    %762 = vmatprep.subr.mxu0 0.0
    %763 = vmatpush2.msra.mxu0 0.0
    %764 = vmatprep.subr.mxu0 0.0
    %765 = vmatpush2.msra.mxu0 0.0
    %766 = vmatprep.subr.mxu0 0.0
    %767 = vmatpush2.msra.mxu0 0.0
    %768 = vmatprep.subr.mxu0 0.0
    %769 = vmatpush2.msra.mxu0 0.0
    %770 = vmatprep.subr.mxu0 0.0
    %771 = vmatpush2.msra.mxu0 0.0
    %772 = vmatprep.subr.mxu0 0.0
    %773 = vmatpush2.msra.mxu0 0.0
    %774 = vmatprep.subr.mxu0 0.0
    %775 = vmatpush2.msra.mxu0 0.0
    %776 = vmatprep.mubr.f32.mxu0 0.0
    %777 = vmatmul.mubr.f32.gmra.mxu0 %v710
    %v778 = vpop.f32.mrf.mxu0
    %v779 = vadd.f32 0.0, %v778
    %v780 = vpop.f32.mrf.mxu0
    %781 = vdwg.mxu0
    %782 = vrot.lane.b32.xlu0 %v238, 120
    %v783 = vpop.permute.xlu0 %782
    %784 = vrot.lane.b32.xlu0 %v330, 120
    %v785 = vpop.permute.xlu0 %784
    %v786 = vsel %vm461, %v783, 0
    %v788 = vsel %vm461, %v785, 0
    %790 = vmatprep.subr.mxu0 0.0
    %791 = vmatpush1.xpose.msra.mxu0 0.0
    %792 = vmatprep.subr.mxu0 0.0
    %793 = vmatpush1.xpose.msra.mxu0 0.0
    %794 = vmatprep.subr.mxu0 0.0
    %795 = vmatpush1.xpose.msra.mxu0 0.0
    %796 = vmatprep.subr.mxu0 0.0
    %797 = vmatpush1.xpose.msra.mxu0 0.0
    %798 = vmatprep.subr.mxu0 0.0
    %799 = vmatpush1.xpose.msra.mxu0 0.0
    %800 = vmatprep.subr.mxu0 0.0
    %801 = vmatpush1.xpose.msra.mxu0 0.0
    %802 = vmatprep.subr.mxu0 0.0
    %803 = vmatpush1.xpose.msra.mxu0 0.0
    %804 = vmatprep.subr.mxu0 0.0
    %805 = vmatpush1.xpose.msra.mxu0 0.0
    %806 = vmatprep.subr.mxu0 0.0
    %807 = vmatpush1.xpose.msra.mxu0 0.0
    %808 = vmatprep.subr.mxu0 0.0
    %809 = vmatpush1.xpose.msra.mxu0 0.0
    %810 = vmatprep.subr.mxu0 0.0
    %811 = vmatpush1.xpose.msra.mxu0 0.0
    %812 = vmatprep.subr.mxu0 0.0
    %813 = vmatpush1.xpose.msra.mxu0 0.0
    %814 = vmatprep.subr.mxu0 0.0
    %815 = vmatpush1.xpose.msra.mxu0 0.0
    %816 = vmatprep.subr.mxu0 0.0
    %817 = vmatpush1.xpose.msra.mxu0 0.0
    %818 = vmatprep.subr.mxu0 0.0
    %819 = vmatpush1.xpose.msra.mxu0 0.0
    %820 = vmatprep.subr.mxu0 0.0
    %821 = vmatpush1.xpose.msra.mxu0 %v788
    %822 = vmatprep.subr.mxu0 0.0
    %823 = vmatpush2.xpose.msra.mxu0 0.0
    %824 = vmatprep.subr.mxu0 0.0
    %825 = vmatpush2.xpose.msra.mxu0 0.0
    %826 = vmatprep.subr.mxu0 0.0
    %827 = vmatpush2.xpose.msra.mxu0 0.0
    %828 = vmatprep.subr.mxu0 0.0
    %829 = vmatpush2.xpose.msra.mxu0 0.0
    %830 = vmatprep.subr.mxu0 0.0
    %831 = vmatpush2.xpose.msra.mxu0 0.0
    %832 = vmatprep.subr.mxu0 0.0
    %833 = vmatpush2.xpose.msra.mxu0 0.0
    %834 = vmatprep.subr.mxu0 0.0
    %835 = vmatpush2.xpose.msra.mxu0 0.0
    %836 = vmatprep.subr.mxu0 0.0
    %837 = vmatpush2.xpose.msra.mxu0 0.0
    %838 = vmatprep.subr.mxu0 0.0
    %839 = vmatpush2.xpose.msra.mxu0 0.0
    %840 = vmatprep.subr.mxu0 0.0
    %841 = vmatpush2.xpose.msra.mxu0 0.0
    %842 = vmatprep.subr.mxu0 0.0
    %843 = vmatpush2.xpose.msra.mxu0 0.0
    %844 = vmatprep.subr.mxu0 0.0
    %845 = vmatpush2.xpose.msra.mxu0 0.0
    %846 = vmatprep.subr.mxu0 0.0
    %847 = vmatpush2.xpose.msra.mxu0 0.0
    %848 = vmatprep.subr.mxu0 0.0
    %849 = vmatpush2.xpose.msra.mxu0 0.0
    %850 = vmatprep.subr.mxu0 0.0
    %851 = vmatpush2.xpose.msra.mxu0 0.0
    %852 = vmatprep.subr.mxu0 0.0
    %853 = vmatpush2.xpose.msra.mxu0 0.0
    %854 = vmatprep.mubr.f32.mxu0 0.0
    %855 = vmatmul.mubr.f32.gmra.mxu0 %v786
    %v856 = vpop.f32.mrf.mxu0
    %v857 = vadd.f32 %v454, %v856
    %v858 = vpop.f32.mrf.mxu0
    %859 = vdwg.mxu0
    %860 = vrot.lane.b32.xlu0 %v243, 120
    %v861 = vpop.permute.xlu0 %860
    %862 = vrot.lane.b32.xlu0 %v335, 120
    %v863 = vpop.permute.xlu0 %862
    %v864 = vsel %vm461, %v861, 0
    %v866 = vsel %vm461, %v863, 0
    %868 = vmatprep.subr.mxu0 0.0
    %869 = vmatpush1.xpose.msra.mxu0 0.0
    %870 = vmatprep.subr.mxu0 0.0
    %871 = vmatpush1.xpose.msra.mxu0 0.0
    %872 = vmatprep.subr.mxu0 0.0
    %873 = vmatpush1.xpose.msra.mxu0 0.0
    %874 = vmatprep.subr.mxu0 0.0
    %875 = vmatpush1.xpose.msra.mxu0 0.0
    %876 = vmatprep.subr.mxu0 0.0
    %877 = vmatpush1.xpose.msra.mxu0 0.0
    %878 = vmatprep.subr.mxu0 0.0
    %879 = vmatpush1.xpose.msra.mxu0 0.0
    %880 = vmatprep.subr.mxu0 0.0
    %881 = vmatpush1.xpose.msra.mxu0 0.0
    %882 = vmatprep.subr.mxu0 0.0
    %883 = vmatpush1.xpose.msra.mxu0 0.0
    %884 = vmatprep.subr.mxu0 0.0
    %885 = vmatpush1.xpose.msra.mxu0 0.0
    %886 = vmatprep.subr.mxu0 0.0
    %887 = vmatpush1.xpose.msra.mxu0 0.0
    %888 = vmatprep.subr.mxu0 0.0
    %889 = vmatpush1.xpose.msra.mxu0 0.0
    %890 = vmatprep.subr.mxu0 0.0
    %891 = vmatpush1.xpose.msra.mxu0 0.0
    %892 = vmatprep.subr.mxu0 0.0
    %893 = vmatpush1.xpose.msra.mxu0 0.0
    %894 = vmatprep.subr.mxu0 0.0
    %895 = vmatpush1.xpose.msra.mxu0 0.0
    %896 = vmatprep.subr.mxu0 0.0
    %897 = vmatpush1.xpose.msra.mxu0 0.0
    %898 = vmatprep.subr.mxu0 0.0
    %899 = vmatpush1.xpose.msra.mxu0 %v866
    %900 = vmatprep.subr.mxu0 0.0
    %901 = vmatpush2.xpose.msra.mxu0 0.0
    %902 = vmatprep.subr.mxu0 0.0
    %903 = vmatpush2.xpose.msra.mxu0 0.0
    %904 = vmatprep.subr.mxu0 0.0
    %905 = vmatpush2.xpose.msra.mxu0 0.0
    %906 = vmatprep.subr.mxu0 0.0
    %907 = vmatpush2.xpose.msra.mxu0 0.0
    %908 = vmatprep.subr.mxu0 0.0
    %909 = vmatpush2.xpose.msra.mxu0 0.0
    %910 = vmatprep.subr.mxu0 0.0
    %911 = vmatpush2.xpose.msra.mxu0 0.0
    %912 = vmatprep.subr.mxu0 0.0
    %913 = vmatpush2.xpose.msra.mxu0 0.0
    %914 = vmatprep.subr.mxu0 0.0
    %915 = vmatpush2.xpose.msra.mxu0 0.0
    %916 = vmatprep.subr.mxu0 0.0
    %917 = vmatpush2.xpose.msra.mxu0 0.0
    %918 = vmatprep.subr.mxu0 0.0
    %919 = vmatpush2.xpose.msra.mxu0 0.0
    %920 = vmatprep.subr.mxu0 0.0
    %921 = vmatpush2.xpose.msra.mxu0 0.0
    %922 = vmatprep.subr.mxu0 0.0
    %923 = vmatpush2.xpose.msra.mxu0 0.0
    %924 = vmatprep.subr.mxu0 0.0
    %925 = vmatpush2.xpose.msra.mxu0 0.0
    %926 = vmatprep.subr.mxu0 0.0
    %927 = vmatpush2.xpose.msra.mxu0 0.0
    %928 = vmatprep.subr.mxu0 0.0
    %929 = vmatpush2.xpose.msra.mxu0 0.0
    %930 = vmatprep.subr.mxu0 0.0
    %931 = vmatpush2.xpose.msra.mxu0 0.0
    %932 = vmatprep.mubr.f32.mxu0 0.0
    %933 = vmatmul.mubr.f32.gmra.mxu0 %v864
    %v934 = vpop.f32.mrf.mxu0
    %v935 = vadd.f32 %v458, %v934
    %v936 = vpop.f32.mrf.mxu0
    %937 = vdwg.mxu0
    %v938 = vsel %vm461, %v857, -inf
    %939 = vmax.xlane.f32.xlu0 %v938
    %v940 = vpop.xlane.xlu0 %939
    %v941 = vsel %vm461, %v935, -inf
    %942 = vmax.xlane.f32.xlu0 %v941
    %v943 = vpop.xlane.xlu0 %942
    %v944 = vsub.f32 %v857, %v940
    %v945 = vsub.f32 %v935, %v943
    %v946 = vmul.f32 %v944, 1.442695
    %v947 = vpow.pop %v946
    %v948 = vmul.f32 %v945, 1.442695
    %v949 = vpow.pop %v948
    %v950 = vsel %vm461, %v947, 0.0
    %951 = vadd.xlane.f32.xlu0 %v950
    %v952 = vpop.xlane.xlu0 %951
    %v953 = vsel %vm461, %v949, 0.0
    %954 = vadd.xlane.f32.xlu0 %v953
    %v955 = vpop.xlane.xlu0 %954
    %v956 = vrcp.pop %v952
    %v957 = vmul.f32 %v947, %v956
    %v958 = vrcp.pop %v955
    %v959 = vmul.f32 %v949, %v958
    %961 = vrot.lane.b32.xlu0 %v416, 120
    %v962 = vpop.permute.xlu0 %961
    %v965 = vsel %vm461, %v957, 0
    %967 = vmatprep.subr.mxu0 0.0
    %968 = vmatpush1.msra.mxu0 0.0
    %969 = vmatprep.subr.mxu0 0.0
    %970 = vmatpush1.msra.mxu0 0.0
    %971 = vmatprep.subr.mxu0 0.0
    %972 = vmatpush1.msra.mxu0 0.0
    %973 = vmatprep.subr.mxu0 0.0
    %974 = vmatpush1.msra.mxu0 0.0
    %975 = vmatprep.subr.mxu0 0.0
    %976 = vmatpush1.msra.mxu0 0.0
    %977 = vmatprep.subr.mxu0 0.0
    %978 = vmatpush1.msra.mxu0 0.0
    %979 = vmatprep.subr.mxu0 0.0
    %980 = vmatpush1.msra.mxu0 0.0
    %981 = vmatprep.subr.mxu0 0.0
    %982 = vmatpush1.msra.mxu0 0.0
    %983 = vmatprep.subr.mxu0 0.0
    %984 = vmatpush1.msra.mxu0 0.0
    %985 = vmatprep.subr.mxu0 0.0
    %986 = vmatpush1.msra.mxu0 0.0
    %987 = vmatprep.subr.mxu0 0.0
    %988 = vmatpush1.msra.mxu0 0.0
    %989 = vmatprep.subr.mxu0 0.0
    %990 = vmatpush1.msra.mxu0 0.0
    %991 = vmatprep.subr.mxu0 0.0
    %992 = vmatpush1.msra.mxu0 0.0
    %993 = vmatprep.subr.mxu0 0.0
    %994 = vmatpush1.msra.mxu0 0.0
    %995 = vmatprep.subr.mxu0 0.0
    %996 = vmatpush1.msra.mxu0 0.0
    %997 = vmatprep.subr.mxu0 0.0
    %998 = vmatpush1.msra.mxu0 %v962
    %999 = vmatprep.subr.mxu0 0.0
    %1000 = vmatpush2.msra.mxu0 0.0
    %1001 = vmatprep.subr.mxu0 0.0
    %1002 = vmatpush2.msra.mxu0 0.0
    %1003 = vmatprep.subr.mxu0 0.0
    %1004 = vmatpush2.msra.mxu0 0.0
    %1005 = vmatprep.subr.mxu0 0.0
    %1006 = vmatpush2.msra.mxu0 0.0
    %1007 = vmatprep.subr.mxu0 0.0
    %1008 = vmatpush2.msra.mxu0 0.0
    %1009 = vmatprep.subr.mxu0 0.0
    %1010 = vmatpush2.msra.mxu0 0.0
    %1011 = vmatprep.subr.mxu0 0.0
    %1012 = vmatpush2.msra.mxu0 0.0
    %1013 = vmatprep.subr.mxu0 0.0
    %1014 = vmatpush2.msra.mxu0 0.0
    %1015 = vmatprep.subr.mxu0 0.0
    %1016 = vmatpush2.msra.mxu0 0.0
    %1017 = vmatprep.subr.mxu0 0.0
    %1018 = vmatpush2.msra.mxu0 0.0
    %1019 = vmatprep.subr.mxu0 0.0
    %1020 = vmatpush2.msra.mxu0 0.0
    %1021 = vmatprep.subr.mxu0 0.0
    %1022 = vmatpush2.msra.mxu0 0.0
    %1023 = vmatprep.subr.mxu0 0.0
    %1024 = vmatpush2.msra.mxu0 0.0
    %1025 = vmatprep.subr.mxu0 0.0
    %1026 = vmatpush2.msra.mxu0 0.0
    %1027 = vmatprep.subr.mxu0 0.0
    %1028 = vmatpush2.msra.mxu0 0.0
    %1029 = vmatprep.subr.mxu0 0.0
    %1030 = vmatpush2.msra.mxu0 0.0
    %1031 = vmatprep.mubr.f32.mxu0 0.0
    %1032 = vmatmul.mubr.f32.gmra.mxu0 %v965
    %v1033 = vpop.f32.mrf.mxu0
    %v1034 = vadd.f32 0.0, %v1033
    %v1035 = vpop.f32.mrf.mxu0
    %1036 = vdwg.mxu0
    %1038 = vrot.lane.b32.xlu0 %v421, 120
    %v1039 = vpop.permute.xlu0 %1038
    %v1042 = vsel %vm461, %v959, 0
    %1044 = vmatprep.subr.mxu0 0.0
    %1045 = vmatpush1.msra.mxu0 0.0
    %1046 = vmatprep.subr.mxu0 0.0
    %1047 = vmatpush1.msra.mxu0 0.0
    %1048 = vmatprep.subr.mxu0 0.0
    %1049 = vmatpush1.msra.mxu0 0.0
    %1050 = vmatprep.subr.mxu0 0.0
    %1051 = vmatpush1.msra.mxu0 0.0
    %1052 = vmatprep.subr.mxu0 0.0
    %1053 = vmatpush1.msra.mxu0 0.0
    %1054 = vmatprep.subr.mxu0 0.0
    %1055 = vmatpush1.msra.mxu0 0.0
    %1056 = vmatprep.subr.mxu0 0.0
    %1057 = vmatpush1.msra.mxu0 0.0
    %1058 = vmatprep.subr.mxu0 0.0
    %1059 = vmatpush1.msra.mxu0 0.0
    %1060 = vmatprep.subr.mxu0 0.0
    %1061 = vmatpush1.msra.mxu0 0.0
    %1062 = vmatprep.subr.mxu0 0.0
    %1063 = vmatpush1.msra.mxu0 0.0
    %1064 = vmatprep.subr.mxu0 0.0
    %1065 = vmatpush1.msra.mxu0 0.0
    %1066 = vmatprep.subr.mxu0 0.0
    %1067 = vmatpush1.msra.mxu0 0.0
    %1068 = vmatprep.subr.mxu0 0.0
    %1069 = vmatpush1.msra.mxu0 0.0
    %1070 = vmatprep.subr.mxu0 0.0
    %1071 = vmatpush1.msra.mxu0 0.0
    %1072 = vmatprep.subr.mxu0 0.0
    %1073 = vmatpush1.msra.mxu0 0.0
    %1074 = vmatprep.subr.mxu0 0.0
    %1075 = vmatpush1.msra.mxu0 %v1039
    %1076 = vmatprep.subr.mxu0 0.0
    %1077 = vmatpush2.msra.mxu0 0.0
    %1078 = vmatprep.subr.mxu0 0.0
    %1079 = vmatpush2.msra.mxu0 0.0
    %1080 = vmatprep.subr.mxu0 0.0
    %1081 = vmatpush2.msra.mxu0 0.0
    %1082 = vmatprep.subr.mxu0 0.0
    %1083 = vmatpush2.msra.mxu0 0.0
    %1084 = vmatprep.subr.mxu0 0.0
    %1085 = vmatpush2.msra.mxu0 0.0
    %1086 = vmatprep.subr.mxu0 0.0
    %1087 = vmatpush2.msra.mxu0 0.0
    %1088 = vmatprep.subr.mxu0 0.0
    %1089 = vmatpush2.msra.mxu0 0.0
    %1090 = vmatprep.subr.mxu0 0.0
    %1091 = vmatpush2.msra.mxu0 0.0
    %1092 = vmatprep.subr.mxu0 0.0
    %1093 = vmatpush2.msra.mxu0 0.0
    %1094 = vmatprep.subr.mxu0 0.0
    %1095 = vmatpush2.msra.mxu0 0.0
    %1096 = vmatprep.subr.mxu0 0.0
    %1097 = vmatpush2.msra.mxu0 0.0
    %1098 = vmatprep.subr.mxu0 0.0
    %1099 = vmatpush2.msra.mxu0 0.0
    %1100 = vmatprep.subr.mxu0 0.0
    %1101 = vmatpush2.msra.mxu0 0.0
    %1102 = vmatprep.subr.mxu0 0.0
    %1103 = vmatpush2.msra.mxu0 0.0
    %1104 = vmatprep.subr.mxu0 0.0
    %1105 = vmatpush2.msra.mxu0 0.0
    %1106 = vmatprep.subr.mxu0 0.0
    %1107 = vmatpush2.msra.mxu0 0.0
    %1108 = vmatprep.mubr.f32.mxu0 0.0
    %1109 = vmatmul.mubr.f32.gmra.mxu0 %v1042
    %v1110 = vpop.f32.mrf.mxu0
    %v1111 = vadd.f32 0.0, %v1110
    %v1112 = vpop.f32.mrf.mxu0
    %1113 = vdwg.mxu0
    %v1115 = vsel %vm461, %v1034, 0
    %v1118 = vsel %vm461, %v1111, 0
    %1120 = vmatprep.subr.mxu0 0.0
    %1121 = vmatpush1.msra.mxu0 0.0
    %1122 = vmatprep.subr.mxu0 0.0
    %1123 = vmatpush1.msra.mxu0 0.0
    %1124 = vmatprep.subr.mxu0 0.0
    %1125 = vmatpush1.msra.mxu0 0.0
    %1126 = vmatprep.subr.mxu0 0.0
    %1127 = vmatpush1.msra.mxu0 0.0
    %1128 = vmatprep.subr.mxu0 0.0
    %1129 = vmatpush1.msra.mxu0 0.0
    %1130 = vmatprep.subr.mxu0 0.0
    %1131 = vmatpush1.msra.mxu0 0.0
    %1132 = vmatprep.subr.mxu0 0.0
    %1133 = vmatpush1.msra.mxu0 0.0
    %1134 = vmatprep.subr.mxu0 0.0
    %1135 = vmatpush1.msra.mxu0 0.0
    %1136 = vmatprep.subr.mxu0 0.0
    %1137 = vmatpush1.msra.mxu0 0.0
    %1138 = vmatprep.subr.mxu0 0.0
    %1139 = vmatpush1.msra.mxu0 0.0
    %1140 = vmatprep.subr.mxu0 0.0
    %1141 = vmatpush1.msra.mxu0 0.0
    %1142 = vmatprep.subr.mxu0 0.0
    %1143 = vmatpush1.msra.mxu0 0.0
    %1144 = vmatprep.subr.mxu0 0.0
    %1145 = vmatpush1.msra.mxu0 0.0
    %1146 = vmatprep.subr.mxu0 0.0
    %1147 = vmatpush1.msra.mxu0 0.0
    %1148 = vmatprep.subr.mxu0 0.0
    %1149 = vmatpush1.msra.mxu0 0.0
    %1150 = vmatprep.subr.mxu0 0.0
    %1151 = vmatpush1.msra.mxu0 %v425
    %1152 = vmatprep.subr.mxu0 0.0
    %1153 = vmatpush2.msra.mxu0 0.0
    %1154 = vmatprep.subr.mxu0 0.0
    %1155 = vmatpush2.msra.mxu0 0.0
    %1156 = vmatprep.subr.mxu0 0.0
    %1157 = vmatpush2.msra.mxu0 0.0
    %1158 = vmatprep.subr.mxu0 0.0
    %1159 = vmatpush2.msra.mxu0 0.0
    %1160 = vmatprep.subr.mxu0 0.0
    %1161 = vmatpush2.msra.mxu0 0.0
    %1162 = vmatprep.subr.mxu0 0.0
    %1163 = vmatpush2.msra.mxu0 0.0
    %1164 = vmatprep.subr.mxu0 0.0
    %1165 = vmatpush2.msra.mxu0 0.0
    %1166 = vmatprep.subr.mxu0 0.0
    %1167 = vmatpush2.msra.mxu0 0.0
    %1168 = vmatprep.subr.mxu0 0.0
    %1169 = vmatpush2.msra.mxu0 0.0
    %1170 = vmatprep.subr.mxu0 0.0
    %1171 = vmatpush2.msra.mxu0 0.0
    %1172 = vmatprep.subr.mxu0 0.0
    %1173 = vmatpush2.msra.mxu0 0.0
    %1174 = vmatprep.subr.mxu0 0.0
    %1175 = vmatpush2.msra.mxu0 0.0
    %1176 = vmatprep.subr.mxu0 0.0
    %1177 = vmatpush2.msra.mxu0 0.0
    %1178 = vmatprep.subr.mxu0 0.0
    %1179 = vmatpush2.msra.mxu0 0.0
    %1180 = vmatprep.subr.mxu0 0.0
    %1181 = vmatpush2.msra.mxu0 0.0
    %1182 = vmatprep.subr.mxu0 0.0
    %1183 = vmatpush2.msra.mxu0 0.0
    %1184 = vmatprep.mubr.f32.mxu0 0.0
    %1185 = vmatmul.mubr.f32.gmra.mxu0 %v1115
    %v1186 = vpop.f32.mrf.mxu0
    %v1187 = vadd.f32 0.0, %v1186
    %v1188 = vpop.f32.mrf.mxu0
    %1189 = vmatprep.mubr.f32.mxu0 0.0
    %1190 = vmatmul.mubr.f32.gmra.mxu0 %v1118
    %v1191 = vpop.f32.mrf.mxu0
    %v1192 = vadd.f32 0.0, %v1191
    %v1193 = vpop.f32.mrf.mxu0
    %1194 = vdwg.mxu0
    %v1196 = vsel %vm461, %v706, 0
    %v1199 = vsel %vm461, %v779, 0
    %1201 = vmatprep.subr.mxu0 0.0
    %1202 = vmatpush1.msra.mxu0 0.0
    %1203 = vmatprep.subr.mxu0 0.0
    %1204 = vmatpush1.msra.mxu0 0.0
    %1205 = vmatprep.subr.mxu0 0.0
    %1206 = vmatpush1.msra.mxu0 0.0
    %1207 = vmatprep.subr.mxu0 0.0
    %1208 = vmatpush1.msra.mxu0 0.0
    %1209 = vmatprep.subr.mxu0 0.0
    %1210 = vmatpush1.msra.mxu0 0.0
    %1211 = vmatprep.subr.mxu0 0.0
    %1212 = vmatpush1.msra.mxu0 0.0
    %1213 = vmatprep.subr.mxu0 0.0
    %1214 = vmatpush1.msra.mxu0 0.0
    %1215 = vmatprep.subr.mxu0 0.0
    %1216 = vmatpush1.msra.mxu0 0.0
    %1217 = vmatprep.subr.mxu0 0.0
    %1218 = vmatpush1.msra.mxu0 0.0
    %1219 = vmatprep.subr.mxu0 0.0
    %1220 = vmatpush1.msra.mxu0 0.0
    %1221 = vmatprep.subr.mxu0 0.0
    %1222 = vmatpush1.msra.mxu0 0.0
    %1223 = vmatprep.subr.mxu0 0.0
    %1224 = vmatpush1.msra.mxu0 0.0
    %1225 = vmatprep.subr.mxu0 0.0
    %1226 = vmatpush1.msra.mxu0 0.0
    %1227 = vmatprep.subr.mxu0 0.0
    %1228 = vmatpush1.msra.mxu0 0.0
    %1229 = vmatprep.subr.mxu0 0.0
    %1230 = vmatpush1.msra.mxu0 0.0
    %1231 = vmatprep.subr.mxu0 0.0
    %1232 = vmatpush1.msra.mxu0 %v424
    %1233 = vmatprep.subr.mxu0 0.0
    %1234 = vmatpush2.msra.mxu0 0.0
    %1235 = vmatprep.subr.mxu0 0.0
    %1236 = vmatpush2.msra.mxu0 0.0
    %1237 = vmatprep.subr.mxu0 0.0
    %1238 = vmatpush2.msra.mxu0 0.0
    %1239 = vmatprep.subr.mxu0 0.0
    %1240 = vmatpush2.msra.mxu0 0.0
    %1241 = vmatprep.subr.mxu0 0.0
    %1242 = vmatpush2.msra.mxu0 0.0
    %1243 = vmatprep.subr.mxu0 0.0
    %1244 = vmatpush2.msra.mxu0 0.0
    %1245 = vmatprep.subr.mxu0 0.0
    %1246 = vmatpush2.msra.mxu0 0.0
    %1247 = vmatprep.subr.mxu0 0.0
    %1248 = vmatpush2.msra.mxu0 0.0
    %1249 = vmatprep.subr.mxu0 0.0
    %1250 = vmatpush2.msra.mxu0 0.0
    %1251 = vmatprep.subr.mxu0 0.0
    %1252 = vmatpush2.msra.mxu0 0.0
    %1253 = vmatprep.subr.mxu0 0.0
    %1254 = vmatpush2.msra.mxu0 0.0
    %1255 = vmatprep.subr.mxu0 0.0
    %1256 = vmatpush2.msra.mxu0 0.0
    %1257 = vmatprep.subr.mxu0 0.0
    %1258 = vmatpush2.msra.mxu0 0.0
    %1259 = vmatprep.subr.mxu0 0.0
    %1260 = vmatpush2.msra.mxu0 0.0
    %1261 = vmatprep.subr.mxu0 0.0
    %1262 = vmatpush2.msra.mxu0 0.0
    %1263 = vmatprep.subr.mxu0 0.0
    %1264 = vmatpush2.msra.mxu0 0.0
    %1265 = vmatprep.mubr.f32.mxu0 0.0
    %1266 = vmatmul.mubr.f32.gmra.mxu0 %v1196
    %v1267 = vpop.f32.mrf.mxu0
    %v1268 = vadd.f32 %v1187, %v1267
    %v1269 = vpop.f32.mrf.mxu0
    %1270 = vmatprep.mubr.f32.mxu0 0.0
    %1271 = vmatmul.mubr.f32.gmra.mxu0 %v1199
    %v1272 = vpop.f32.mrf.mxu0
    %v1273 = vadd.f32 %v1192, %v1272
    %v1274 = vpop.f32.mrf.mxu0
    %1275 = vdwg.mxu0
    %1276 = vrot.lane.b32.xlu0 %v238, 112
    %v1277 = vpop.permute.xlu0 %1276
    %1278 = vrot.lane.b32.xlu0 %v330, 112
    %v1279 = vpop.permute.xlu0 %1278
    %v1280 = vsel %vm461, %v1277, 0
    %v1282 = vsel %vm461, %v1279, 0
    %1284 = vmatprep.subr.mxu0 0.0
    %1285 = vmatpush1.xpose.msra.mxu0 0.0
    %1286 = vmatprep.subr.mxu0 0.0
    %1287 = vmatpush1.xpose.msra.mxu0 0.0
    %1288 = vmatprep.subr.mxu0 0.0
    %1289 = vmatpush1.xpose.msra.mxu0 0.0
    %1290 = vmatprep.subr.mxu0 0.0
    %1291 = vmatpush1.xpose.msra.mxu0 0.0
    %1292 = vmatprep.subr.mxu0 0.0
    %1293 = vmatpush1.xpose.msra.mxu0 0.0
    %1294 = vmatprep.subr.mxu0 0.0
    %1295 = vmatpush1.xpose.msra.mxu0 0.0
    %1296 = vmatprep.subr.mxu0 0.0
    %1297 = vmatpush1.xpose.msra.mxu0 0.0
    %1298 = vmatprep.subr.mxu0 0.0
    %1299 = vmatpush1.xpose.msra.mxu0 0.0
    %1300 = vmatprep.subr.mxu0 0.0
    %1301 = vmatpush1.xpose.msra.mxu0 0.0
    %1302 = vmatprep.subr.mxu0 0.0
    %1303 = vmatpush1.xpose.msra.mxu0 0.0
    %1304 = vmatprep.subr.mxu0 0.0
    %1305 = vmatpush1.xpose.msra.mxu0 0.0
    %1306 = vmatprep.subr.mxu0 0.0
    %1307 = vmatpush1.xpose.msra.mxu0 0.0
    %1308 = vmatprep.subr.mxu0 0.0
    %1309 = vmatpush1.xpose.msra.mxu0 0.0
    %1310 = vmatprep.subr.mxu0 0.0
    %1311 = vmatpush1.xpose.msra.mxu0 0.0
    %1312 = vmatprep.subr.mxu0 0.0
    %1313 = vmatpush1.xpose.msra.mxu0 0.0
    %1314 = vmatprep.subr.mxu0 0.0
    %1315 = vmatpush1.xpose.msra.mxu0 %v1282
    %1316 = vmatprep.subr.mxu0 0.0
    %1317 = vmatpush2.xpose.msra.mxu0 0.0
    %1318 = vmatprep.subr.mxu0 0.0
    %1319 = vmatpush2.xpose.msra.mxu0 0.0
    %1320 = vmatprep.subr.mxu0 0.0
    %1321 = vmatpush2.xpose.msra.mxu0 0.0
    %1322 = vmatprep.subr.mxu0 0.0
    %1323 = vmatpush2.xpose.msra.mxu0 0.0
    %1324 = vmatprep.subr.mxu0 0.0
    %1325 = vmatpush2.xpose.msra.mxu0 0.0
    %1326 = vmatprep.subr.mxu0 0.0
    %1327 = vmatpush2.xpose.msra.mxu0 0.0
    %1328 = vmatprep.subr.mxu0 0.0
    %1329 = vmatpush2.xpose.msra.mxu0 0.0
    %1330 = vmatprep.subr.mxu0 0.0
    %1331 = vmatpush2.xpose.msra.mxu0 0.0
    %1332 = vmatprep.subr.mxu0 0.0
    %1333 = vmatpush2.xpose.msra.mxu0 0.0
    %1334 = vmatprep.subr.mxu0 0.0
    %1335 = vmatpush2.xpose.msra.mxu0 0.0
    %1336 = vmatprep.subr.mxu0 0.0
    %1337 = vmatpush2.xpose.msra.mxu0 0.0
    %1338 = vmatprep.subr.mxu0 0.0
    %1339 = vmatpush2.xpose.msra.mxu0 0.0
    %1340 = vmatprep.subr.mxu0 0.0
    %1341 = vmatpush2.xpose.msra.mxu0 0.0
    %1342 = vmatprep.subr.mxu0 0.0
    %1343 = vmatpush2.xpose.msra.mxu0 0.0
    %1344 = vmatprep.subr.mxu0 0.0
    %1345 = vmatpush2.xpose.msra.mxu0 0.0
    %1346 = vmatprep.subr.mxu0 0.0
    %1347 = vmatpush2.xpose.msra.mxu0 0.0
    %1348 = vmatprep.mubr.f32.mxu0 0.0
    %1349 = vmatmul.mubr.f32.gmra.mxu0 %v1280
    %v1350 = vpop.f32.mrf.mxu0
    %v1351 = vadd.f32 %v454, %v1350
    %v1352 = vpop.f32.mrf.mxu0
    %1353 = vdwg.mxu0
    %1354 = vrot.lane.b32.xlu0 %v243, 112
    %v1355 = vpop.permute.xlu0 %1354
    %1356 = vrot.lane.b32.xlu0 %v335, 112
    %v1357 = vpop.permute.xlu0 %1356
    %v1358 = vsel %vm461, %v1355, 0
    %v1360 = vsel %vm461, %v1357, 0
    %1362 = vmatprep.subr.mxu0 0.0
    %1363 = vmatpush1.xpose.msra.mxu0 0.0
    %1364 = vmatprep.subr.mxu0 0.0
    %1365 = vmatpush1.xpose.msra.mxu0 0.0
    %1366 = vmatprep.subr.mxu0 0.0
    %1367 = vmatpush1.xpose.msra.mxu0 0.0
    %1368 = vmatprep.subr.mxu0 0.0
    %1369 = vmatpush1.xpose.msra.mxu0 0.0
    %1370 = vmatprep.subr.mxu0 0.0
    %1371 = vmatpush1.xpose.msra.mxu0 0.0
    %1372 = vmatprep.subr.mxu0 0.0
    %1373 = vmatpush1.xpose.msra.mxu0 0.0
    %1374 = vmatprep.subr.mxu0 0.0
    %1375 = vmatpush1.xpose.msra.mxu0 0.0
    %1376 = vmatprep.subr.mxu0 0.0
    %1377 = vmatpush1.xpose.msra.mxu0 0.0
    %1378 = vmatprep.subr.mxu0 0.0
    %1379 = vmatpush1.xpose.msra.mxu0 0.0
    %1380 = vmatprep.subr.mxu0 0.0
    %1381 = vmatpush1.xpose.msra.mxu0 0.0
    %1382 = vmatprep.subr.mxu0 0.0
    %1383 = vmatpush1.xpose.msra.mxu0 0.0
    %1384 = vmatprep.subr.mxu0 0.0
    %1385 = vmatpush1.xpose.msra.mxu0 0.0
    %1386 = vmatprep.subr.mxu0 0.0
    %1387 = vmatpush1.xpose.msra.mxu0 0.0
    %1388 = vmatprep.subr.mxu0 0.0
    %1389 = vmatpush1.xpose.msra.mxu0 0.0
    %1390 = vmatprep.subr.mxu0 0.0
    %1391 = vmatpush1.xpose.msra.mxu0 0.0
    %1392 = vmatprep.subr.mxu0 0.0
    %1393 = vmatpush1.xpose.msra.mxu0 %v1360
    %1394 = vmatprep.subr.mxu0 0.0
    %1395 = vmatpush2.xpose.msra.mxu0 0.0
    %1396 = vmatprep.subr.mxu0 0.0
    %1397 = vmatpush2.xpose.msra.mxu0 0.0
    %1398 = vmatprep.subr.mxu0 0.0
    %1399 = vmatpush2.xpose.msra.mxu0 0.0
    %1400 = vmatprep.subr.mxu0 0.0
    %1401 = vmatpush2.xpose.msra.mxu0 0.0
    %1402 = vmatprep.subr.mxu0 0.0
    %1403 = vmatpush2.xpose.msra.mxu0 0.0
    %1404 = vmatprep.subr.mxu0 0.0
    %1405 = vmatpush2.xpose.msra.mxu0 0.0
    %1406 = vmatprep.subr.mxu0 0.0
    %1407 = vmatpush2.xpose.msra.mxu0 0.0
    %1408 = vmatprep.subr.mxu0 0.0
    %1409 = vmatpush2.xpose.msra.mxu0 0.0
    %1410 = vmatprep.subr.mxu0 0.0
    %1411 = vmatpush2.xpose.msra.mxu0 0.0
    %1412 = vmatprep.subr.mxu0 0.0
    %1413 = vmatpush2.xpose.msra.mxu0 0.0
    %1414 = vmatprep.subr.mxu0 0.0
    %1415 = vmatpush2.xpose.msra.mxu0 0.0
    %1416 = vmatprep.subr.mxu0 0.0
    %1417 = vmatpush2.xpose.msra.mxu0 0.0
    %1418 = vmatprep.subr.mxu0 0.0
    %1419 = vmatpush2.xpose.msra.mxu0 0.0
    %1420 = vmatprep.subr.mxu0 0.0
    %1421 = vmatpush2.xpose.msra.mxu0 0.0
    %1422 = vmatprep.subr.mxu0 0.0
    %1423 = vmatpush2.xpose.msra.mxu0 0.0
    %1424 = vmatprep.subr.mxu0 0.0
    %1425 = vmatpush2.xpose.msra.mxu0 0.0
    %1426 = vmatprep.mubr.f32.mxu0 0.0
    %1427 = vmatmul.mubr.f32.gmra.mxu0 %v1358
    %v1428 = vpop.f32.mrf.mxu0
    %v1429 = vadd.f32 %v458, %v1428
    %v1430 = vpop.f32.mrf.mxu0
    %1431 = vdwg.mxu0
    %v1432 = vsel %vm461, %v1351, -inf
    %1433 = vmax.xlane.f32.xlu0 %v1432
    %v1434 = vpop.xlane.xlu0 %1433
    %v1435 = vsel %vm461, %v1429, -inf
    %1436 = vmax.xlane.f32.xlu0 %v1435
    %v1437 = vpop.xlane.xlu0 %1436
    %v1438 = vsub.f32 %v1351, %v1434
    %v1439 = vsub.f32 %v1429, %v1437
    %v1440 = vmul.f32 %v1438, 1.442695
    %v1441 = vpow.pop %v1440
    %v1442 = vmul.f32 %v1439, 1.442695
    %v1443 = vpow.pop %v1442
    %v1444 = vsel %vm461, %v1441, 0.0
    %1445 = vadd.xlane.f32.xlu0 %v1444
    %v1446 = vpop.xlane.xlu0 %1445
    %v1447 = vsel %vm461, %v1443, 0.0
    %1448 = vadd.xlane.f32.xlu0 %v1447
    %v1449 = vpop.xlane.xlu0 %1448
    %v1450 = vrcp.pop %v1446
    %v1451 = vmul.f32 %v1441, %v1450
    %v1452 = vrcp.pop %v1449
    %v1453 = vmul.f32 %v1443, %v1452
    %1454 = vrot.lane.b32.xlu0 %v416, 112
    %v1455 = vpop.permute.xlu0 %1454
    %v1458 = vsel %vm461, %v1451, 0
    %1460 = vmatprep.subr.mxu0 0.0
    %1461 = vmatpush1.msra.mxu0 0.0
    %1462 = vmatprep.subr.mxu0 0.0
    %1463 = vmatpush1.msra.mxu0 0.0
    %1464 = vmatprep.subr.mxu0 0.0
    %1465 = vmatpush1.msra.mxu0 0.0
    %1466 = vmatprep.subr.mxu0 0.0
    %1467 = vmatpush1.msra.mxu0 0.0
    %1468 = vmatprep.subr.mxu0 0.0
    %1469 = vmatpush1.msra.mxu0 0.0
    %1470 = vmatprep.subr.mxu0 0.0
    %1471 = vmatpush1.msra.mxu0 0.0
    %1472 = vmatprep.subr.mxu0 0.0
    %1473 = vmatpush1.msra.mxu0 0.0
    %1474 = vmatprep.subr.mxu0 0.0
    %1475 = vmatpush1.msra.mxu0 0.0
    %1476 = vmatprep.subr.mxu0 0.0
    %1477 = vmatpush1.msra.mxu0 0.0
    %1478 = vmatprep.subr.mxu0 0.0
    %1479 = vmatpush1.msra.mxu0 0.0
    %1480 = vmatprep.subr.mxu0 0.0
    %1481 = vmatpush1.msra.mxu0 0.0
    %1482 = vmatprep.subr.mxu0 0.0
    %1483 = vmatpush1.msra.mxu0 0.0
    %1484 = vmatprep.subr.mxu0 0.0
    %1485 = vmatpush1.msra.mxu0 0.0
    %1486 = vmatprep.subr.mxu0 0.0
    %1487 = vmatpush1.msra.mxu0 0.0
    %1488 = vmatprep.subr.mxu0 0.0
    %1489 = vmatpush1.msra.mxu0 0.0
    %1490 = vmatprep.subr.mxu0 0.0
    %1491 = vmatpush1.msra.mxu0 %v1455
    %1492 = vmatprep.subr.mxu0 0.0
    %1493 = vmatpush2.msra.mxu0 0.0
    %1494 = vmatprep.subr.mxu0 0.0
    %1495 = vmatpush2.msra.mxu0 0.0
    %1496 = vmatprep.subr.mxu0 0.0
    %1497 = vmatpush2.msra.mxu0 0.0
    %1498 = vmatprep.subr.mxu0 0.0
    %1499 = vmatpush2.msra.mxu0 0.0
    %1500 = vmatprep.subr.mxu0 0.0
    %1501 = vmatpush2.msra.mxu0 0.0
    %1502 = vmatprep.subr.mxu0 0.0
    %1503 = vmatpush2.msra.mxu0 0.0
    %1504 = vmatprep.subr.mxu0 0.0
    %1505 = vmatpush2.msra.mxu0 0.0
    %1506 = vmatprep.subr.mxu0 0.0
    %1507 = vmatpush2.msra.mxu0 0.0
    %1508 = vmatprep.subr.mxu0 0.0
    %1509 = vmatpush2.msra.mxu0 0.0
    %1510 = vmatprep.subr.mxu0 0.0
    %1511 = vmatpush2.msra.mxu0 0.0
    %1512 = vmatprep.subr.mxu0 0.0
    %1513 = vmatpush2.msra.mxu0 0.0
    %1514 = vmatprep.subr.mxu0 0.0
    %1515 = vmatpush2.msra.mxu0 0.0
    %1516 = vmatprep.subr.mxu0 0.0
    %1517 = vmatpush2.msra.mxu0 0.0
    %1518 = vmatprep.subr.mxu0 0.0
    %1519 = vmatpush2.msra.mxu0 0.0
    %1520 = vmatprep.subr.mxu0 0.0
    %1521 = vmatpush2.msra.mxu0 0.0
    %1522 = vmatprep.subr.mxu0 0.0
    %1523 = vmatpush2.msra.mxu0 0.0
    %1524 = vmatprep.mubr.f32.mxu0 0.0
    %1525 = vmatmul.mubr.f32.gmra.mxu0 %v1458
    %v1526 = vpop.f32.mrf.mxu0
    %v1527 = vadd.f32 0.0, %v1526
    %v1528 = vpop.f32.mrf.mxu0
    %1529 = vdwg.mxu0
    %1530 = vrot.lane.b32.xlu0 %v421, 112
    %v1531 = vpop.permute.xlu0 %1530
    %v1534 = vsel %vm461, %v1453, 0
    %1536 = vmatprep.subr.mxu0 0.0
    %1537 = vmatpush1.msra.mxu0 0.0
    %1538 = vmatprep.subr.mxu0 0.0
    %1539 = vmatpush1.msra.mxu0 0.0
    %1540 = vmatprep.subr.mxu0 0.0
    %1541 = vmatpush1.msra.mxu0 0.0
    %1542 = vmatprep.subr.mxu0 0.0
    %1543 = vmatpush1.msra.mxu0 0.0
    %1544 = vmatprep.subr.mxu0 0.0
    %1545 = vmatpush1.msra.mxu0 0.0
    %1546 = vmatprep.subr.mxu0 0.0
    %1547 = vmatpush1.msra.mxu0 0.0
    %1548 = vmatprep.subr.mxu0 0.0
    %1549 = vmatpush1.msra.mxu0 0.0
    %1550 = vmatprep.subr.mxu0 0.0
    %1551 = vmatpush1.msra.mxu0 0.0
    %1552 = vmatprep.subr.mxu0 0.0
    %1553 = vmatpush1.msra.mxu0 0.0
    %1554 = vmatprep.subr.mxu0 0.0
    %1555 = vmatpush1.msra.mxu0 0.0
    %1556 = vmatprep.subr.mxu0 0.0
    %1557 = vmatpush1.msra.mxu0 0.0
    %1558 = vmatprep.subr.mxu0 0.0
    %1559 = vmatpush1.msra.mxu0 0.0
    %1560 = vmatprep.subr.mxu0 0.0
    %1561 = vmatpush1.msra.mxu0 0.0
    %1562 = vmatprep.subr.mxu0 0.0
    %1563 = vmatpush1.msra.mxu0 0.0
    %1564 = vmatprep.subr.mxu0 0.0
    %1565 = vmatpush1.msra.mxu0 0.0
    %1566 = vmatprep.subr.mxu0 0.0
    %1567 = vmatpush1.msra.mxu0 %v1531
    %1568 = vmatprep.subr.mxu0 0.0
    %1569 = vmatpush2.msra.mxu0 0.0
    %1570 = vmatprep.subr.mxu0 0.0
    %1571 = vmatpush2.msra.mxu0 0.0
    %1572 = vmatprep.subr.mxu0 0.0
    %1573 = vmatpush2.msra.mxu0 0.0
    %1574 = vmatprep.subr.mxu0 0.0
    %1575 = vmatpush2.msra.mxu0 0.0
    %1576 = vmatprep.subr.mxu0 0.0
    %1577 = vmatpush2.msra.mxu0 0.0
    %1578 = vmatprep.subr.mxu0 0.0
    %1579 = vmatpush2.msra.mxu0 0.0
    %1580 = vmatprep.subr.mxu0 0.0
    %1581 = vmatpush2.msra.mxu0 0.0
    %1582 = vmatprep.subr.mxu0 0.0
    %1583 = vmatpush2.msra.mxu0 0.0
    %1584 = vmatprep.subr.mxu0 0.0
    %1585 = vmatpush2.msra.mxu0 0.0
    %1586 = vmatprep.subr.mxu0 0.0
    %1587 = vmatpush2.msra.mxu0 0.0
    %1588 = vmatprep.subr.mxu0 0.0
    %1589 = vmatpush2.msra.mxu0 0.0
    %1590 = vmatprep.subr.mxu0 0.0
    %1591 = vmatpush2.msra.mxu0 0.0
    %1592 = vmatprep.subr.mxu0 0.0
    %1593 = vmatpush2.msra.mxu0 0.0
    %1594 = vmatprep.subr.mxu0 0.0
    %1595 = vmatpush2.msra.mxu0 0.0
    %1596 = vmatprep.subr.mxu0 0.0
    %1597 = vmatpush2.msra.mxu0 0.0
    %1598 = vmatprep.subr.mxu0 0.0
    %1599 = vmatpush2.msra.mxu0 0.0
    %1600 = vmatprep.mubr.f32.mxu0 0.0
    %1601 = vmatmul.mubr.f32.gmra.mxu0 %v1534
    %v1602 = vpop.f32.mrf.mxu0
    %v1603 = vadd.f32 0.0, %v1602
    %v1604 = vpop.f32.mrf.mxu0
    %1605 = vdwg.mxu0
    %v1607 = vsel %vm461, %v1527, 0
    %v1610 = vsel %vm461, %v1603, 0
    %1612 = vmatprep.subr.mxu0 0.0
    %1613 = vmatpush1.msra.mxu0 0.0
    %1614 = vmatprep.subr.mxu0 0.0
    %1615 = vmatpush1.msra.mxu0 0.0
    %1616 = vmatprep.subr.mxu0 0.0
    %1617 = vmatpush1.msra.mxu0 0.0
    %1618 = vmatprep.subr.mxu0 0.0
    %1619 = vmatpush1.msra.mxu0 0.0
    %1620 = vmatprep.subr.mxu0 0.0
    %1621 = vmatpush1.msra.mxu0 0.0
    %1622 = vmatprep.subr.mxu0 0.0
    %1623 = vmatpush1.msra.mxu0 0.0
    %1624 = vmatprep.subr.mxu0 0.0
    %1625 = vmatpush1.msra.mxu0 0.0
    %1626 = vmatprep.subr.mxu0 0.0
    %1627 = vmatpush1.msra.mxu0 0.0
    %1628 = vmatprep.subr.mxu0 0.0
    %1629 = vmatpush1.msra.mxu0 0.0
    %1630 = vmatprep.subr.mxu0 0.0
    %1631 = vmatpush1.msra.mxu0 0.0
    %1632 = vmatprep.subr.mxu0 0.0
    %1633 = vmatpush1.msra.mxu0 0.0
    %1634 = vmatprep.subr.mxu0 0.0
    %1635 = vmatpush1.msra.mxu0 0.0
    %1636 = vmatprep.subr.mxu0 0.0
    %1637 = vmatpush1.msra.mxu0 0.0
    %1638 = vmatprep.subr.mxu0 0.0
    %1639 = vmatpush1.msra.mxu0 0.0
    %1640 = vmatprep.subr.mxu0 0.0
    %1641 = vmatpush1.msra.mxu0 0.0
    %1642 = vmatprep.subr.mxu0 0.0
    %1643 = vmatpush1.msra.mxu0 %v426
    %1644 = vmatprep.subr.mxu0 0.0
    %1645 = vmatpush2.msra.mxu0 0.0
    %1646 = vmatprep.subr.mxu0 0.0
    %1647 = vmatpush2.msra.mxu0 0.0
    %1648 = vmatprep.subr.mxu0 0.0
    %1649 = vmatpush2.msra.mxu0 0.0
    %1650 = vmatprep.subr.mxu0 0.0
    %1651 = vmatpush2.msra.mxu0 0.0
    %1652 = vmatprep.subr.mxu0 0.0
    %1653 = vmatpush2.msra.mxu0 0.0
    %1654 = vmatprep.subr.mxu0 0.0
    %1655 = vmatpush2.msra.mxu0 0.0
    %1656 = vmatprep.subr.mxu0 0.0
    %1657 = vmatpush2.msra.mxu0 0.0
    %1658 = vmatprep.subr.mxu0 0.0
    %1659 = vmatpush2.msra.mxu0 0.0
    %1660 = vmatprep.subr.mxu0 0.0
    %1661 = vmatpush2.msra.mxu0 0.0
    %1662 = vmatprep.subr.mxu0 0.0
    %1663 = vmatpush2.msra.mxu0 0.0
    %1664 = vmatprep.subr.mxu0 0.0
    %1665 = vmatpush2.msra.mxu0 0.0
    %1666 = vmatprep.subr.mxu0 0.0
    %1667 = vmatpush2.msra.mxu0 0.0
    %1668 = vmatprep.subr.mxu0 0.0
    %1669 = vmatpush2.msra.mxu0 0.0
    %1670 = vmatprep.subr.mxu0 0.0
    %1671 = vmatpush2.msra.mxu0 0.0
    %1672 = vmatprep.subr.mxu0 0.0
    %1673 = vmatpush2.msra.mxu0 0.0
    %1674 = vmatprep.subr.mxu0 0.0
    %1675 = vmatpush2.msra.mxu0 0.0
    %1676 = vmatprep.mubr.f32.mxu0 0.0
    %1677 = vmatmul.mubr.f32.gmra.mxu0 %v1607
    %v1678 = vpop.f32.mrf.mxu0
    %v1679 = vadd.f32 0.0, %v1678
    %v1680 = vpop.f32.mrf.mxu0
    %1681 = vmatprep.mubr.f32.mxu0 0.0
    %1682 = vmatmul.mubr.f32.gmra.mxu0 %v1610
    %v1683 = vpop.f32.mrf.mxu0
    %v1684 = vadd.f32 0.0, %v1683
    %v1685 = vpop.f32.mrf.mxu0
    %1686 = vdwg.mxu0
    %v1687 = vadd.f32 %v1268, %v1679
    %v1688 = vadd.f32 %v1273, %v1684
    %1689 = vrot.lane.b32.xlu0 %v238, 104
    %v1690 = vpop.permute.xlu0 %1689
    %1691 = vrot.lane.b32.xlu0 %v330, 104
    %v1692 = vpop.permute.xlu0 %1691
    %v1693 = vsel %vm461, %v1690, 0
    %v1695 = vsel %vm461, %v1692, 0
    %1697 = vmatprep.subr.mxu0 0.0
    %1698 = vmatpush1.xpose.msra.mxu0 0.0
    %1699 = vmatprep.subr.mxu0 0.0
    %1700 = vmatpush1.xpose.msra.mxu0 0.0
    %1701 = vmatprep.subr.mxu0 0.0
    %1702 = vmatpush1.xpose.msra.mxu0 0.0
    %1703 = vmatprep.subr.mxu0 0.0
    %1704 = vmatpush1.xpose.msra.mxu0 0.0
    %1705 = vmatprep.subr.mxu0 0.0
    %1706 = vmatpush1.xpose.msra.mxu0 0.0
    %1707 = vmatprep.subr.mxu0 0.0
    %1708 = vmatpush1.xpose.msra.mxu0 0.0
    %1709 = vmatprep.subr.mxu0 0.0
    %1710 = vmatpush1.xpose.msra.mxu0 0.0
    %1711 = vmatprep.subr.mxu0 0.0
    %1712 = vmatpush1.xpose.msra.mxu0 0.0
    %1713 = vmatprep.subr.mxu0 0.0
    %1714 = vmatpush1.xpose.msra.mxu0 0.0
    %1715 = vmatprep.subr.mxu0 0.0
    %1716 = vmatpush1.xpose.msra.mxu0 0.0
    %1717 = vmatprep.subr.mxu0 0.0
    %1718 = vmatpush1.xpose.msra.mxu0 0.0
    %1719 = vmatprep.subr.mxu0 0.0
    %1720 = vmatpush1.xpose.msra.mxu0 0.0
    %1721 = vmatprep.subr.mxu0 0.0
    %1722 = vmatpush1.xpose.msra.mxu0 0.0
    %1723 = vmatprep.subr.mxu0 0.0
    %1724 = vmatpush1.xpose.msra.mxu0 0.0
    %1725 = vmatprep.subr.mxu0 0.0
    %1726 = vmatpush1.xpose.msra.mxu0 0.0
    %1727 = vmatprep.subr.mxu0 0.0
    %1728 = vmatpush1.xpose.msra.mxu0 %v1695
    %1729 = vmatprep.subr.mxu0 0.0
    %1730 = vmatpush2.xpose.msra.mxu0 0.0
    %1731 = vmatprep.subr.mxu0 0.0
    %1732 = vmatpush2.xpose.msra.mxu0 0.0
    %1733 = vmatprep.subr.mxu0 0.0
    %1734 = vmatpush2.xpose.msra.mxu0 0.0
    %1735 = vmatprep.subr.mxu0 0.0
    %1736 = vmatpush2.xpose.msra.mxu0 0.0
    %1737 = vmatprep.subr.mxu0 0.0
    %1738 = vmatpush2.xpose.msra.mxu0 0.0
    %1739 = vmatprep.subr.mxu0 0.0
    %1740 = vmatpush2.xpose.msra.mxu0 0.0
    %1741 = vmatprep.subr.mxu0 0.0
    %1742 = vmatpush2.xpose.msra.mxu0 0.0
    %1743 = vmatprep.subr.mxu0 0.0
    %1744 = vmatpush2.xpose.msra.mxu0 0.0
    %1745 = vmatprep.subr.mxu0 0.0
    %1746 = vmatpush2.xpose.msra.mxu0 0.0
    %1747 = vmatprep.subr.mxu0 0.0
    %1748 = vmatpush2.xpose.msra.mxu0 0.0
    %1749 = vmatprep.subr.mxu0 0.0
    %1750 = vmatpush2.xpose.msra.mxu0 0.0
    %1751 = vmatprep.subr.mxu0 0.0
    %1752 = vmatpush2.xpose.msra.mxu0 0.0
    %1753 = vmatprep.subr.mxu0 0.0
    %1754 = vmatpush2.xpose.msra.mxu0 0.0
    %1755 = vmatprep.subr.mxu0 0.0
    %1756 = vmatpush2.xpose.msra.mxu0 0.0
    %1757 = vmatprep.subr.mxu0 0.0
    %1758 = vmatpush2.xpose.msra.mxu0 0.0
    %1759 = vmatprep.subr.mxu0 0.0
    %1760 = vmatpush2.xpose.msra.mxu0 0.0
    %1761 = vmatprep.mubr.f32.mxu0 0.0
    %1762 = vmatmul.mubr.f32.gmra.mxu0 %v1693
    %v1763 = vpop.f32.mrf.mxu0
    %v1764 = vadd.f32 %v454, %v1763
    %v1765 = vpop.f32.mrf.mxu0
    %1766 = vdwg.mxu0
    %1767 = vrot.lane.b32.xlu0 %v243, 104
    %v1768 = vpop.permute.xlu0 %1767
    %1769 = vrot.lane.b32.xlu0 %v335, 104
    %v1770 = vpop.permute.xlu0 %1769
    %v1771 = vsel %vm461, %v1768, 0
    %v1773 = vsel %vm461, %v1770, 0
    %1775 = vmatprep.subr.mxu0 0.0
    %1776 = vmatpush1.xpose.msra.mxu0 0.0
    %1777 = vmatprep.subr.mxu0 0.0
    %1778 = vmatpush1.xpose.msra.mxu0 0.0
    %1779 = vmatprep.subr.mxu0 0.0
    %1780 = vmatpush1.xpose.msra.mxu0 0.0
    %1781 = vmatprep.subr.mxu0 0.0
    %1782 = vmatpush1.xpose.msra.mxu0 0.0
    %1783 = vmatprep.subr.mxu0 0.0
    %1784 = vmatpush1.xpose.msra.mxu0 0.0
    %1785 = vmatprep.subr.mxu0 0.0
    %1786 = vmatpush1.xpose.msra.mxu0 0.0
    %1787 = vmatprep.subr.mxu0 0.0
    %1788 = vmatpush1.xpose.msra.mxu0 0.0
    %1789 = vmatprep.subr.mxu0 0.0
    %1790 = vmatpush1.xpose.msra.mxu0 0.0
    %1791 = vmatprep.subr.mxu0 0.0
    %1792 = vmatpush1.xpose.msra.mxu0 0.0
    %1793 = vmatprep.subr.mxu0 0.0
    %1794 = vmatpush1.xpose.msra.mxu0 0.0
    %1795 = vmatprep.subr.mxu0 0.0
    %1796 = vmatpush1.xpose.msra.mxu0 0.0
    %1797 = vmatprep.subr.mxu0 0.0
    %1798 = vmatpush1.xpose.msra.mxu0 0.0
    %1799 = vmatprep.subr.mxu0 0.0
    %1800 = vmatpush1.xpose.msra.mxu0 0.0
    %1801 = vmatprep.subr.mxu0 0.0
    %1802 = vmatpush1.xpose.msra.mxu0 0.0
    %1803 = vmatprep.subr.mxu0 0.0
    %1804 = vmatpush1.xpose.msra.mxu0 0.0
    %1805 = vmatprep.subr.mxu0 0.0
    %1806 = vmatpush1.xpose.msra.mxu0 %v1773
    %1807 = vmatprep.subr.mxu0 0.0
    %1808 = vmatpush2.xpose.msra.mxu0 0.0
    %1809 = vmatprep.subr.mxu0 0.0
    %1810 = vmatpush2.xpose.msra.mxu0 0.0
    %1811 = vmatprep.subr.mxu0 0.0
    %1812 = vmatpush2.xpose.msra.mxu0 0.0
    %1813 = vmatprep.subr.mxu0 0.0
    %1814 = vmatpush2.xpose.msra.mxu0 0.0
    %1815 = vmatprep.subr.mxu0 0.0
    %1816 = vmatpush2.xpose.msra.mxu0 0.0
    %1817 = vmatprep.subr.mxu0 0.0
    %1818 = vmatpush2.xpose.msra.mxu0 0.0
    %1819 = vmatprep.subr.mxu0 0.0
    %1820 = vmatpush2.xpose.msra.mxu0 0.0
    %1821 = vmatprep.subr.mxu0 0.0
    %1822 = vmatpush2.xpose.msra.mxu0 0.0
    %1823 = vmatprep.subr.mxu0 0.0
    %1824 = vmatpush2.xpose.msra.mxu0 0.0
    %1825 = vmatprep.subr.mxu0 0.0
    %1826 = vmatpush2.xpose.msra.mxu0 0.0
    %1827 = vmatprep.subr.mxu0 0.0
    %1828 = vmatpush2.xpose.msra.mxu0 0.0
    %1829 = vmatprep.subr.mxu0 0.0
    %1830 = vmatpush2.xpose.msra.mxu0 0.0
    %1831 = vmatprep.subr.mxu0 0.0
    %1832 = vmatpush2.xpose.msra.mxu0 0.0
    %1833 = vmatprep.subr.mxu0 0.0
    %1834 = vmatpush2.xpose.msra.mxu0 0.0
    %1835 = vmatprep.subr.mxu0 0.0
    %1836 = vmatpush2.xpose.msra.mxu0 0.0
    %1837 = vmatprep.subr.mxu0 0.0
    %1838 = vmatpush2.xpose.msra.mxu0 0.0
    %1839 = vmatprep.mubr.f32.mxu0 0.0
    %1840 = vmatmul.mubr.f32.gmra.mxu0 %v1771
    %v1841 = vpop.f32.mrf.mxu0
    %v1842 = vadd.f32 %v458, %v1841
    %v1843 = vpop.f32.mrf.mxu0
    %1844 = vdwg.mxu0
    %v1845 = vsel %vm461, %v1764, -inf
    %1846 = vmax.xlane.f32.xlu0 %v1845
    %v1847 = vpop.xlane.xlu0 %1846
    %v1848 = vsel %vm461, %v1842, -inf
    %1849 = vmax.xlane.f32.xlu0 %v1848
    %v1850 = vpop.xlane.xlu0 %1849
    %v1851 = vsub.f32 %v1764, %v1847
    %v1852 = vsub.f32 %v1842, %v1850
    %v1853 = vmul.f32 %v1851, 1.442695
    %v1854 = vpow.pop %v1853
    %v1855 = vmul.f32 %v1852, 1.442695
    %v1856 = vpow.pop %v1855
    %v1857 = vsel %vm461, %v1854, 0.0
    %1858 = vadd.xlane.f32.xlu0 %v1857
    %v1859 = vpop.xlane.xlu0 %1858
    %v1860 = vsel %vm461, %v1856, 0.0
    %1861 = vadd.xlane.f32.xlu0 %v1860
    %v1862 = vpop.xlane.xlu0 %1861
    %v1863 = vrcp.pop %v1859
    %v1864 = vmul.f32 %v1854, %v1863
    %v1865 = vrcp.pop %v1862
    %v1866 = vmul.f32 %v1856, %v1865
    %1867 = vrot.lane.b32.xlu0 %v416, 104
    %v1868 = vpop.permute.xlu0 %1867
    %v1871 = vsel %vm461, %v1864, 0
    %1873 = vmatprep.subr.mxu0 0.0
    %1874 = vmatpush1.msra.mxu0 0.0
    %1875 = vmatprep.subr.mxu0 0.0
    %1876 = vmatpush1.msra.mxu0 0.0
    %1877 = vmatprep.subr.mxu0 0.0
    %1878 = vmatpush1.msra.mxu0 0.0
    %1879 = vmatprep.subr.mxu0 0.0
    %1880 = vmatpush1.msra.mxu0 0.0
    %1881 = vmatprep.subr.mxu0 0.0
    %1882 = vmatpush1.msra.mxu0 0.0
    %1883 = vmatprep.subr.mxu0 0.0
    %1884 = vmatpush1.msra.mxu0 0.0
    %1885 = vmatprep.subr.mxu0 0.0
    %1886 = vmatpush1.msra.mxu0 0.0
    %1887 = vmatprep.subr.mxu0 0.0
    %1888 = vmatpush1.msra.mxu0 0.0
    %1889 = vmatprep.subr.mxu0 0.0
    %1890 = vmatpush1.msra.mxu0 0.0
    %1891 = vmatprep.subr.mxu0 0.0
    %1892 = vmatpush1.msra.mxu0 0.0
    %1893 = vmatprep.subr.mxu0 0.0
    %1894 = vmatpush1.msra.mxu0 0.0
    %1895 = vmatprep.subr.mxu0 0.0
    %1896 = vmatpush1.msra.mxu0 0.0
    %1897 = vmatprep.subr.mxu0 0.0
    %1898 = vmatpush1.msra.mxu0 0.0
    %1899 = vmatprep.subr.mxu0 0.0
    %1900 = vmatpush1.msra.mxu0 0.0
    %1901 = vmatprep.subr.mxu0 0.0
    %1902 = vmatpush1.msra.mxu0 0.0
    %1903 = vmatprep.subr.mxu0 0.0
    %1904 = vmatpush1.msra.mxu0 %v1868
    %1905 = vmatprep.subr.mxu0 0.0
    %1906 = vmatpush2.msra.mxu0 0.0
    %1907 = vmatprep.subr.mxu0 0.0
    %1908 = vmatpush2.msra.mxu0 0.0
    %1909 = vmatprep.subr.mxu0 0.0
    %1910 = vmatpush2.msra.mxu0 0.0
    %1911 = vmatprep.subr.mxu0 0.0
    %1912 = vmatpush2.msra.mxu0 0.0
    %1913 = vmatprep.subr.mxu0 0.0
    %1914 = vmatpush2.msra.mxu0 0.0
    %1915 = vmatprep.subr.mxu0 0.0
    %1916 = vmatpush2.msra.mxu0 0.0
    %1917 = vmatprep.subr.mxu0 0.0
    %1918 = vmatpush2.msra.mxu0 0.0
    %1919 = vmatprep.subr.mxu0 0.0
    %1920 = vmatpush2.msra.mxu0 0.0
    %1921 = vmatprep.subr.mxu0 0.0
    %1922 = vmatpush2.msra.mxu0 0.0
    %1923 = vmatprep.subr.mxu0 0.0
    %1924 = vmatpush2.msra.mxu0 0.0
    %1925 = vmatprep.subr.mxu0 0.0
    %1926 = vmatpush2.msra.mxu0 0.0
    %1927 = vmatprep.subr.mxu0 0.0
    %1928 = vmatpush2.msra.mxu0 0.0
    %1929 = vmatprep.subr.mxu0 0.0
    %1930 = vmatpush2.msra.mxu0 0.0
    %1931 = vmatprep.subr.mxu0 0.0
    %1932 = vmatpush2.msra.mxu0 0.0
    %1933 = vmatprep.subr.mxu0 0.0
    %1934 = vmatpush2.msra.mxu0 0.0
    %1935 = vmatprep.subr.mxu0 0.0
    %1936 = vmatpush2.msra.mxu0 0.0
    %1937 = vmatprep.mubr.f32.mxu0 0.0
    %1938 = vmatmul.mubr.f32.gmra.mxu0 %v1871
    %v1939 = vpop.f32.mrf.mxu0
    %v1940 = vadd.f32 0.0, %v1939
    %v1941 = vpop.f32.mrf.mxu0
    %1942 = vdwg.mxu0
    %1943 = vrot.lane.b32.xlu0 %v421, 104
    %v1944 = vpop.permute.xlu0 %1943
    %v1947 = vsel %vm461, %v1866, 0
    %1949 = vmatprep.subr.mxu0 0.0
    %1950 = vmatpush1.msra.mxu0 0.0
    %1951 = vmatprep.subr.mxu0 0.0
    %1952 = vmatpush1.msra.mxu0 0.0
    %1953 = vmatprep.subr.mxu0 0.0
    %1954 = vmatpush1.msra.mxu0 0.0
    %1955 = vmatprep.subr.mxu0 0.0
    %1956 = vmatpush1.msra.mxu0 0.0
    %1957 = vmatprep.subr.mxu0 0.0
    %1958 = vmatpush1.msra.mxu0 0.0
    %1959 = vmatprep.subr.mxu0 0.0
    %1960 = vmatpush1.msra.mxu0 0.0
    %1961 = vmatprep.subr.mxu0 0.0
    %1962 = vmatpush1.msra.mxu0 0.0
    %1963 = vmatprep.subr.mxu0 0.0
    %1964 = vmatpush1.msra.mxu0 0.0
    %1965 = vmatprep.subr.mxu0 0.0
    %1966 = vmatpush1.msra.mxu0 0.0
    %1967 = vmatprep.subr.mxu0 0.0
    %1968 = vmatpush1.msra.mxu0 0.0
    %1969 = vmatprep.subr.mxu0 0.0
    %1970 = vmatpush1.msra.mxu0 0.0
    %1971 = vmatprep.subr.mxu0 0.0
    %1972 = vmatpush1.msra.mxu0 0.0
    %1973 = vmatprep.subr.mxu0 0.0
    %1974 = vmatpush1.msra.mxu0 0.0
    %1975 = vmatprep.subr.mxu0 0.0
    %1976 = vmatpush1.msra.mxu0 0.0
    %1977 = vmatprep.subr.mxu0 0.0
    %1978 = vmatpush1.msra.mxu0 0.0
    %1979 = vmatprep.subr.mxu0 0.0
    %1980 = vmatpush1.msra.mxu0 %v1944
    %1981 = vmatprep.subr.mxu0 0.0
    %1982 = vmatpush2.msra.mxu0 0.0
    %1983 = vmatprep.subr.mxu0 0.0
    %1984 = vmatpush2.msra.mxu0 0.0
    %1985 = vmatprep.subr.mxu0 0.0
    %1986 = vmatpush2.msra.mxu0 0.0
    %1987 = vmatprep.subr.mxu0 0.0
    %1988 = vmatpush2.msra.mxu0 0.0
    %1989 = vmatprep.subr.mxu0 0.0
    %1990 = vmatpush2.msra.mxu0 0.0
    %1991 = vmatprep.subr.mxu0 0.0
    %1992 = vmatpush2.msra.mxu0 0.0
    %1993 = vmatprep.subr.mxu0 0.0
    %1994 = vmatpush2.msra.mxu0 0.0
    %1995 = vmatprep.subr.mxu0 0.0
    %1996 = vmatpush2.msra.mxu0 0.0
    %1997 = vmatprep.subr.mxu0 0.0
    %1998 = vmatpush2.msra.mxu0 0.0
    %1999 = vmatprep.subr.mxu0 0.0
    %2000 = vmatpush2.msra.mxu0 0.0
    %2001 = vmatprep.subr.mxu0 0.0
    %2002 = vmatpush2.msra.mxu0 0.0
    %2003 = vmatprep.subr.mxu0 0.0
    %2004 = vmatpush2.msra.mxu0 0.0
    %2005 = vmatprep.subr.mxu0 0.0
    %2006 = vmatpush2.msra.mxu0 0.0
    %2007 = vmatprep.subr.mxu0 0.0
    %2008 = vmatpush2.msra.mxu0 0.0
    %2009 = vmatprep.subr.mxu0 0.0
    %2010 = vmatpush2.msra.mxu0 0.0
    %2011 = vmatprep.subr.mxu0 0.0
    %2012 = vmatpush2.msra.mxu0 0.0
    %2013 = vmatprep.mubr.f32.mxu0 0.0
    %2014 = vmatmul.mubr.f32.gmra.mxu0 %v1947
    %v2015 = vpop.f32.mrf.mxu0
    %v2016 = vadd.f32 0.0, %v2015
    %v2017 = vpop.f32.mrf.mxu0
    %2018 = vdwg.mxu0
    %v2020 = vsel %vm461, %v1940, 0
    %v2023 = vsel %vm461, %v2016, 0
    %2025 = vmatprep.subr.mxu0 0.0
    %2026 = vmatpush1.msra.mxu0 0.0
    %2027 = vmatprep.subr.mxu0 0.0
    %2028 = vmatpush1.msra.mxu0 0.0
    %2029 = vmatprep.subr.mxu0 0.0
    %2030 = vmatpush1.msra.mxu0 0.0
    %2031 = vmatprep.subr.mxu0 0.0
    %2032 = vmatpush1.msra.mxu0 0.0
    %2033 = vmatprep.subr.mxu0 0.0
    %2034 = vmatpush1.msra.mxu0 0.0
    %2035 = vmatprep.subr.mxu0 0.0
    %2036 = vmatpush1.msra.mxu0 0.0
    %2037 = vmatprep.subr.mxu0 0.0
    %2038 = vmatpush1.msra.mxu0 0.0
    %2039 = vmatprep.subr.mxu0 0.0
    %2040 = vmatpush1.msra.mxu0 0.0
    %2041 = vmatprep.subr.mxu0 0.0
    %2042 = vmatpush1.msra.mxu0 0.0
    %2043 = vmatprep.subr.mxu0 0.0
    %2044 = vmatpush1.msra.mxu0 0.0
    %2045 = vmatprep.subr.mxu0 0.0
    %2046 = vmatpush1.msra.mxu0 0.0
    %2047 = vmatprep.subr.mxu0 0.0
    %2048 = vmatpush1.msra.mxu0 0.0
    %2049 = vmatprep.subr.mxu0 0.0
    %2050 = vmatpush1.msra.mxu0 0.0
    %2051 = vmatprep.subr.mxu0 0.0
    %2052 = vmatpush1.msra.mxu0 0.0
    %2053 = vmatprep.subr.mxu0 0.0
    %2054 = vmatpush1.msra.mxu0 0.0
    %2055 = vmatprep.subr.mxu0 0.0
    %2056 = vmatpush1.msra.mxu0 %v427
    %2057 = vmatprep.subr.mxu0 0.0
    %2058 = vmatpush2.msra.mxu0 0.0
    %2059 = vmatprep.subr.mxu0 0.0
    %2060 = vmatpush2.msra.mxu0 0.0
    %2061 = vmatprep.subr.mxu0 0.0
    %2062 = vmatpush2.msra.mxu0 0.0
    %2063 = vmatprep.subr.mxu0 0.0
    %2064 = vmatpush2.msra.mxu0 0.0
    %2065 = vmatprep.subr.mxu0 0.0
    %2066 = vmatpush2.msra.mxu0 0.0
    %2067 = vmatprep.subr.mxu0 0.0
    %2068 = vmatpush2.msra.mxu0 0.0
    %2069 = vmatprep.subr.mxu0 0.0
    %2070 = vmatpush2.msra.mxu0 0.0
    %2071 = vmatprep.subr.mxu0 0.0
    %2072 = vmatpush2.msra.mxu0 0.0
    %2073 = vmatprep.subr.mxu0 0.0
    %2074 = vmatpush2.msra.mxu0 0.0
    %2075 = vmatprep.subr.mxu0 0.0
    %2076 = vmatpush2.msra.mxu0 0.0
    %2077 = vmatprep.subr.mxu0 0.0
    %2078 = vmatpush2.msra.mxu0 0.0
    %2079 = vmatprep.subr.mxu0 0.0
    %2080 = vmatpush2.msra.mxu0 0.0
    %2081 = vmatprep.subr.mxu0 0.0
    %2082 = vmatpush2.msra.mxu0 0.0
    %2083 = vmatprep.subr.mxu0 0.0
    %2084 = vmatpush2.msra.mxu0 0.0
    %2085 = vmatprep.subr.mxu0 0.0
    %2086 = vmatpush2.msra.mxu0 0.0
    %2087 = vmatprep.subr.mxu0 0.0
    %2088 = vmatpush2.msra.mxu0 0.0
    %2089 = vmatprep.mubr.f32.mxu0 0.0
    %2090 = vmatmul.mubr.f32.gmra.mxu0 %v2020
    %v2091 = vpop.f32.mrf.mxu0
    %v2092 = vadd.f32 0.0, %v2091
    %v2093 = vpop.f32.mrf.mxu0
    %2094 = vmatprep.mubr.f32.mxu0 0.0
    %2095 = vmatmul.mubr.f32.gmra.mxu0 %v2023
    %v2096 = vpop.f32.mrf.mxu0
    %v2097 = vadd.f32 0.0, %v2096
    %v2098 = vpop.f32.mrf.mxu0
    %2099 = vdwg.mxu0
    %v2100 = vadd.f32 %v1687, %v2092
    %v2101 = vadd.f32 %v1688, %v2097
    %v2102 = vld [vmem:[%s10] sm:$0x1]
    %v2104 = vlaneseq
    %v2105 = vshrl.u32 %v2104, 7
    %v2106 = vsub.s32 0, %v2105
    %v2107 = vrot.slane %v2102, %v2106
    %v2109 = vadd.f32 %v2100, %v2107
    %v2110 = vadd.f32 %v2101, %v2107
    %2111 = vst.msk [vmem:[#allocation2 + $0x1] sm:$0xff] %vm146, %v2109
    %2112 = vst.msk [vmem:[#allocation2 + $0x11] sm:$0xff] %vm146, %v2110
    %v2113 = vld [vmem:[#allocation2] sm:$0xff]
    %v2114 = vld [vmem:[#allocation2 + $0x10] sm:$0xff]
    %v2115 = vld [vmem:[#allocation14] sm:$0xff]
    %v2116 = vld [vmem:[#allocation14 + $0x8] sm:$0xff]
    %v2117 = vld [vmem:[#allocation14 + $0x10] sm:$0xff]
    %v2118 = vld [vmem:[#allocation14 + $0x18] sm:$0xff]
    %v2119 = vld [vmem:[#allocation2 + $0x1] sm:$0xff]
    %v2120 = vld [vmem:[#allocation2 + $0x11] sm:$0xff]
    %s2121 = scalar_lea.vmem [#allocation14], 32
    %v2122 = vld [vmem:[%s2121] sm:$0xff]
    %v2123 = vld [vmem:[%s2121 + $0x8] sm:$0xff]
    %v2124 = vld [vmem:[%s2121 + $0x10] sm:$0xff]
    %v2125 = vld [vmem:[%s2121 + $0x18] sm:$0xff]
    %v2127 = vsel %vm146, %v2119, 0
    %v2130 = vsel %vm146, %v2120, 0
    %2132 = vmatprep.subr.mxu0 0.0
    %2133 = vmatpush1.msra.mxu0 0.0
    %2134 = vmatprep.subr.mxu0 0.0
    %2135 = vmatpush1.msra.mxu0 0.0
    %2136 = vmatprep.subr.mxu0 0.0
    %2137 = vmatpush1.msra.mxu0 0.0
    %2138 = vmatprep.subr.mxu0 0.0
    %2139 = vmatpush1.msra.mxu0 0.0
    %2140 = vmatprep.subr.mxu0 0.0
    %2141 = vmatpush1.msra.mxu0 0.0
    %2142 = vmatprep.subr.mxu0 0.0
    %2143 = vmatpush1.msra.mxu0 0.0
    %2144 = vmatprep.subr.mxu0 0.0
    %2145 = vmatpush1.msra.mxu0 0.0
    %2146 = vmatprep.subr.mxu0 0.0
    %2147 = vmatpush1.msra.mxu0 0.0
    %2148 = vmatprep.subr.mxu0 0.0
    %2149 = vmatpush1.msra.mxu0 0.0
    %2150 = vmatprep.subr.mxu0 0.0
    %2151 = vmatpush1.msra.mxu0 0.0
    %2152 = vmatprep.subr.mxu0 0.0
    %2153 = vmatpush1.msra.mxu0 0.0
    %2154 = vmatprep.subr.mxu0 0.0
    %2155 = vmatpush1.msra.mxu0 0.0
    %2156 = vmatprep.subr.mxu0 0.0
    %2157 = vmatpush1.msra.mxu0 %v2125
    %2158 = vmatprep.subr.mxu0 0.0
    %2159 = vmatpush1.msra.mxu0 %v2124
    %2160 = vmatprep.subr.mxu0 0.0
    %2161 = vmatpush1.msra.mxu0 %v2123
    %2162 = vmatprep.subr.mxu0 0.0
    %2163 = vmatpush1.msra.mxu0 %v2122
    %2164 = vmatprep.subr.mxu0 0.0
    %2165 = vmatpush2.msra.mxu0 0.0
    %2166 = vmatprep.subr.mxu0 0.0
    %2167 = vmatpush2.msra.mxu0 0.0
    %2168 = vmatprep.subr.mxu0 0.0
    %2169 = vmatpush2.msra.mxu0 0.0
    %2170 = vmatprep.subr.mxu0 0.0
    %2171 = vmatpush2.msra.mxu0 0.0
    %2172 = vmatprep.subr.mxu0 0.0
    %2173 = vmatpush2.msra.mxu0 0.0
    %2174 = vmatprep.subr.mxu0 0.0
    %2175 = vmatpush2.msra.mxu0 0.0
    %2176 = vmatprep.subr.mxu0 0.0
    %2177 = vmatpush2.msra.mxu0 0.0
    %2178 = vmatprep.subr.mxu0 0.0
    %2179 = vmatpush2.msra.mxu0 0.0
    %2180 = vmatprep.subr.mxu0 0.0
    %2181 = vmatpush2.msra.mxu0 0.0
    %2182 = vmatprep.subr.mxu0 0.0
    %2183 = vmatpush2.msra.mxu0 0.0
    %2184 = vmatprep.subr.mxu0 0.0
    %2185 = vmatpush2.msra.mxu0 0.0
    %2186 = vmatprep.subr.mxu0 0.0
    %2187 = vmatpush2.msra.mxu0 0.0
    %2188 = vmatprep.subr.mxu0 0.0
    %2189 = vmatpush2.msra.mxu0 0.0
    %2190 = vmatprep.subr.mxu0 0.0
    %2191 = vmatpush2.msra.mxu0 0.0
    %2192 = vmatprep.subr.mxu0 0.0
    %2193 = vmatpush2.msra.mxu0 0.0
    %2194 = vmatprep.subr.mxu0 0.0
    %2195 = vmatpush2.msra.mxu0 0.0
    %2196 = vmatprep.mubr.f32.mxu0 0.0
    %2197 = vmatmul.mubr.f32.gmra.mxu0 %v2127
    %v2198 = vpop.f32.mrf.mxu0
    %v2199 = vadd.f32 0.0, %v2198
    %v2200 = vpop.f32.mrf.mxu0
    %2201 = vmatprep.mubr.f32.mxu0 0.0
    %2202 = vmatmul.mubr.f32.gmra.mxu0 %v2130
    %v2203 = vpop.f32.mrf.mxu0
    %v2204 = vadd.f32 0.0, %v2203
    %v2205 = vpop.f32.mrf.mxu0
    %2206 = vdwg.mxu0
    %v2208 = vsel %vm146, %v2113, 0
    %v2211 = vsel %vm146, %v2114, 0
    %2213 = vmatprep.subr.mxu0 0.0
    %2214 = vmatpush1.msra.mxu0 0.0
    %2215 = vmatprep.subr.mxu0 0.0
    %2216 = vmatpush1.msra.mxu0 0.0
    %2217 = vmatprep.subr.mxu0 0.0
    %2218 = vmatpush1.msra.mxu0 0.0
    %2219 = vmatprep.subr.mxu0 0.0
    %2220 = vmatpush1.msra.mxu0 0.0
    %2221 = vmatprep.subr.mxu0 0.0
    %2222 = vmatpush1.msra.mxu0 0.0
    %2223 = vmatprep.subr.mxu0 0.0
    %2224 = vmatpush1.msra.mxu0 0.0
    %2225 = vmatprep.subr.mxu0 0.0
    %2226 = vmatpush1.msra.mxu0 0.0
    %2227 = vmatprep.subr.mxu0 0.0
    %2228 = vmatpush1.msra.mxu0 0.0
    %2229 = vmatprep.subr.mxu0 0.0
    %2230 = vmatpush1.msra.mxu0 0.0
    %2231 = vmatprep.subr.mxu0 0.0
    %2232 = vmatpush1.msra.mxu0 0.0
    %2233 = vmatprep.subr.mxu0 0.0
    %2234 = vmatpush1.msra.mxu0 0.0
    %2235 = vmatprep.subr.mxu0 0.0
    %2236 = vmatpush1.msra.mxu0 0.0
    %2237 = vmatprep.subr.mxu0 0.0
    %2238 = vmatpush1.msra.mxu0 %v2118
    %2239 = vmatprep.subr.mxu0 0.0
    %2240 = vmatpush1.msra.mxu0 %v2117
    %2241 = vmatprep.subr.mxu0 0.0
    %2242 = vmatpush1.msra.mxu0 %v2116
    %2243 = vmatprep.subr.mxu0 0.0
    %2244 = vmatpush1.msra.mxu0 %v2115
    %2245 = vmatprep.subr.mxu0 0.0
    %2246 = vmatpush2.msra.mxu0 0.0
    %2247 = vmatprep.subr.mxu0 0.0
    %2248 = vmatpush2.msra.mxu0 0.0
    %2249 = vmatprep.subr.mxu0 0.0
    %2250 = vmatpush2.msra.mxu0 0.0
    %2251 = vmatprep.subr.mxu0 0.0
    %2252 = vmatpush2.msra.mxu0 0.0
    %2253 = vmatprep.subr.mxu0 0.0
    %2254 = vmatpush2.msra.mxu0 0.0
    %2255 = vmatprep.subr.mxu0 0.0
    %2256 = vmatpush2.msra.mxu0 0.0
    %2257 = vmatprep.subr.mxu0 0.0
    %2258 = vmatpush2.msra.mxu0 0.0
    %2259 = vmatprep.subr.mxu0 0.0
    %2260 = vmatpush2.msra.mxu0 0.0
    %2261 = vmatprep.subr.mxu0 0.0
    %2262 = vmatpush2.msra.mxu0 0.0
    %2263 = vmatprep.subr.mxu0 0.0
    %2264 = vmatpush2.msra.mxu0 0.0
    %2265 = vmatprep.subr.mxu0 0.0
    %2266 = vmatpush2.msra.mxu0 0.0
    %2267 = vmatprep.subr.mxu0 0.0
    %2268 = vmatpush2.msra.mxu0 0.0
    %2269 = vmatprep.subr.mxu0 0.0
    %2270 = vmatpush2.msra.mxu0 0.0
    %2271 = vmatprep.subr.mxu0 0.0
    %2272 = vmatpush2.msra.mxu0 0.0
    %2273 = vmatprep.subr.mxu0 0.0
    %2274 = vmatpush2.msra.mxu0 0.0
    %2275 = vmatprep.subr.mxu0 0.0
    %2276 = vmatpush2.msra.mxu0 0.0
    %2277 = vmatprep.mubr.f32.mxu0 0.0
    %2278 = vmatmul.mubr.f32.gmra.mxu0 %v2208
    %v2279 = vpop.f32.mrf.mxu0
    %v2280 = vadd.f32 %v2199, %v2279
    %v2281 = vpop.f32.mrf.mxu0
    %2282 = vmatprep.mubr.f32.mxu0 0.0
    %2283 = vmatmul.mubr.f32.gmra.mxu0 %v2211
    %v2284 = vpop.f32.mrf.mxu0
    %v2285 = vadd.f32 %v2204, %v2284
    %v2286 = vpop.f32.mrf.mxu0
    %2287 = vdwg.mxu0
    %v2288 = vld [vmem:[#allocation2 + $0x2] sm:$0xff]
    %v2289 = vld [vmem:[#allocation2 + $0x12] sm:$0xff]
    %s2290 = scalar_lea.vmem [#allocation14], 64
    %v2291 = vld [vmem:[%s2290] sm:$0xff]
    %v2292 = vld [vmem:[%s2290 + $0x8] sm:$0xff]
    %v2293 = vld [vmem:[%s2290 + $0x10] sm:$0xff]
    %v2294 = vld [vmem:[%s2290 + $0x18] sm:$0xff]
    %v2296 = vsel %vm146, %v2288, 0
    %v2299 = vsel %vm146, %v2289, 0
    %2301 = vmatprep.subr.mxu0 0.0
    %2302 = vmatpush1.msra.mxu0 0.0
    %2303 = vmatprep.subr.mxu0 0.0
    %2304 = vmatpush1.msra.mxu0 0.0
    %2305 = vmatprep.subr.mxu0 0.0
    %2306 = vmatpush1.msra.mxu0 0.0
    %2307 = vmatprep.subr.mxu0 0.0
    %2308 = vmatpush1.msra.mxu0 0.0
    %2309 = vmatprep.subr.mxu0 0.0
    %2310 = vmatpush1.msra.mxu0 0.0
    %2311 = vmatprep.subr.mxu0 0.0
    %2312 = vmatpush1.msra.mxu0 0.0
    %2313 = vmatprep.subr.mxu0 0.0
    %2314 = vmatpush1.msra.mxu0 0.0
    %2315 = vmatprep.subr.mxu0 0.0
    %2316 = vmatpush1.msra.mxu0 0.0
    %2317 = vmatprep.subr.mxu0 0.0
    %2318 = vmatpush1.msra.mxu0 0.0
    %2319 = vmatprep.subr.mxu0 0.0
    %2320 = vmatpush1.msra.mxu0 0.0
    %2321 = vmatprep.subr.mxu0 0.0
    %2322 = vmatpush1.msra.mxu0 0.0
    %2323 = vmatprep.subr.mxu0 0.0
    %2324 = vmatpush1.msra.mxu0 0.0
    %2325 = vmatprep.subr.mxu0 0.0
    %2326 = vmatpush1.msra.mxu0 %v2294
    %2327 = vmatprep.subr.mxu0 0.0
    %2328 = vmatpush1.msra.mxu0 %v2293
    %2329 = vmatprep.subr.mxu0 0.0
    %2330 = vmatpush1.msra.mxu0 %v2292
    %2331 = vmatprep.subr.mxu0 0.0
    %2332 = vmatpush1.msra.mxu0 %v2291
    %2333 = vmatprep.subr.mxu0 0.0
    %2334 = vmatpush2.msra.mxu0 0.0
    %2335 = vmatprep.subr.mxu0 0.0
    %2336 = vmatpush2.msra.mxu0 0.0
    %2337 = vmatprep.subr.mxu0 0.0
    %2338 = vmatpush2.msra.mxu0 0.0
    %2339 = vmatprep.subr.mxu0 0.0
    %2340 = vmatpush2.msra.mxu0 0.0
    %2341 = vmatprep.subr.mxu0 0.0
    %2342 = vmatpush2.msra.mxu0 0.0
    %2343 = vmatprep.subr.mxu0 0.0
    %2344 = vmatpush2.msra.mxu0 0.0
    %2345 = vmatprep.subr.mxu0 0.0
    %2346 = vmatpush2.msra.mxu0 0.0
    %2347 = vmatprep.subr.mxu0 0.0
    %2348 = vmatpush2.msra.mxu0 0.0
    %2349 = vmatprep.subr.mxu0 0.0
    %2350 = vmatpush2.msra.mxu0 0.0
    %2351 = vmatprep.subr.mxu0 0.0
    %2352 = vmatpush2.msra.mxu0 0.0
    %2353 = vmatprep.subr.mxu0 0.0
    %2354 = vmatpush2.msra.mxu0 0.0
    %2355 = vmatprep.subr.mxu0 0.0
    %2356 = vmatpush2.msra.mxu0 0.0
    %2357 = vmatprep.subr.mxu0 0.0
    %2358 = vmatpush2.msra.mxu0 0.0
    %2359 = vmatprep.subr.mxu0 0.0
    %2360 = vmatpush2.msra.mxu0 0.0
    %2361 = vmatprep.subr.mxu0 0.0
    %2362 = vmatpush2.msra.mxu0 0.0
    %2363 = vmatprep.subr.mxu0 0.0
    %2364 = vmatpush2.msra.mxu0 0.0
    %2365 = vmatprep.mubr.f32.mxu0 0.0
    %2366 = vmatmul.mubr.f32.gmra.mxu0 %v2296
    %v2367 = vpop.f32.mrf.mxu0
    %v2368 = vadd.f32 0.0, %v2367
    %v2369 = vpop.f32.mrf.mxu0
    %2370 = vmatprep.mubr.f32.mxu0 0.0
    %2371 = vmatmul.mubr.f32.gmra.mxu0 %v2299
    %v2372 = vpop.f32.mrf.mxu0
    %v2373 = vadd.f32 0.0, %v2372
    %v2374 = vpop.f32.mrf.mxu0
    %2375 = vdwg.mxu0
    %v2376 = vadd.f32 %v2280, %v2368
    %v2377 = vadd.f32 %v2285, %v2373
    %v2378 = vld [vmem:[%s12] sm:$0x1]
    %v2380 = vlaneseq
    %v2381 = vshrl.u32 %v2380, 7
    %v2382 = vsub.s32 0, %v2381
    %v2383 = vrot.slane %v2378, %v2382
    %v2385 = vmul.f32 %v2376, %v2383
    %v2386 = vmul.f32 %v2377, %v2383
    %v2387 = vld [vmem:[%s13] sm:$0x1]
    %v2389 = vlaneseq
    %v2390 = vshrl.u32 %v2389, 7
    %v2391 = vsub.s32 0, %v2390
    %v2392 = vrot.slane %v2387, %v2391
    %v2394 = vadd.f32 %v2385, %v2392
    %v2395 = vadd.f32 %v2386, %v2392
    %v2396 = vmax.f32 %v2394, 0.0
    %v2397 = vmax.f32 %v2395, 0.0
    %v2398 = vadd.f32 %v2396, %v152
    %v2399 = vadd.f32 %v2397, %v153
    %s2400 = scalar_lea.vmem [#allocation8], 32
    %v2401 = vld [vmem:[%s2400] sm:$0xff]
    %v2402 = vld [vmem:[%s2400 + $0x8] sm:$0xff]
    %v2403 = vld [vmem:[%s2400 + $0x10] sm:$0xff]
    %v2404 = vld [vmem:[%s2400 + $0x18] sm:$0xff]
    %s2405 = scalar_lea.vmem %s4, 1
    %v2406 = vld [vmem:[%s2405] sm:$0x1]
    %v2408 = vlaneseq
    %v2409 = vshrl.u32 %v2408, 7
    %v2410 = vsub.s32 0, %v2409
    %v2411 = vrot.slane %v2406, %v2410
    %v2414 = vsel %vm146, %v2398, 0
    %v2417 = vsel %vm146, %v2399, 0
    %2419 = vmatprep.subr.mxu0 0.0
    %2420 = vmatpush1.msra.mxu0 0.0
    %2421 = vmatprep.subr.mxu0 0.0
    %2422 = vmatpush1.msra.mxu0 0.0
    %2423 = vmatprep.subr.mxu0 0.0
    %2424 = vmatpush1.msra.mxu0 0.0
    %2425 = vmatprep.subr.mxu0 0.0
    %2426 = vmatpush1.msra.mxu0 0.0
    %2427 = vmatprep.subr.mxu0 0.0
    %2428 = vmatpush1.msra.mxu0 0.0
    %2429 = vmatprep.subr.mxu0 0.0
    %2430 = vmatpush1.msra.mxu0 0.0
    %2431 = vmatprep.subr.mxu0 0.0
    %2432 = vmatpush1.msra.mxu0 0.0
    %2433 = vmatprep.subr.mxu0 0.0
    %2434 = vmatpush1.msra.mxu0 0.0
    %2435 = vmatprep.subr.mxu0 0.0
    %2436 = vmatpush1.msra.mxu0 0.0
    %2437 = vmatprep.subr.mxu0 0.0
    %2438 = vmatpush1.msra.mxu0 0.0
    %2439 = vmatprep.subr.mxu0 0.0
    %2440 = vmatpush1.msra.mxu0 0.0
    %2441 = vmatprep.subr.mxu0 0.0
    %2442 = vmatpush1.msra.mxu0 0.0
    %2443 = vmatprep.subr.mxu0 0.0
    %2444 = vmatpush1.msra.mxu0 %v2404
    %2445 = vmatprep.subr.mxu0 0.0
    %2446 = vmatpush1.msra.mxu0 %v2403
    %2447 = vmatprep.subr.mxu0 0.0
    %2448 = vmatpush1.msra.mxu0 %v2402
    %2449 = vmatprep.subr.mxu0 0.0
    %2450 = vmatpush1.msra.mxu0 %v2401
    %2451 = vmatprep.subr.mxu0 0.0
    %2452 = vmatpush2.msra.mxu0 0.0
    %2453 = vmatprep.subr.mxu0 0.0
    %2454 = vmatpush2.msra.mxu0 0.0
    %2455 = vmatprep.subr.mxu0 0.0
    %2456 = vmatpush2.msra.mxu0 0.0
    %2457 = vmatprep.subr.mxu0 0.0
    %2458 = vmatpush2.msra.mxu0 0.0
    %2459 = vmatprep.subr.mxu0 0.0
    %2460 = vmatpush2.msra.mxu0 0.0
    %2461 = vmatprep.subr.mxu0 0.0
    %2462 = vmatpush2.msra.mxu0 0.0
    %2463 = vmatprep.subr.mxu0 0.0
    %2464 = vmatpush2.msra.mxu0 0.0
    %2465 = vmatprep.subr.mxu0 0.0
    %2466 = vmatpush2.msra.mxu0 0.0
    %2467 = vmatprep.subr.mxu0 0.0
    %2468 = vmatpush2.msra.mxu0 0.0
    %2469 = vmatprep.subr.mxu0 0.0
    %2470 = vmatpush2.msra.mxu0 0.0
    %2471 = vmatprep.subr.mxu0 0.0
    %2472 = vmatpush2.msra.mxu0 0.0
    %2473 = vmatprep.subr.mxu0 0.0
    %2474 = vmatpush2.msra.mxu0 0.0
    %2475 = vmatprep.subr.mxu0 0.0
    %2476 = vmatpush2.msra.mxu0 0.0
    %2477 = vmatprep.subr.mxu0 0.0
    %2478 = vmatpush2.msra.mxu0 0.0
    %2479 = vmatprep.subr.mxu0 0.0
    %2480 = vmatpush2.msra.mxu0 0.0
    %2481 = vmatprep.subr.mxu0 0.0
    %2482 = vmatpush2.msra.mxu0 0.0
    %2483 = vmatprep.mubr.f32.mxu0 0.0
    %2484 = vmatmul.mubr.f32.gmra.mxu0 %v2414
    %v2485 = vpop.f32.mrf.mxu0
    %v2486 = vadd.f32 %v2411, %v2485
    %v2487 = vpop.f32.mrf.mxu0
    %2488 = vmatprep.mubr.f32.mxu0 0.0
    %2489 = vmatmul.mubr.f32.gmra.mxu0 %v2417
    %v2490 = vpop.f32.mrf.mxu0
    %v2491 = vadd.f32 %v2411, %v2490
    %v2492 = vpop.f32.mrf.mxu0
    %2493 = vdwg.mxu0
    %s2494 = scalar_lea.vmem [#allocation9], 32
    %v2495 = vld [vmem:[%s2494] sm:$0xff]
    %v2496 = vld [vmem:[%s2494 + $0x8] sm:$0xff]
    %v2497 = vld [vmem:[%s2494 + $0x10] sm:$0xff]
    %v2498 = vld [vmem:[%s2494 + $0x18] sm:$0xff]
    %s2499 = scalar_lea.vmem %s6, 1
    %v2500 = vld [vmem:[%s2499] sm:$0x1]
    %v2502 = vlaneseq
    %v2503 = vshrl.u32 %v2502, 7
    %v2504 = vsub.s32 0, %v2503
    %v2505 = vrot.slane %v2500, %v2504
    %2507 = vmatprep.subr.mxu0 0.0
    %2508 = vmatpush1.msra.mxu0 0.0
    %2509 = vmatprep.subr.mxu0 0.0
    %2510 = vmatpush1.msra.mxu0 0.0
    %2511 = vmatprep.subr.mxu0 0.0
    %2512 = vmatpush1.msra.mxu0 0.0
    %2513 = vmatprep.subr.mxu0 0.0
    %2514 = vmatpush1.msra.mxu0 0.0
    %2515 = vmatprep.subr.mxu0 0.0
    %2516 = vmatpush1.msra.mxu0 0.0
    %2517 = vmatprep.subr.mxu0 0.0
    %2518 = vmatpush1.msra.mxu0 0.0
    %2519 = vmatprep.subr.mxu0 0.0
    %2520 = vmatpush1.msra.mxu0 0.0
    %2521 = vmatprep.subr.mxu0 0.0
    %2522 = vmatpush1.msra.mxu0 0.0
    %2523 = vmatprep.subr.mxu0 0.0
    %2524 = vmatpush1.msra.mxu0 0.0
    %2525 = vmatprep.subr.mxu0 0.0
    %2526 = vmatpush1.msra.mxu0 0.0
    %2527 = vmatprep.subr.mxu0 0.0
    %2528 = vmatpush1.msra.mxu0 0.0
    %2529 = vmatprep.subr.mxu0 0.0
    %2530 = vmatpush1.msra.mxu0 0.0
    %2531 = vmatprep.subr.mxu0 0.0
    %2532 = vmatpush1.msra.mxu0 %v2498
    %2533 = vmatprep.subr.mxu0 0.0
    %2534 = vmatpush1.msra.mxu0 %v2497
    %2535 = vmatprep.subr.mxu0 0.0
    %2536 = vmatpush1.msra.mxu0 %v2496
    %2537 = vmatprep.subr.mxu0 0.0
    %2538 = vmatpush1.msra.mxu0 %v2495
    %2539 = vmatprep.subr.mxu0 0.0
    %2540 = vmatpush2.msra.mxu0 0.0
    %2541 = vmatprep.subr.mxu0 0.0
    %2542 = vmatpush2.msra.mxu0 0.0
    %2543 = vmatprep.subr.mxu0 0.0
    %2544 = vmatpush2.msra.mxu0 0.0
    %2545 = vmatprep.subr.mxu0 0.0
    %2546 = vmatpush2.msra.mxu0 0.0
    %2547 = vmatprep.subr.mxu0 0.0
    %2548 = vmatpush2.msra.mxu0 0.0
    %2549 = vmatprep.subr.mxu0 0.0
    %2550 = vmatpush2.msra.mxu0 0.0
    %2551 = vmatprep.subr.mxu0 0.0
    %2552 = vmatpush2.msra.mxu0 0.0
    %2553 = vmatprep.subr.mxu0 0.0
    %2554 = vmatpush2.msra.mxu0 0.0
    %2555 = vmatprep.subr.mxu0 0.0
    %2556 = vmatpush2.msra.mxu0 0.0
    %2557 = vmatprep.subr.mxu0 0.0
    %2558 = vmatpush2.msra.mxu0 0.0
    %2559 = vmatprep.subr.mxu0 0.0
    %2560 = vmatpush2.msra.mxu0 0.0
    %2561 = vmatprep.subr.mxu0 0.0
    %2562 = vmatpush2.msra.mxu0 0.0
    %2563 = vmatprep.subr.mxu0 0.0
    %2564 = vmatpush2.msra.mxu0 0.0
    %2565 = vmatprep.subr.mxu0 0.0
    %2566 = vmatpush2.msra.mxu0 0.0
    %2567 = vmatprep.subr.mxu0 0.0
    %2568 = vmatpush2.msra.mxu0 0.0
    %2569 = vmatprep.subr.mxu0 0.0
    %2570 = vmatpush2.msra.mxu0 0.0
    %2571 = vmatprep.mubr.f32.mxu0 0.0
    %2572 = vmatmul.mubr.f32.gmra.mxu0 %v258
    %v2573 = vpop.f32.mrf.mxu0
    %v2574 = vadd.f32 %v2505, %v2573
    %v2575 = vpop.f32.mrf.mxu0
    %2576 = vmatprep.mubr.f32.mxu0 0.0
    %2577 = vmatmul.mubr.f32.gmra.mxu0 %v261
    %v2578 = vpop.f32.mrf.mxu0
    %v2579 = vadd.f32 %v2505, %v2578
    %v2580 = vpop.f32.mrf.mxu0
    %2581 = vdwg.mxu0
    %s2582 = scalar_lea.vmem [#allocation11], 32
    %v2583 = vld [vmem:[%s2582] sm:$0xff]
    %v2584 = vld [vmem:[%s2582 + $0x8] sm:$0xff]
    %v2585 = vld [vmem:[%s2582 + $0x10] sm:$0xff]
    %v2586 = vld [vmem:[%s2582 + $0x18] sm:$0xff]
    %s2587 = scalar_lea.vmem %s8, 1
    %v2588 = vld [vmem:[%s2587] sm:$0x1]
    %v2590 = vlaneseq
    %v2591 = vshrl.u32 %v2590, 7
    %v2592 = vsub.s32 0, %v2591
    %v2593 = vrot.slane %v2588, %v2592
    %2595 = vmatprep.subr.mxu0 0.0
    %2596 = vmatpush1.msra.mxu0 0.0
    %2597 = vmatprep.subr.mxu0 0.0
    %2598 = vmatpush1.msra.mxu0 0.0
    %2599 = vmatprep.subr.mxu0 0.0
    %2600 = vmatpush1.msra.mxu0 0.0
    %2601 = vmatprep.subr.mxu0 0.0
    %2602 = vmatpush1.msra.mxu0 0.0
    %2603 = vmatprep.subr.mxu0 0.0
    %2604 = vmatpush1.msra.mxu0 0.0
    %2605 = vmatprep.subr.mxu0 0.0
    %2606 = vmatpush1.msra.mxu0 0.0
    %2607 = vmatprep.subr.mxu0 0.0
    %2608 = vmatpush1.msra.mxu0 0.0
    %2609 = vmatprep.subr.mxu0 0.0
    %2610 = vmatpush1.msra.mxu0 0.0
    %2611 = vmatprep.subr.mxu0 0.0
    %2612 = vmatpush1.msra.mxu0 0.0
    %2613 = vmatprep.subr.mxu0 0.0
    %2614 = vmatpush1.msra.mxu0 0.0
    %2615 = vmatprep.subr.mxu0 0.0
    %2616 = vmatpush1.msra.mxu0 0.0
    %2617 = vmatprep.subr.mxu0 0.0
    %2618 = vmatpush1.msra.mxu0 0.0
    %2619 = vmatprep.subr.mxu0 0.0
    %2620 = vmatpush1.msra.mxu0 %v2586
    %2621 = vmatprep.subr.mxu0 0.0
    %2622 = vmatpush1.msra.mxu0 %v2585
    %2623 = vmatprep.subr.mxu0 0.0
    %2624 = vmatpush1.msra.mxu0 %v2584
    %2625 = vmatprep.subr.mxu0 0.0
    %2626 = vmatpush1.msra.mxu0 %v2583
    %2627 = vmatprep.subr.mxu0 0.0
    %2628 = vmatpush2.msra.mxu0 0.0
    %2629 = vmatprep.subr.mxu0 0.0
    %2630 = vmatpush2.msra.mxu0 0.0
    %2631 = vmatprep.subr.mxu0 0.0
    %2632 = vmatpush2.msra.mxu0 0.0
    %2633 = vmatprep.subr.mxu0 0.0
    %2634 = vmatpush2.msra.mxu0 0.0
    %2635 = vmatprep.subr.mxu0 0.0
    %2636 = vmatpush2.msra.mxu0 0.0
    %2637 = vmatprep.subr.mxu0 0.0
    %2638 = vmatpush2.msra.mxu0 0.0
    %2639 = vmatprep.subr.mxu0 0.0
    %2640 = vmatpush2.msra.mxu0 0.0
    %2641 = vmatprep.subr.mxu0 0.0
    %2642 = vmatpush2.msra.mxu0 0.0
    %2643 = vmatprep.subr.mxu0 0.0
    %2644 = vmatpush2.msra.mxu0 0.0
    %2645 = vmatprep.subr.mxu0 0.0
    %2646 = vmatpush2.msra.mxu0 0.0
    %2647 = vmatprep.subr.mxu0 0.0
    %2648 = vmatpush2.msra.mxu0 0.0
    %2649 = vmatprep.subr.mxu0 0.0
    %2650 = vmatpush2.msra.mxu0 0.0
    %2651 = vmatprep.subr.mxu0 0.0
    %2652 = vmatpush2.msra.mxu0 0.0
    %2653 = vmatprep.subr.mxu0 0.0
    %2654 = vmatpush2.msra.mxu0 0.0
    %2655 = vmatprep.subr.mxu0 0.0
    %2656 = vmatpush2.msra.mxu0 0.0
    %2657 = vmatprep.subr.mxu0 0.0
    %2658 = vmatpush2.msra.mxu0 0.0
    %2659 = vmatprep.mubr.f32.mxu0 0.0
    %2660 = vmatmul.mubr.f32.gmra.mxu0 %v258
    %v2661 = vpop.f32.mrf.mxu0
    %v2662 = vadd.f32 %v2593, %v2661
    %v2663 = vpop.f32.mrf.mxu0
    %2664 = vmatprep.mubr.f32.mxu0 0.0
    %2665 = vmatmul.mubr.f32.gmra.mxu0 %v261
    %v2666 = vpop.f32.mrf.mxu0
    %v2667 = vadd.f32 %v2593, %v2666
    %v2668 = vpop.f32.mrf.mxu0
    %2669 = vdwg.mxu0
    %s2670 = scalar_lea.vmem [#allocation12], 32
    %v2671 = vld [vmem:[%s2670] sm:$0xff]
    %v2672 = vld [vmem:[%s2670 + $0x8] sm:$0xff]
    %v2673 = vld [vmem:[%s2670 + $0x10] sm:$0xff]
    %v2674 = vld [vmem:[%s2670 + $0x18] sm:$0xff]
    %v2676 = vsel %vm461, %v2486, 0
    %v2679 = vsel %vm461, %v2574, 0
    %2681 = vmatprep.subr.mxu0 0.0
    %2682 = vmatpush1.xpose.msra.mxu0 0.0
    %2683 = vmatprep.subr.mxu0 0.0
    %2684 = vmatpush1.xpose.msra.mxu0 0.0
    %2685 = vmatprep.subr.mxu0 0.0
    %2686 = vmatpush1.xpose.msra.mxu0 0.0
    %2687 = vmatprep.subr.mxu0 0.0
    %2688 = vmatpush1.xpose.msra.mxu0 0.0
    %2689 = vmatprep.subr.mxu0 0.0
    %2690 = vmatpush1.xpose.msra.mxu0 0.0
    %2691 = vmatprep.subr.mxu0 0.0
    %2692 = vmatpush1.xpose.msra.mxu0 0.0
    %2693 = vmatprep.subr.mxu0 0.0
    %2694 = vmatpush1.xpose.msra.mxu0 0.0
    %2695 = vmatprep.subr.mxu0 0.0
    %2696 = vmatpush1.xpose.msra.mxu0 0.0
    %2697 = vmatprep.subr.mxu0 0.0
    %2698 = vmatpush1.xpose.msra.mxu0 0.0
    %2699 = vmatprep.subr.mxu0 0.0
    %2700 = vmatpush1.xpose.msra.mxu0 0.0
    %2701 = vmatprep.subr.mxu0 0.0
    %2702 = vmatpush1.xpose.msra.mxu0 0.0
    %2703 = vmatprep.subr.mxu0 0.0
    %2704 = vmatpush1.xpose.msra.mxu0 0.0
    %2705 = vmatprep.subr.mxu0 0.0
    %2706 = vmatpush1.xpose.msra.mxu0 0.0
    %2707 = vmatprep.subr.mxu0 0.0
    %2708 = vmatpush1.xpose.msra.mxu0 0.0
    %2709 = vmatprep.subr.mxu0 0.0
    %2710 = vmatpush1.xpose.msra.mxu0 0.0
    %2711 = vmatprep.subr.mxu0 0.0
    %2712 = vmatpush1.xpose.msra.mxu0 %v2679
    %2713 = vmatprep.subr.mxu0 0.0
    %2714 = vmatpush2.xpose.msra.mxu0 0.0
    %2715 = vmatprep.subr.mxu0 0.0
    %2716 = vmatpush2.xpose.msra.mxu0 0.0
    %2717 = vmatprep.subr.mxu0 0.0
    %2718 = vmatpush2.xpose.msra.mxu0 0.0
    %2719 = vmatprep.subr.mxu0 0.0
    %2720 = vmatpush2.xpose.msra.mxu0 0.0
    %2721 = vmatprep.subr.mxu0 0.0
    %2722 = vmatpush2.xpose.msra.mxu0 0.0
    %2723 = vmatprep.subr.mxu0 0.0
    %2724 = vmatpush2.xpose.msra.mxu0 0.0
    %2725 = vmatprep.subr.mxu0 0.0
    %2726 = vmatpush2.xpose.msra.mxu0 0.0
    %2727 = vmatprep.subr.mxu0 0.0
    %2728 = vmatpush2.xpose.msra.mxu0 0.0
    %2729 = vmatprep.subr.mxu0 0.0
    %2730 = vmatpush2.xpose.msra.mxu0 0.0
    %2731 = vmatprep.subr.mxu0 0.0
    %2732 = vmatpush2.xpose.msra.mxu0 0.0
    %2733 = vmatprep.subr.mxu0 0.0
    %2734 = vmatpush2.xpose.msra.mxu0 0.0
    %2735 = vmatprep.subr.mxu0 0.0
    %2736 = vmatpush2.xpose.msra.mxu0 0.0
    %2737 = vmatprep.subr.mxu0 0.0
    %2738 = vmatpush2.xpose.msra.mxu0 0.0
    %2739 = vmatprep.subr.mxu0 0.0
    %2740 = vmatpush2.xpose.msra.mxu0 0.0
    %2741 = vmatprep.subr.mxu0 0.0
    %2742 = vmatpush2.xpose.msra.mxu0 0.0
    %2743 = vmatprep.subr.mxu0 0.0
    %2744 = vmatpush2.xpose.msra.mxu0 0.0
    %2745 = vmatprep.mubr.f32.mxu0 0.0
    %2746 = vmatmul.mubr.f32.gmra.mxu0 %v2676
    %v2747 = vpop.f32.mrf.mxu0
    %v2748 = vadd.f32 %v454, %v2747
    %v2749 = vpop.f32.mrf.mxu0
    %2750 = vdwg.mxu0
    %v2752 = vsel %vm461, %v2491, 0
    %v2755 = vsel %vm461, %v2579, 0
    %2757 = vmatprep.subr.mxu0 0.0
    %2758 = vmatpush1.xpose.msra.mxu0 0.0
    %2759 = vmatprep.subr.mxu0 0.0
    %2760 = vmatpush1.xpose.msra.mxu0 0.0
    %2761 = vmatprep.subr.mxu0 0.0
    %2762 = vmatpush1.xpose.msra.mxu0 0.0
    %2763 = vmatprep.subr.mxu0 0.0
    %2764 = vmatpush1.xpose.msra.mxu0 0.0
    %2765 = vmatprep.subr.mxu0 0.0
    %2766 = vmatpush1.xpose.msra.mxu0 0.0
    %2767 = vmatprep.subr.mxu0 0.0
    %2768 = vmatpush1.xpose.msra.mxu0 0.0
    %2769 = vmatprep.subr.mxu0 0.0
    %2770 = vmatpush1.xpose.msra.mxu0 0.0
    %2771 = vmatprep.subr.mxu0 0.0
    %2772 = vmatpush1.xpose.msra.mxu0 0.0
    %2773 = vmatprep.subr.mxu0 0.0
    %2774 = vmatpush1.xpose.msra.mxu0 0.0
    %2775 = vmatprep.subr.mxu0 0.0
    %2776 = vmatpush1.xpose.msra.mxu0 0.0
    %2777 = vmatprep.subr.mxu0 0.0
    %2778 = vmatpush1.xpose.msra.mxu0 0.0
    %2779 = vmatprep.subr.mxu0 0.0
    %2780 = vmatpush1.xpose.msra.mxu0 0.0
    %2781 = vmatprep.subr.mxu0 0.0
    %2782 = vmatpush1.xpose.msra.mxu0 0.0
    %2783 = vmatprep.subr.mxu0 0.0
    %2784 = vmatpush1.xpose.msra.mxu0 0.0
    %2785 = vmatprep.subr.mxu0 0.0
    %2786 = vmatpush1.xpose.msra.mxu0 0.0
    %2787 = vmatprep.subr.mxu0 0.0
    %2788 = vmatpush1.xpose.msra.mxu0 %v2755
    %2789 = vmatprep.subr.mxu0 0.0
    %2790 = vmatpush2.xpose.msra.mxu0 0.0
    %2791 = vmatprep.subr.mxu0 0.0
    %2792 = vmatpush2.xpose.msra.mxu0 0.0
    %2793 = vmatprep.subr.mxu0 0.0
    %2794 = vmatpush2.xpose.msra.mxu0 0.0
    %2795 = vmatprep.subr.mxu0 0.0
    %2796 = vmatpush2.xpose.msra.mxu0 0.0
    %2797 = vmatprep.subr.mxu0 0.0
    %2798 = vmatpush2.xpose.msra.mxu0 0.0
    %2799 = vmatprep.subr.mxu0 0.0
    %2800 = vmatpush2.xpose.msra.mxu0 0.0
    %2801 = vmatprep.subr.mxu0 0.0
    %2802 = vmatpush2.xpose.msra.mxu0 0.0
    %2803 = vmatprep.subr.mxu0 0.0
    %2804 = vmatpush2.xpose.msra.mxu0 0.0
    %2805 = vmatprep.subr.mxu0 0.0
    %2806 = vmatpush2.xpose.msra.mxu0 0.0
    %2807 = vmatprep.subr.mxu0 0.0
    %2808 = vmatpush2.xpose.msra.mxu0 0.0
    %2809 = vmatprep.subr.mxu0 0.0
    %2810 = vmatpush2.xpose.msra.mxu0 0.0
    %2811 = vmatprep.subr.mxu0 0.0
    %2812 = vmatpush2.xpose.msra.mxu0 0.0
    %2813 = vmatprep.subr.mxu0 0.0
    %2814 = vmatpush2.xpose.msra.mxu0 0.0
    %2815 = vmatprep.subr.mxu0 0.0
    %2816 = vmatpush2.xpose.msra.mxu0 0.0
    %2817 = vmatprep.subr.mxu0 0.0
    %2818 = vmatpush2.xpose.msra.mxu0 0.0
    %2819 = vmatprep.subr.mxu0 0.0
    %2820 = vmatpush2.xpose.msra.mxu0 0.0
    %2821 = vmatprep.mubr.f32.mxu0 0.0
    %2822 = vmatmul.mubr.f32.gmra.mxu0 %v2752
    %v2823 = vpop.f32.mrf.mxu0
    %v2824 = vadd.f32 %v458, %v2823
    %v2825 = vpop.f32.mrf.mxu0
    %2826 = vdwg.mxu0
    %v2827 = vsel %vm461, %v2748, -inf
    %2828 = vmax.xlane.f32.xlu0 %v2827
    %v2829 = vpop.xlane.xlu0 %2828
    %v2830 = vsel %vm461, %v2824, -inf
    %2831 = vmax.xlane.f32.xlu0 %v2830
    %v2832 = vpop.xlane.xlu0 %2831
    %v2833 = vsub.f32 %v2748, %v2829
    %v2834 = vsub.f32 %v2824, %v2832
    %v2835 = vmul.f32 %v2833, 1.442695
    %v2836 = vpow.pop %v2835
    %v2837 = vmul.f32 %v2834, 1.442695
    %v2838 = vpow.pop %v2837
    %v2839 = vsel %vm461, %v2836, 0.0
    %2840 = vadd.xlane.f32.xlu0 %v2839
    %v2841 = vpop.xlane.xlu0 %2840
    %v2842 = vsel %vm461, %v2838, 0.0
    %2843 = vadd.xlane.f32.xlu0 %v2842
    %v2844 = vpop.xlane.xlu0 %2843
    %v2845 = vrcp.pop %v2841
    %v2846 = vmul.f32 %v2836, %v2845
    %v2847 = vrcp.pop %v2844
    %v2848 = vmul.f32 %v2838, %v2847
    %v2850 = vsel %vm461, %v2846, 0
    %2852 = vmatprep.subr.mxu0 0.0
    %2853 = vmatpush1.msra.mxu0 0.0
    %2854 = vmatprep.subr.mxu0 0.0
    %2855 = vmatpush1.msra.mxu0 0.0
    %2856 = vmatprep.subr.mxu0 0.0
    %2857 = vmatpush1.msra.mxu0 0.0
    %2858 = vmatprep.subr.mxu0 0.0
    %2859 = vmatpush1.msra.mxu0 0.0
    %2860 = vmatprep.subr.mxu0 0.0
    %2861 = vmatpush1.msra.mxu0 0.0
    %2862 = vmatprep.subr.mxu0 0.0
    %2863 = vmatpush1.msra.mxu0 0.0
    %2864 = vmatprep.subr.mxu0 0.0
    %2865 = vmatpush1.msra.mxu0 0.0
    %2866 = vmatprep.subr.mxu0 0.0
    %2867 = vmatpush1.msra.mxu0 0.0
    %2868 = vmatprep.subr.mxu0 0.0
    %2869 = vmatpush1.msra.mxu0 0.0
    %2870 = vmatprep.subr.mxu0 0.0
    %2871 = vmatpush1.msra.mxu0 0.0
    %2872 = vmatprep.subr.mxu0 0.0
    %2873 = vmatpush1.msra.mxu0 0.0
    %2874 = vmatprep.subr.mxu0 0.0
    %2875 = vmatpush1.msra.mxu0 0.0
    %2876 = vmatprep.subr.mxu0 0.0
    %2877 = vmatpush1.msra.mxu0 0.0
    %2878 = vmatprep.subr.mxu0 0.0
    %2879 = vmatpush1.msra.mxu0 0.0
    %2880 = vmatprep.subr.mxu0 0.0
    %2881 = vmatpush1.msra.mxu0 0.0
    %2882 = vmatprep.subr.mxu0 0.0
    %2883 = vmatpush1.msra.mxu0 %v2662
    %2884 = vmatprep.subr.mxu0 0.0
    %2885 = vmatpush2.msra.mxu0 0.0
    %2886 = vmatprep.subr.mxu0 0.0
    %2887 = vmatpush2.msra.mxu0 0.0
    %2888 = vmatprep.subr.mxu0 0.0
    %2889 = vmatpush2.msra.mxu0 0.0
    %2890 = vmatprep.subr.mxu0 0.0
    %2891 = vmatpush2.msra.mxu0 0.0
    %2892 = vmatprep.subr.mxu0 0.0
    %2893 = vmatpush2.msra.mxu0 0.0
    %2894 = vmatprep.subr.mxu0 0.0
    %2895 = vmatpush2.msra.mxu0 0.0
    %2896 = vmatprep.subr.mxu0 0.0
    %2897 = vmatpush2.msra.mxu0 0.0
    %2898 = vmatprep.subr.mxu0 0.0
    %2899 = vmatpush2.msra.mxu0 0.0
    %2900 = vmatprep.subr.mxu0 0.0
    %2901 = vmatpush2.msra.mxu0 0.0
    %2902 = vmatprep.subr.mxu0 0.0
    %2903 = vmatpush2.msra.mxu0 0.0
    %2904 = vmatprep.subr.mxu0 0.0
    %2905 = vmatpush2.msra.mxu0 0.0
    %2906 = vmatprep.subr.mxu0 0.0
    %2907 = vmatpush2.msra.mxu0 0.0
    %2908 = vmatprep.subr.mxu0 0.0
    %2909 = vmatpush2.msra.mxu0 0.0
    %2910 = vmatprep.subr.mxu0 0.0
    %2911 = vmatpush2.msra.mxu0 0.0
    %2912 = vmatprep.subr.mxu0 0.0
    %2913 = vmatpush2.msra.mxu0 0.0
    %2914 = vmatprep.subr.mxu0 0.0
    %2915 = vmatpush2.msra.mxu0 0.0
    %2916 = vmatprep.mubr.f32.mxu0 0.0
    %2917 = vmatmul.mubr.f32.gmra.mxu0 %v2850
    %v2918 = vpop.f32.mrf.mxu0
    %v2919 = vadd.f32 0.0, %v2918
    %v2920 = vpop.f32.mrf.mxu0
    %2921 = vdwg.mxu0
    %v2923 = vsel %vm461, %v2848, 0
    %2925 = vmatprep.subr.mxu0 0.0
    %2926 = vmatpush1.msra.mxu0 0.0
    %2927 = vmatprep.subr.mxu0 0.0
    %2928 = vmatpush1.msra.mxu0 0.0
    %2929 = vmatprep.subr.mxu0 0.0
    %2930 = vmatpush1.msra.mxu0 0.0
    %2931 = vmatprep.subr.mxu0 0.0
    %2932 = vmatpush1.msra.mxu0 0.0
    %2933 = vmatprep.subr.mxu0 0.0
    %2934 = vmatpush1.msra.mxu0 0.0
    %2935 = vmatprep.subr.mxu0 0.0
    %2936 = vmatpush1.msra.mxu0 0.0
    %2937 = vmatprep.subr.mxu0 0.0
    %2938 = vmatpush1.msra.mxu0 0.0
    %2939 = vmatprep.subr.mxu0 0.0
    %2940 = vmatpush1.msra.mxu0 0.0
    %2941 = vmatprep.subr.mxu0 0.0
    %2942 = vmatpush1.msra.mxu0 0.0
    %2943 = vmatprep.subr.mxu0 0.0
    %2944 = vmatpush1.msra.mxu0 0.0
    %2945 = vmatprep.subr.mxu0 0.0
    %2946 = vmatpush1.msra.mxu0 0.0
    %2947 = vmatprep.subr.mxu0 0.0
    %2948 = vmatpush1.msra.mxu0 0.0
    %2949 = vmatprep.subr.mxu0 0.0
    %2950 = vmatpush1.msra.mxu0 0.0
    %2951 = vmatprep.subr.mxu0 0.0
    %2952 = vmatpush1.msra.mxu0 0.0
    %2953 = vmatprep.subr.mxu0 0.0
    %2954 = vmatpush1.msra.mxu0 0.0
    %2955 = vmatprep.subr.mxu0 0.0
    %2956 = vmatpush1.msra.mxu0 %v2667
    %2957 = vmatprep.subr.mxu0 0.0
    %2958 = vmatpush2.msra.mxu0 0.0
    %2959 = vmatprep.subr.mxu0 0.0
    %2960 = vmatpush2.msra.mxu0 0.0
    %2961 = vmatprep.subr.mxu0 0.0
    %2962 = vmatpush2.msra.mxu0 0.0
    %2963 = vmatprep.subr.mxu0 0.0
    %2964 = vmatpush2.msra.mxu0 0.0
    %2965 = vmatprep.subr.mxu0 0.0
    %2966 = vmatpush2.msra.mxu0 0.0
    %2967 = vmatprep.subr.mxu0 0.0
    %2968 = vmatpush2.msra.mxu0 0.0
    %2969 = vmatprep.subr.mxu0 0.0
    %2970 = vmatpush2.msra.mxu0 0.0
    %2971 = vmatprep.subr.mxu0 0.0
    %2972 = vmatpush2.msra.mxu0 0.0
    %2973 = vmatprep.subr.mxu0 0.0
    %2974 = vmatpush2.msra.mxu0 0.0
    %2975 = vmatprep.subr.mxu0 0.0
    %2976 = vmatpush2.msra.mxu0 0.0
    %2977 = vmatprep.subr.mxu0 0.0
    %2978 = vmatpush2.msra.mxu0 0.0
    %2979 = vmatprep.subr.mxu0 0.0
    %2980 = vmatpush2.msra.mxu0 0.0
    %2981 = vmatprep.subr.mxu0 0.0
    %2982 = vmatpush2.msra.mxu0 0.0
    %2983 = vmatprep.subr.mxu0 0.0
    %2984 = vmatpush2.msra.mxu0 0.0
    %2985 = vmatprep.subr.mxu0 0.0
    %2986 = vmatpush2.msra.mxu0 0.0
    %2987 = vmatprep.subr.mxu0 0.0
    %2988 = vmatpush2.msra.mxu0 0.0
    %2989 = vmatprep.mubr.f32.mxu0 0.0
    %2990 = vmatmul.mubr.f32.gmra.mxu0 %v2923
    %v2991 = vpop.f32.mrf.mxu0
    %v2992 = vadd.f32 0.0, %v2991
    %v2993 = vpop.f32.mrf.mxu0
    %2994 = vdwg.mxu0
    %2995 = vrot.lane.b32.xlu0 %v2486, 120
    %v2996 = vpop.permute.xlu0 %2995
    %2997 = vrot.lane.b32.xlu0 %v2574, 120
    %v2998 = vpop.permute.xlu0 %2997
    %v2999 = vsel %vm461, %v2996, 0
    %v3001 = vsel %vm461, %v2998, 0
    %3003 = vmatprep.subr.mxu0 0.0
    %3004 = vmatpush1.xpose.msra.mxu0 0.0
    %3005 = vmatprep.subr.mxu0 0.0
    %3006 = vmatpush1.xpose.msra.mxu0 0.0
    %3007 = vmatprep.subr.mxu0 0.0
    %3008 = vmatpush1.xpose.msra.mxu0 0.0
    %3009 = vmatprep.subr.mxu0 0.0
    %3010 = vmatpush1.xpose.msra.mxu0 0.0
    %3011 = vmatprep.subr.mxu0 0.0
    %3012 = vmatpush1.xpose.msra.mxu0 0.0
    %3013 = vmatprep.subr.mxu0 0.0
    %3014 = vmatpush1.xpose.msra.mxu0 0.0
    %3015 = vmatprep.subr.mxu0 0.0
    %3016 = vmatpush1.xpose.msra.mxu0 0.0
    %3017 = vmatprep.subr.mxu0 0.0
    %3018 = vmatpush1.xpose.msra.mxu0 0.0
    %3019 = vmatprep.subr.mxu0 0.0
    %3020 = vmatpush1.xpose.msra.mxu0 0.0
    %3021 = vmatprep.subr.mxu0 0.0
    %3022 = vmatpush1.xpose.msra.mxu0 0.0
    %3023 = vmatprep.subr.mxu0 0.0
    %3024 = vmatpush1.xpose.msra.mxu0 0.0
    %3025 = vmatprep.subr.mxu0 0.0
    %3026 = vmatpush1.xpose.msra.mxu0 0.0
    %3027 = vmatprep.subr.mxu0 0.0
    %3028 = vmatpush1.xpose.msra.mxu0 0.0
    %3029 = vmatprep.subr.mxu0 0.0
    %3030 = vmatpush1.xpose.msra.mxu0 0.0
    %3031 = vmatprep.subr.mxu0 0.0
    %3032 = vmatpush1.xpose.msra.mxu0 0.0
    %3033 = vmatprep.subr.mxu0 0.0
    %3034 = vmatpush1.xpose.msra.mxu0 %v3001
    %3035 = vmatprep.subr.mxu0 0.0
    %3036 = vmatpush2.xpose.msra.mxu0 0.0
    %3037 = vmatprep.subr.mxu0 0.0
    %3038 = vmatpush2.xpose.msra.mxu0 0.0
    %3039 = vmatprep.subr.mxu0 0.0
    %3040 = vmatpush2.xpose.msra.mxu0 0.0
    %3041 = vmatprep.subr.mxu0 0.0
    %3042 = vmatpush2.xpose.msra.mxu0 0.0
    %3043 = vmatprep.subr.mxu0 0.0
    %3044 = vmatpush2.xpose.msra.mxu0 0.0
    %3045 = vmatprep.subr.mxu0 0.0
    %3046 = vmatpush2.xpose.msra.mxu0 0.0
    %3047 = vmatprep.subr.mxu0 0.0
    %3048 = vmatpush2.xpose.msra.mxu0 0.0
    %3049 = vmatprep.subr.mxu0 0.0
    %3050 = vmatpush2.xpose.msra.mxu0 0.0
    %3051 = vmatprep.subr.mxu0 0.0
    %3052 = vmatpush2.xpose.msra.mxu0 0.0
    %3053 = vmatprep.subr.mxu0 0.0
    %3054 = vmatpush2.xpose.msra.mxu0 0.0
    %3055 = vmatprep.subr.mxu0 0.0
    %3056 = vmatpush2.xpose.msra.mxu0 0.0
    %3057 = vmatprep.subr.mxu0 0.0
    %3058 = vmatpush2.xpose.msra.mxu0 0.0
    %3059 = vmatprep.subr.mxu0 0.0
    %3060 = vmatpush2.xpose.msra.mxu0 0.0
    %3061 = vmatprep.subr.mxu0 0.0
    %3062 = vmatpush2.xpose.msra.mxu0 0.0
    %3063 = vmatprep.subr.mxu0 0.0
    %3064 = vmatpush2.xpose.msra.mxu0 0.0
    %3065 = vmatprep.subr.mxu0 0.0
    %3066 = vmatpush2.xpose.msra.mxu0 0.0
    %3067 = vmatprep.mubr.f32.mxu0 0.0
    %3068 = vmatmul.mubr.f32.gmra.mxu0 %v2999
    %v3069 = vpop.f32.mrf.mxu0
    %v3070 = vadd.f32 %v454, %v3069
    %v3071 = vpop.f32.mrf.mxu0
    %3072 = vdwg.mxu0
    %3073 = vrot.lane.b32.xlu0 %v2491, 120
    %v3074 = vpop.permute.xlu0 %3073
    %3075 = vrot.lane.b32.xlu0 %v2579, 120
    %v3076 = vpop.permute.xlu0 %3075
    %v3077 = vsel %vm461, %v3074, 0
    %v3079 = vsel %vm461, %v3076, 0
    %3081 = vmatprep.subr.mxu0 0.0
    %3082 = vmatpush1.xpose.msra.mxu0 0.0
    %3083 = vmatprep.subr.mxu0 0.0
    %3084 = vmatpush1.xpose.msra.mxu0 0.0
    %3085 = vmatprep.subr.mxu0 0.0
    %3086 = vmatpush1.xpose.msra.mxu0 0.0
    %3087 = vmatprep.subr.mxu0 0.0
    %3088 = vmatpush1.xpose.msra.mxu0 0.0
    %3089 = vmatprep.subr.mxu0 0.0
    %3090 = vmatpush1.xpose.msra.mxu0 0.0
    %3091 = vmatprep.subr.mxu0 0.0
    %3092 = vmatpush1.xpose.msra.mxu0 0.0
    %3093 = vmatprep.subr.mxu0 0.0
    %3094 = vmatpush1.xpose.msra.mxu0 0.0
    %3095 = vmatprep.subr.mxu0 0.0
    %3096 = vmatpush1.xpose.msra.mxu0 0.0
    %3097 = vmatprep.subr.mxu0 0.0
    %3098 = vmatpush1.xpose.msra.mxu0 0.0
    %3099 = vmatprep.subr.mxu0 0.0
    %3100 = vmatpush1.xpose.msra.mxu0 0.0
    %3101 = vmatprep.subr.mxu0 0.0
    %3102 = vmatpush1.xpose.msra.mxu0 0.0
    %3103 = vmatprep.subr.mxu0 0.0
    %3104 = vmatpush1.xpose.msra.mxu0 0.0
    %3105 = vmatprep.subr.mxu0 0.0
    %3106 = vmatpush1.xpose.msra.mxu0 0.0
    %3107 = vmatprep.subr.mxu0 0.0
    %3108 = vmatpush1.xpose.msra.mxu0 0.0
    %3109 = vmatprep.subr.mxu0 0.0
    %3110 = vmatpush1.xpose.msra.mxu0 0.0
    %3111 = vmatprep.subr.mxu0 0.0
    %3112 = vmatpush1.xpose.msra.mxu0 %v3079
    %3113 = vmatprep.subr.mxu0 0.0
    %3114 = vmatpush2.xpose.msra.mxu0 0.0
    %3115 = vmatprep.subr.mxu0 0.0
    %3116 = vmatpush2.xpose.msra.mxu0 0.0
    %3117 = vmatprep.subr.mxu0 0.0
    %3118 = vmatpush2.xpose.msra.mxu0 0.0
    %3119 = vmatprep.subr.mxu0 0.0
    %3120 = vmatpush2.xpose.msra.mxu0 0.0
    %3121 = vmatprep.subr.mxu0 0.0
    %3122 = vmatpush2.xpose.msra.mxu0 0.0
    %3123 = vmatprep.subr.mxu0 0.0
    %3124 = vmatpush2.xpose.msra.mxu0 0.0
    %3125 = vmatprep.subr.mxu0 0.0
    %3126 = vmatpush2.xpose.msra.mxu0 0.0
    %3127 = vmatprep.subr.mxu0 0.0
    %3128 = vmatpush2.xpose.msra.mxu0 0.0
    %3129 = vmatprep.subr.mxu0 0.0
    %3130 = vmatpush2.xpose.msra.mxu0 0.0
    %3131 = vmatprep.subr.mxu0 0.0
    %3132 = vmatpush2.xpose.msra.mxu0 0.0
    %3133 = vmatprep.subr.mxu0 0.0
    %3134 = vmatpush2.xpose.msra.mxu0 0.0
    %3135 = vmatprep.subr.mxu0 0.0
    %3136 = vmatpush2.xpose.msra.mxu0 0.0
    %3137 = vmatprep.subr.mxu0 0.0
    %3138 = vmatpush2.xpose.msra.mxu0 0.0
    %3139 = vmatprep.subr.mxu0 0.0
    %3140 = vmatpush2.xpose.msra.mxu0 0.0
    %3141 = vmatprep.subr.mxu0 0.0
    %3142 = vmatpush2.xpose.msra.mxu0 0.0
    %3143 = vmatprep.subr.mxu0 0.0
    %3144 = vmatpush2.xpose.msra.mxu0 0.0
    %3145 = vmatprep.mubr.f32.mxu0 0.0
    %3146 = vmatmul.mubr.f32.gmra.mxu0 %v3077
    %v3147 = vpop.f32.mrf.mxu0
    %v3148 = vadd.f32 %v458, %v3147
    %v3149 = vpop.f32.mrf.mxu0
    %3150 = vdwg.mxu0
    %v3151 = vsel %vm461, %v3070, -inf
    %3152 = vmax.xlane.f32.xlu0 %v3151
    %v3153 = vpop.xlane.xlu0 %3152
    %v3154 = vsel %vm461, %v3148, -inf
    %3155 = vmax.xlane.f32.xlu0 %v3154
    %v3156 = vpop.xlane.xlu0 %3155
    %v3157 = vsub.f32 %v3070, %v3153
    %v3158 = vsub.f32 %v3148, %v3156
    %v3159 = vmul.f32 %v3157, 1.442695
    %v3160 = vpow.pop %v3159
    %v3161 = vmul.f32 %v3158, 1.442695
    %v3162 = vpow.pop %v3161
    %v3163 = vsel %vm461, %v3160, 0.0
    %3164 = vadd.xlane.f32.xlu0 %v3163
    %v3165 = vpop.xlane.xlu0 %3164
    %v3166 = vsel %vm461, %v3162, 0.0
    %3167 = vadd.xlane.f32.xlu0 %v3166
    %v3168 = vpop.xlane.xlu0 %3167
    %v3169 = vrcp.pop %v3165
    %v3170 = vmul.f32 %v3160, %v3169
    %v3171 = vrcp.pop %v3168
    %v3172 = vmul.f32 %v3162, %v3171
    %3174 = vrot.lane.b32.xlu0 %v2662, 120
    %v3175 = vpop.permute.xlu0 %3174
    %v3178 = vsel %vm461, %v3170, 0
    %3180 = vmatprep.subr.mxu0 0.0
    %3181 = vmatpush1.msra.mxu0 0.0
    %3182 = vmatprep.subr.mxu0 0.0
    %3183 = vmatpush1.msra.mxu0 0.0
    %3184 = vmatprep.subr.mxu0 0.0
    %3185 = vmatpush1.msra.mxu0 0.0
    %3186 = vmatprep.subr.mxu0 0.0
    %3187 = vmatpush1.msra.mxu0 0.0
    %3188 = vmatprep.subr.mxu0 0.0
    %3189 = vmatpush1.msra.mxu0 0.0
    %3190 = vmatprep.subr.mxu0 0.0
    %3191 = vmatpush1.msra.mxu0 0.0
    %3192 = vmatprep.subr.mxu0 0.0
    %3193 = vmatpush1.msra.mxu0 0.0
    %3194 = vmatprep.subr.mxu0 0.0
    %3195 = vmatpush1.msra.mxu0 0.0
    %3196 = vmatprep.subr.mxu0 0.0
    %3197 = vmatpush1.msra.mxu0 0.0
    %3198 = vmatprep.subr.mxu0 0.0
    %3199 = vmatpush1.msra.mxu0 0.0
    %3200 = vmatprep.subr.mxu0 0.0
    %3201 = vmatpush1.msra.mxu0 0.0
    %3202 = vmatprep.subr.mxu0 0.0
    %3203 = vmatpush1.msra.mxu0 0.0
    %3204 = vmatprep.subr.mxu0 0.0
    %3205 = vmatpush1.msra.mxu0 0.0
    %3206 = vmatprep.subr.mxu0 0.0
    %3207 = vmatpush1.msra.mxu0 0.0
    %3208 = vmatprep.subr.mxu0 0.0
    %3209 = vmatpush1.msra.mxu0 0.0
    %3210 = vmatprep.subr.mxu0 0.0
    %3211 = vmatpush1.msra.mxu0 %v3175
    %3212 = vmatprep.subr.mxu0 0.0
    %3213 = vmatpush2.msra.mxu0 0.0
    %3214 = vmatprep.subr.mxu0 0.0
    %3215 = vmatpush2.msra.mxu0 0.0
    %3216 = vmatprep.subr.mxu0 0.0
    %3217 = vmatpush2.msra.mxu0 0.0
    %3218 = vmatprep.subr.mxu0 0.0
    %3219 = vmatpush2.msra.mxu0 0.0
    %3220 = vmatprep.subr.mxu0 0.0
    %3221 = vmatpush2.msra.mxu0 0.0
    %3222 = vmatprep.subr.mxu0 0.0
    %3223 = vmatpush2.msra.mxu0 0.0
    %3224 = vmatprep.subr.mxu0 0.0
    %3225 = vmatpush2.msra.mxu0 0.0
    %3226 = vmatprep.subr.mxu0 0.0
    %3227 = vmatpush2.msra.mxu0 0.0
    %3228 = vmatprep.subr.mxu0 0.0
    %3229 = vmatpush2.msra.mxu0 0.0
    %3230 = vmatprep.subr.mxu0 0.0
    %3231 = vmatpush2.msra.mxu0 0.0
    %3232 = vmatprep.subr.mxu0 0.0
    %3233 = vmatpush2.msra.mxu0 0.0
    %3234 = vmatprep.subr.mxu0 0.0
    %3235 = vmatpush2.msra.mxu0 0.0
    %3236 = vmatprep.subr.mxu0 0.0
    %3237 = vmatpush2.msra.mxu0 0.0
    %3238 = vmatprep.subr.mxu0 0.0
    %3239 = vmatpush2.msra.mxu0 0.0
    %3240 = vmatprep.subr.mxu0 0.0
    %3241 = vmatpush2.msra.mxu0 0.0
    %3242 = vmatprep.subr.mxu0 0.0
    %3243 = vmatpush2.msra.mxu0 0.0
    %3244 = vmatprep.mubr.f32.mxu0 0.0
    %3245 = vmatmul.mubr.f32.gmra.mxu0 %v3178
    %v3246 = vpop.f32.mrf.mxu0
    %v3247 = vadd.f32 0.0, %v3246
    %v3248 = vpop.f32.mrf.mxu0
    %3249 = vdwg.mxu0
    %3251 = vrot.lane.b32.xlu0 %v2667, 120
    %v3252 = vpop.permute.xlu0 %3251
    %v3255 = vsel %vm461, %v3172, 0
    %3257 = vmatprep.subr.mxu0 0.0
    %3258 = vmatpush1.msra.mxu0 0.0
    %3259 = vmatprep.subr.mxu0 0.0
    %3260 = vmatpush1.msra.mxu0 0.0
    %3261 = vmatprep.subr.mxu0 0.0
    %3262 = vmatpush1.msra.mxu0 0.0
    %3263 = vmatprep.subr.mxu0 0.0
    %3264 = vmatpush1.msra.mxu0 0.0
    %3265 = vmatprep.subr.mxu0 0.0
    %3266 = vmatpush1.msra.mxu0 0.0
    %3267 = vmatprep.subr.mxu0 0.0
    %3268 = vmatpush1.msra.mxu0 0.0
    %3269 = vmatprep.subr.mxu0 0.0
    %3270 = vmatpush1.msra.mxu0 0.0
    %3271 = vmatprep.subr.mxu0 0.0
    %3272 = vmatpush1.msra.mxu0 0.0
    %3273 = vmatprep.subr.mxu0 0.0
    %3274 = vmatpush1.msra.mxu0 0.0
    %3275 = vmatprep.subr.mxu0 0.0
    %3276 = vmatpush1.msra.mxu0 0.0
    %3277 = vmatprep.subr.mxu0 0.0
    %3278 = vmatpush1.msra.mxu0 0.0
    %3279 = vmatprep.subr.mxu0 0.0
    %3280 = vmatpush1.msra.mxu0 0.0
    %3281 = vmatprep.subr.mxu0 0.0
    %3282 = vmatpush1.msra.mxu0 0.0
    %3283 = vmatprep.subr.mxu0 0.0
    %3284 = vmatpush1.msra.mxu0 0.0
    %3285 = vmatprep.subr.mxu0 0.0
    %3286 = vmatpush1.msra.mxu0 0.0
    %3287 = vmatprep.subr.mxu0 0.0
    %3288 = vmatpush1.msra.mxu0 %v3252
    %3289 = vmatprep.subr.mxu0 0.0
    %3290 = vmatpush2.msra.mxu0 0.0
    %3291 = vmatprep.subr.mxu0 0.0
    %3292 = vmatpush2.msra.mxu0 0.0
    %3293 = vmatprep.subr.mxu0 0.0
    %3294 = vmatpush2.msra.mxu0 0.0
    %3295 = vmatprep.subr.mxu0 0.0
    %3296 = vmatpush2.msra.mxu0 0.0
    %3297 = vmatprep.subr.mxu0 0.0
    %3298 = vmatpush2.msra.mxu0 0.0
    %3299 = vmatprep.subr.mxu0 0.0
    %3300 = vmatpush2.msra.mxu0 0.0
    %3301 = vmatprep.subr.mxu0 0.0
    %3302 = vmatpush2.msra.mxu0 0.0
    %3303 = vmatprep.subr.mxu0 0.0
    %3304 = vmatpush2.msra.mxu0 0.0
    %3305 = vmatprep.subr.mxu0 0.0
    %3306 = vmatpush2.msra.mxu0 0.0
    %3307 = vmatprep.subr.mxu0 0.0
    %3308 = vmatpush2.msra.mxu0 0.0
    %3309 = vmatprep.subr.mxu0 0.0
    %3310 = vmatpush2.msra.mxu0 0.0
    %3311 = vmatprep.subr.mxu0 0.0
    %3312 = vmatpush2.msra.mxu0 0.0
    %3313 = vmatprep.subr.mxu0 0.0
    %3314 = vmatpush2.msra.mxu0 0.0
    %3315 = vmatprep.subr.mxu0 0.0
    %3316 = vmatpush2.msra.mxu0 0.0
    %3317 = vmatprep.subr.mxu0 0.0
    %3318 = vmatpush2.msra.mxu0 0.0
    %3319 = vmatprep.subr.mxu0 0.0
    %3320 = vmatpush2.msra.mxu0 0.0
    %3321 = vmatprep.mubr.f32.mxu0 0.0
    %3322 = vmatmul.mubr.f32.gmra.mxu0 %v3255
    %v3323 = vpop.f32.mrf.mxu0
    %v3324 = vadd.f32 0.0, %v3323
    %v3325 = vpop.f32.mrf.mxu0
    %3326 = vdwg.mxu0
    %v3328 = vsel %vm461, %v3247, 0
    %v3331 = vsel %vm461, %v3324, 0
    %3333 = vmatprep.subr.mxu0 0.0
    %3334 = vmatpush1.msra.mxu0 0.0
    %3335 = vmatprep.subr.mxu0 0.0
    %3336 = vmatpush1.msra.mxu0 0.0
    %3337 = vmatprep.subr.mxu0 0.0
    %3338 = vmatpush1.msra.mxu0 0.0
    %3339 = vmatprep.subr.mxu0 0.0
    %3340 = vmatpush1.msra.mxu0 0.0
    %3341 = vmatprep.subr.mxu0 0.0
    %3342 = vmatpush1.msra.mxu0 0.0
    %3343 = vmatprep.subr.mxu0 0.0
    %3344 = vmatpush1.msra.mxu0 0.0
    %3345 = vmatprep.subr.mxu0 0.0
    %3346 = vmatpush1.msra.mxu0 0.0
    %3347 = vmatprep.subr.mxu0 0.0
    %3348 = vmatpush1.msra.mxu0 0.0
    %3349 = vmatprep.subr.mxu0 0.0
    %3350 = vmatpush1.msra.mxu0 0.0
    %3351 = vmatprep.subr.mxu0 0.0
    %3352 = vmatpush1.msra.mxu0 0.0
    %3353 = vmatprep.subr.mxu0 0.0
    %3354 = vmatpush1.msra.mxu0 0.0
    %3355 = vmatprep.subr.mxu0 0.0
    %3356 = vmatpush1.msra.mxu0 0.0
    %3357 = vmatprep.subr.mxu0 0.0
    %3358 = vmatpush1.msra.mxu0 0.0
    %3359 = vmatprep.subr.mxu0 0.0
    %3360 = vmatpush1.msra.mxu0 0.0
    %3361 = vmatprep.subr.mxu0 0.0
    %3362 = vmatpush1.msra.mxu0 0.0
    %3363 = vmatprep.subr.mxu0 0.0
    %3364 = vmatpush1.msra.mxu0 %v2672
    %3365 = vmatprep.subr.mxu0 0.0
    %3366 = vmatpush2.msra.mxu0 0.0
    %3367 = vmatprep.subr.mxu0 0.0
    %3368 = vmatpush2.msra.mxu0 0.0
    %3369 = vmatprep.subr.mxu0 0.0
    %3370 = vmatpush2.msra.mxu0 0.0
    %3371 = vmatprep.subr.mxu0 0.0
    %3372 = vmatpush2.msra.mxu0 0.0
    %3373 = vmatprep.subr.mxu0 0.0
    %3374 = vmatpush2.msra.mxu0 0.0
    %3375 = vmatprep.subr.mxu0 0.0
    %3376 = vmatpush2.msra.mxu0 0.0
    %3377 = vmatprep.subr.mxu0 0.0
    %3378 = vmatpush2.msra.mxu0 0.0
    %3379 = vmatprep.subr.mxu0 0.0
    %3380 = vmatpush2.msra.mxu0 0.0
    %3381 = vmatprep.subr.mxu0 0.0
    %3382 = vmatpush2.msra.mxu0 0.0
    %3383 = vmatprep.subr.mxu0 0.0
    %3384 = vmatpush2.msra.mxu0 0.0
    %3385 = vmatprep.subr.mxu0 0.0
    %3386 = vmatpush2.msra.mxu0 0.0
    %3387 = vmatprep.subr.mxu0 0.0
    %3388 = vmatpush2.msra.mxu0 0.0
    %3389 = vmatprep.subr.mxu0 0.0
    %3390 = vmatpush2.msra.mxu0 0.0
    %3391 = vmatprep.subr.mxu0 0.0
    %3392 = vmatpush2.msra.mxu0 0.0
    %3393 = vmatprep.subr.mxu0 0.0
    %3394 = vmatpush2.msra.mxu0 0.0
    %3395 = vmatprep.subr.mxu0 0.0
    %3396 = vmatpush2.msra.mxu0 0.0
    %3397 = vmatprep.mubr.f32.mxu0 0.0
    %3398 = vmatmul.mubr.f32.gmra.mxu0 %v3328
    %v3399 = vpop.f32.mrf.mxu0
    %v3400 = vadd.f32 0.0, %v3399
    %v3401 = vpop.f32.mrf.mxu0
    %3402 = vmatprep.mubr.f32.mxu0 0.0
    %3403 = vmatmul.mubr.f32.gmra.mxu0 %v3331
    %v3404 = vpop.f32.mrf.mxu0
    %v3405 = vadd.f32 0.0, %v3404
    %v3406 = vpop.f32.mrf.mxu0
    %3407 = vdwg.mxu0
    %v3409 = vsel %vm461, %v2919, 0
    %v3412 = vsel %vm461, %v2992, 0
    %3414 = vmatprep.subr.mxu0 0.0
    %3415 = vmatpush1.msra.mxu0 0.0
    %3416 = vmatprep.subr.mxu0 0.0
    %3417 = vmatpush1.msra.mxu0 0.0
    %3418 = vmatprep.subr.mxu0 0.0
    %3419 = vmatpush1.msra.mxu0 0.0
    %3420 = vmatprep.subr.mxu0 0.0
    %3421 = vmatpush1.msra.mxu0 0.0
    %3422 = vmatprep.subr.mxu0 0.0
    %3423 = vmatpush1.msra.mxu0 0.0
    %3424 = vmatprep.subr.mxu0 0.0
    %3425 = vmatpush1.msra.mxu0 0.0
    %3426 = vmatprep.subr.mxu0 0.0
    %3427 = vmatpush1.msra.mxu0 0.0
    %3428 = vmatprep.subr.mxu0 0.0
    %3429 = vmatpush1.msra.mxu0 0.0
    %3430 = vmatprep.subr.mxu0 0.0
    %3431 = vmatpush1.msra.mxu0 0.0
    %3432 = vmatprep.subr.mxu0 0.0
    %3433 = vmatpush1.msra.mxu0 0.0
    %3434 = vmatprep.subr.mxu0 0.0
    %3435 = vmatpush1.msra.mxu0 0.0
    %3436 = vmatprep.subr.mxu0 0.0
    %3437 = vmatpush1.msra.mxu0 0.0
    %3438 = vmatprep.subr.mxu0 0.0
    %3439 = vmatpush1.msra.mxu0 0.0
    %3440 = vmatprep.subr.mxu0 0.0
    %3441 = vmatpush1.msra.mxu0 0.0
    %3442 = vmatprep.subr.mxu0 0.0
    %3443 = vmatpush1.msra.mxu0 0.0
    %3444 = vmatprep.subr.mxu0 0.0
    %3445 = vmatpush1.msra.mxu0 %v2671
    %3446 = vmatprep.subr.mxu0 0.0
    %3447 = vmatpush2.msra.mxu0 0.0
    %3448 = vmatprep.subr.mxu0 0.0
    %3449 = vmatpush2.msra.mxu0 0.0
    %3450 = vmatprep.subr.mxu0 0.0
    %3451 = vmatpush2.msra.mxu0 0.0
    %3452 = vmatprep.subr.mxu0 0.0
    %3453 = vmatpush2.msra.mxu0 0.0
    %3454 = vmatprep.subr.mxu0 0.0
    %3455 = vmatpush2.msra.mxu0 0.0
    %3456 = vmatprep.subr.mxu0 0.0
    %3457 = vmatpush2.msra.mxu0 0.0
    %3458 = vmatprep.subr.mxu0 0.0
    %3459 = vmatpush2.msra.mxu0 0.0
    %3460 = vmatprep.subr.mxu0 0.0
    %3461 = vmatpush2.msra.mxu0 0.0
    %3462 = vmatprep.subr.mxu0 0.0
    %3463 = vmatpush2.msra.mxu0 0.0
    %3464 = vmatprep.subr.mxu0 0.0
    %3465 = vmatpush2.msra.mxu0 0.0
    %3466 = vmatprep.subr.mxu0 0.0
    %3467 = vmatpush2.msra.mxu0 0.0
    %3468 = vmatprep.subr.mxu0 0.0
    %3469 = vmatpush2.msra.mxu0 0.0
    %3470 = vmatprep.subr.mxu0 0.0
    %3471 = vmatpush2.msra.mxu0 0.0
    %3472 = vmatprep.subr.mxu0 0.0
    %3473 = vmatpush2.msra.mxu0 0.0
    %3474 = vmatprep.subr.mxu0 0.0
    %3475 = vmatpush2.msra.mxu0 0.0
    %3476 = vmatprep.subr.mxu0 0.0
    %3477 = vmatpush2.msra.mxu0 0.0
    %3478 = vmatprep.mubr.f32.mxu0 0.0
    %3479 = vmatmul.mubr.f32.gmra.mxu0 %v3409
    %v3480 = vpop.f32.mrf.mxu0
    %v3481 = vadd.f32 %v3400, %v3480
    %v3482 = vpop.f32.mrf.mxu0
    %3483 = vmatprep.mubr.f32.mxu0 0.0
    %3484 = vmatmul.mubr.f32.gmra.mxu0 %v3412
    %v3485 = vpop.f32.mrf.mxu0
    %v3486 = vadd.f32 %v3405, %v3485
    %v3487 = vpop.f32.mrf.mxu0
    %3488 = vdwg.mxu0
    %3489 = vrot.lane.b32.xlu0 %v2486, 112
    %v3490 = vpop.permute.xlu0 %3489
    %3491 = vrot.lane.b32.xlu0 %v2574, 112
    %v3492 = vpop.permute.xlu0 %3491
    %v3493 = vsel %vm461, %v3490, 0
    %v3495 = vsel %vm461, %v3492, 0
    %3497 = vmatprep.subr.mxu0 0.0
    %3498 = vmatpush1.xpose.msra.mxu0 0.0
    %3499 = vmatprep.subr.mxu0 0.0
    %3500 = vmatpush1.xpose.msra.mxu0 0.0
    %3501 = vmatprep.subr.mxu0 0.0
    %3502 = vmatpush1.xpose.msra.mxu0 0.0
    %3503 = vmatprep.subr.mxu0 0.0
    %3504 = vmatpush1.xpose.msra.mxu0 0.0
    %3505 = vmatprep.subr.mxu0 0.0
    %3506 = vmatpush1.xpose.msra.mxu0 0.0
    %3507 = vmatprep.subr.mxu0 0.0
    %3508 = vmatpush1.xpose.msra.mxu0 0.0
    %3509 = vmatprep.subr.mxu0 0.0
    %3510 = vmatpush1.xpose.msra.mxu0 0.0
    %3511 = vmatprep.subr.mxu0 0.0
    %3512 = vmatpush1.xpose.msra.mxu0 0.0
    %3513 = vmatprep.subr.mxu0 0.0
    %3514 = vmatpush1.xpose.msra.mxu0 0.0
    %3515 = vmatprep.subr.mxu0 0.0
    %3516 = vmatpush1.xpose.msra.mxu0 0.0
    %3517 = vmatprep.subr.mxu0 0.0
    %3518 = vmatpush1.xpose.msra.mxu0 0.0
    %3519 = vmatprep.subr.mxu0 0.0
    %3520 = vmatpush1.xpose.msra.mxu0 0.0
    %3521 = vmatprep.subr.mxu0 0.0
    %3522 = vmatpush1.xpose.msra.mxu0 0.0
    %3523 = vmatprep.subr.mxu0 0.0
    %3524 = vmatpush1.xpose.msra.mxu0 0.0
    %3525 = vmatprep.subr.mxu0 0.0
    %3526 = vmatpush1.xpose.msra.mxu0 0.0
    %3527 = vmatprep.subr.mxu0 0.0
    %3528 = vmatpush1.xpose.msra.mxu0 %v3495
    %3529 = vmatprep.subr.mxu0 0.0
    %3530 = vmatpush2.xpose.msra.mxu0 0.0
    %3531 = vmatprep.subr.mxu0 0.0
    %3532 = vmatpush2.xpose.msra.mxu0 0.0
    %3533 = vmatprep.subr.mxu0 0.0
    %3534 = vmatpush2.xpose.msra.mxu0 0.0
    %3535 = vmatprep.subr.mxu0 0.0
    %3536 = vmatpush2.xpose.msra.mxu0 0.0
    %3537 = vmatprep.subr.mxu0 0.0
    %3538 = vmatpush2.xpose.msra.mxu0 0.0
    %3539 = vmatprep.subr.mxu0 0.0
    %3540 = vmatpush2.xpose.msra.mxu0 0.0
    %3541 = vmatprep.subr.mxu0 0.0
    %3542 = vmatpush2.xpose.msra.mxu0 0.0
    %3543 = vmatprep.subr.mxu0 0.0
    %3544 = vmatpush2.xpose.msra.mxu0 0.0
    %3545 = vmatprep.subr.mxu0 0.0
    %3546 = vmatpush2.xpose.msra.mxu0 0.0
    %3547 = vmatprep.subr.mxu0 0.0
    %3548 = vmatpush2.xpose.msra.mxu0 0.0
    %3549 = vmatprep.subr.mxu0 0.0
    %3550 = vmatpush2.xpose.msra.mxu0 0.0
    %3551 = vmatprep.subr.mxu0 0.0
    %3552 = vmatpush2.xpose.msra.mxu0 0.0
    %3553 = vmatprep.subr.mxu0 0.0
    %3554 = vmatpush2.xpose.msra.mxu0 0.0
    %3555 = vmatprep.subr.mxu0 0.0
    %3556 = vmatpush2.xpose.msra.mxu0 0.0
    %3557 = vmatprep.subr.mxu0 0.0
    %3558 = vmatpush2.xpose.msra.mxu0 0.0
    %3559 = vmatprep.subr.mxu0 0.0
    %3560 = vmatpush2.xpose.msra.mxu0 0.0
    %3561 = vmatprep.mubr.f32.mxu0 0.0
    %3562 = vmatmul.mubr.f32.gmra.mxu0 %v3493
    %v3563 = vpop.f32.mrf.mxu0
    %v3564 = vadd.f32 %v454, %v3563
    %v3565 = vpop.f32.mrf.mxu0
    %3566 = vdwg.mxu0
    %3567 = vrot.lane.b32.xlu0 %v2491, 112
    %v3568 = vpop.permute.xlu0 %3567
    %3569 = vrot.lane.b32.xlu0 %v2579, 112
    %v3570 = vpop.permute.xlu0 %3569
    %v3571 = vsel %vm461, %v3568, 0
    %v3573 = vsel %vm461, %v3570, 0
    %3575 = vmatprep.subr.mxu0 0.0
    %3576 = vmatpush1.xpose.msra.mxu0 0.0
    %3577 = vmatprep.subr.mxu0 0.0
    %3578 = vmatpush1.xpose.msra.mxu0 0.0
    %3579 = vmatprep.subr.mxu0 0.0
    %3580 = vmatpush1.xpose.msra.mxu0 0.0
    %3581 = vmatprep.subr.mxu0 0.0
    %3582 = vmatpush1.xpose.msra.mxu0 0.0
    %3583 = vmatprep.subr.mxu0 0.0
    %3584 = vmatpush1.xpose.msra.mxu0 0.0
    %3585 = vmatprep.subr.mxu0 0.0
    %3586 = vmatpush1.xpose.msra.mxu0 0.0
    %3587 = vmatprep.subr.mxu0 0.0
    %3588 = vmatpush1.xpose.msra.mxu0 0.0
    %3589 = vmatprep.subr.mxu0 0.0
    %3590 = vmatpush1.xpose.msra.mxu0 0.0
    %3591 = vmatprep.subr.mxu0 0.0
    %3592 = vmatpush1.xpose.msra.mxu0 0.0
    %3593 = vmatprep.subr.mxu0 0.0
    %3594 = vmatpush1.xpose.msra.mxu0 0.0
    %3595 = vmatprep.subr.mxu0 0.0
    %3596 = vmatpush1.xpose.msra.mxu0 0.0
    %3597 = vmatprep.subr.mxu0 0.0
    %3598 = vmatpush1.xpose.msra.mxu0 0.0
    %3599 = vmatprep.subr.mxu0 0.0
    %3600 = vmatpush1.xpose.msra.mxu0 0.0
    %3601 = vmatprep.subr.mxu0 0.0
    %3602 = vmatpush1.xpose.msra.mxu0 0.0
    %3603 = vmatprep.subr.mxu0 0.0
    %3604 = vmatpush1.xpose.msra.mxu0 0.0
    %3605 = vmatprep.subr.mxu0 0.0
    %3606 = vmatpush1.xpose.msra.mxu0 %v3573
    %3607 = vmatprep.subr.mxu0 0.0
    %3608 = vmatpush2.xpose.msra.mxu0 0.0
    %3609 = vmatprep.subr.mxu0 0.0
    %3610 = vmatpush2.xpose.msra.mxu0 0.0
    %3611 = vmatprep.subr.mxu0 0.0
    %3612 = vmatpush2.xpose.msra.mxu0 0.0
    %3613 = vmatprep.subr.mxu0 0.0
    %3614 = vmatpush2.xpose.msra.mxu0 0.0
    %3615 = vmatprep.subr.mxu0 0.0
    %3616 = vmatpush2.xpose.msra.mxu0 0.0
    %3617 = vmatprep.subr.mxu0 0.0
    %3618 = vmatpush2.xpose.msra.mxu0 0.0
    %3619 = vmatprep.subr.mxu0 0.0
    %3620 = vmatpush2.xpose.msra.mxu0 0.0
    %3621 = vmatprep.subr.mxu0 0.0
    %3622 = vmatpush2.xpose.msra.mxu0 0.0
    %3623 = vmatprep.subr.mxu0 0.0
    %3624 = vmatpush2.xpose.msra.mxu0 0.0
    %3625 = vmatprep.subr.mxu0 0.0
    %3626 = vmatpush2.xpose.msra.mxu0 0.0
    %3627 = vmatprep.subr.mxu0 0.0
    %3628 = vmatpush2.xpose.msra.mxu0 0.0
    %3629 = vmatprep.subr.mxu0 0.0
    %3630 = vmatpush2.xpose.msra.mxu0 0.0
    %3631 = vmatprep.subr.mxu0 0.0
    %3632 = vmatpush2.xpose.msra.mxu0 0.0
    %3633 = vmatprep.subr.mxu0 0.0
    %3634 = vmatpush2.xpose.msra.mxu0 0.0
    %3635 = vmatprep.subr.mxu0 0.0
    %3636 = vmatpush2.xpose.msra.mxu0 0.0
    %3637 = vmatprep.subr.mxu0 0.0
    %3638 = vmatpush2.xpose.msra.mxu0 0.0
    %3639 = vmatprep.mubr.f32.mxu0 0.0
    %3640 = vmatmul.mubr.f32.gmra.mxu0 %v3571
    %v3641 = vpop.f32.mrf.mxu0
    %v3642 = vadd.f32 %v458, %v3641
    %v3643 = vpop.f32.mrf.mxu0
    %3644 = vdwg.mxu0
    %v3645 = vsel %vm461, %v3564, -inf
    %3646 = vmax.xlane.f32.xlu0 %v3645
    %v3647 = vpop.xlane.xlu0 %3646
    %v3648 = vsel %vm461, %v3642, -inf
    %3649 = vmax.xlane.f32.xlu0 %v3648
    %v3650 = vpop.xlane.xlu0 %3649
    %v3651 = vsub.f32 %v3564, %v3647
    %v3652 = vsub.f32 %v3642, %v3650
    %v3653 = vmul.f32 %v3651, 1.442695
    %v3654 = vpow.pop %v3653
    %v3655 = vmul.f32 %v3652, 1.442695
    %v3656 = vpow.pop %v3655
    %v3657 = vsel %vm461, %v3654, 0.0
    %3658 = vadd.xlane.f32.xlu0 %v3657
    %v3659 = vpop.xlane.xlu0 %3658
    %v3660 = vsel %vm461, %v3656, 0.0
    %3661 = vadd.xlane.f32.xlu0 %v3660
    %v3662 = vpop.xlane.xlu0 %3661
    %v3663 = vrcp.pop %v3659
    %v3664 = vmul.f32 %v3654, %v3663
    %v3665 = vrcp.pop %v3662
    %v3666 = vmul.f32 %v3656, %v3665
    %3667 = vrot.lane.b32.xlu0 %v2662, 112
    %v3668 = vpop.permute.xlu0 %3667
    %v3671 = vsel %vm461, %v3664, 0
    %3673 = vmatprep.subr.mxu0 0.0
    %3674 = vmatpush1.msra.mxu0 0.0
    %3675 = vmatprep.subr.mxu0 0.0
    %3676 = vmatpush1.msra.mxu0 0.0
    %3677 = vmatprep.subr.mxu0 0.0
    %3678 = vmatpush1.msra.mxu0 0.0
    %3679 = vmatprep.subr.mxu0 0.0
    %3680 = vmatpush1.msra.mxu0 0.0
    %3681 = vmatprep.subr.mxu0 0.0
    %3682 = vmatpush1.msra.mxu0 0.0
    %3683 = vmatprep.subr.mxu0 0.0
    %3684 = vmatpush1.msra.mxu0 0.0
    %3685 = vmatprep.subr.mxu0 0.0
    %3686 = vmatpush1.msra.mxu0 0.0
    %3687 = vmatprep.subr.mxu0 0.0
    %3688 = vmatpush1.msra.mxu0 0.0
    %3689 = vmatprep.subr.mxu0 0.0
    %3690 = vmatpush1.msra.mxu0 0.0
    %3691 = vmatprep.subr.mxu0 0.0
    %3692 = vmatpush1.msra.mxu0 0.0
    %3693 = vmatprep.subr.mxu0 0.0
    %3694 = vmatpush1.msra.mxu0 0.0
    %3695 = vmatprep.subr.mxu0 0.0
    %3696 = vmatpush1.msra.mxu0 0.0
    %3697 = vmatprep.subr.mxu0 0.0
    %3698 = vmatpush1.msra.mxu0 0.0
    %3699 = vmatprep.subr.mxu0 0.0
    %3700 = vmatpush1.msra.mxu0 0.0
    %3701 = vmatprep.subr.mxu0 0.0
    %3702 = vmatpush1.msra.mxu0 0.0
    %3703 = vmatprep.subr.mxu0 0.0
    %3704 = vmatpush1.msra.mxu0 %v3668
    %3705 = vmatprep.subr.mxu0 0.0
    %3706 = vmatpush2.msra.mxu0 0.0
    %3707 = vmatprep.subr.mxu0 0.0
    %3708 = vmatpush2.msra.mxu0 0.0
    %3709 = vmatprep.subr.mxu0 0.0
    %3710 = vmatpush2.msra.mxu0 0.0
    %3711 = vmatprep.subr.mxu0 0.0
    %3712 = vmatpush2.msra.mxu0 0.0
    %3713 = vmatprep.subr.mxu0 0.0
    %3714 = vmatpush2.msra.mxu0 0.0
    %3715 = vmatprep.subr.mxu0 0.0
    %3716 = vmatpush2.msra.mxu0 0.0
    %3717 = vmatprep.subr.mxu0 0.0
    %3718 = vmatpush2.msra.mxu0 0.0
    %3719 = vmatprep.subr.mxu0 0.0
    %3720 = vmatpush2.msra.mxu0 0.0
    %3721 = vmatprep.subr.mxu0 0.0
    %3722 = vmatpush2.msra.mxu0 0.0
    %3723 = vmatprep.subr.mxu0 0.0
    %3724 = vmatpush2.msra.mxu0 0.0
    %3725 = vmatprep.subr.mxu0 0.0
    %3726 = vmatpush2.msra.mxu0 0.0
    %3727 = vmatprep.subr.mxu0 0.0
    %3728 = vmatpush2.msra.mxu0 0.0
    %3729 = vmatprep.subr.mxu0 0.0
    %3730 = vmatpush2.msra.mxu0 0.0
    %3731 = vmatprep.subr.mxu0 0.0
    %3732 = vmatpush2.msra.mxu0 0.0
    %3733 = vmatprep.subr.mxu0 0.0
    %3734 = vmatpush2.msra.mxu0 0.0
    %3735 = vmatprep.subr.mxu0 0.0
    %3736 = vmatpush2.msra.mxu0 0.0
    %3737 = vmatprep.mubr.f32.mxu0 0.0
    %3738 = vmatmul.mubr.f32.gmra.mxu0 %v3671
    %v3739 = vpop.f32.mrf.mxu0
    %v3740 = vadd.f32 0.0, %v3739
    %v3741 = vpop.f32.mrf.mxu0
    %3742 = vdwg.mxu0
    %3743 = vrot.lane.b32.xlu0 %v2667, 112
    %v3744 = vpop.permute.xlu0 %3743
    %v3747 = vsel %vm461, %v3666, 0
    %3749 = vmatprep.subr.mxu0 0.0
    %3750 = vmatpush1.msra.mxu0 0.0
    %3751 = vmatprep.subr.mxu0 0.0
    %3752 = vmatpush1.msra.mxu0 0.0
    %3753 = vmatprep.subr.mxu0 0.0
    %3754 = vmatpush1.msra.mxu0 0.0
    %3755 = vmatprep.subr.mxu0 0.0
    %3756 = vmatpush1.msra.mxu0 0.0
    %3757 = vmatprep.subr.mxu0 0.0
    %3758 = vmatpush1.msra.mxu0 0.0
    %3759 = vmatprep.subr.mxu0 0.0
    %3760 = vmatpush1.msra.mxu0 0.0
    %3761 = vmatprep.subr.mxu0 0.0
    %3762 = vmatpush1.msra.mxu0 0.0
    %3763 = vmatprep.subr.mxu0 0.0
    %3764 = vmatpush1.msra.mxu0 0.0
    %3765 = vmatprep.subr.mxu0 0.0
    %3766 = vmatpush1.msra.mxu0 0.0
    %3767 = vmatprep.subr.mxu0 0.0
    %3768 = vmatpush1.msra.mxu0 0.0
    %3769 = vmatprep.subr.mxu0 0.0
    %3770 = vmatpush1.msra.mxu0 0.0
    %3771 = vmatprep.subr.mxu0 0.0
    %3772 = vmatpush1.msra.mxu0 0.0
    %3773 = vmatprep.subr.mxu0 0.0
    %3774 = vmatpush1.msra.mxu0 0.0
    %3775 = vmatprep.subr.mxu0 0.0
    %3776 = vmatpush1.msra.mxu0 0.0
    %3777 = vmatprep.subr.mxu0 0.0
    %3778 = vmatpush1.msra.mxu0 0.0
    %3779 = vmatprep.subr.mxu0 0.0
    %3780 = vmatpush1.msra.mxu0 %v3744
    %3781 = vmatprep.subr.mxu0 0.0
    %3782 = vmatpush2.msra.mxu0 0.0
    %3783 = vmatprep.subr.mxu0 0.0
    %3784 = vmatpush2.msra.mxu0 0.0
    %3785 = vmatprep.subr.mxu0 0.0
    %3786 = vmatpush2.msra.mxu0 0.0
    %3787 = vmatprep.subr.mxu0 0.0
    %3788 = vmatpush2.msra.mxu0 0.0
    %3789 = vmatprep.subr.mxu0 0.0
    %3790 = vmatpush2.msra.mxu0 0.0
    %3791 = vmatprep.subr.mxu0 0.0
    %3792 = vmatpush2.msra.mxu0 0.0
    %3793 = vmatprep.subr.mxu0 0.0
    %3794 = vmatpush2.msra.mxu0 0.0
    %3795 = vmatprep.subr.mxu0 0.0
    %3796 = vmatpush2.msra.mxu0 0.0
    %3797 = vmatprep.subr.mxu0 0.0
    %3798 = vmatpush2.msra.mxu0 0.0
    %3799 = vmatprep.subr.mxu0 0.0
    %3800 = vmatpush2.msra.mxu0 0.0
    %3801 = vmatprep.subr.mxu0 0.0
    %3802 = vmatpush2.msra.mxu0 0.0
    %3803 = vmatprep.subr.mxu0 0.0
    %3804 = vmatpush2.msra.mxu0 0.0
    %3805 = vmatprep.subr.mxu0 0.0
    %3806 = vmatpush2.msra.mxu0 0.0
    %3807 = vmatprep.subr.mxu0 0.0
    %3808 = vmatpush2.msra.mxu0 0.0
    %3809 = vmatprep.subr.mxu0 0.0
    %3810 = vmatpush2.msra.mxu0 0.0
    %3811 = vmatprep.subr.mxu0 0.0
    %3812 = vmatpush2.msra.mxu0 0.0
    %3813 = vmatprep.mubr.f32.mxu0 0.0
    %3814 = vmatmul.mubr.f32.gmra.mxu0 %v3747
    %v3815 = vpop.f32.mrf.mxu0
    %v3816 = vadd.f32 0.0, %v3815
    %v3817 = vpop.f32.mrf.mxu0
    %3818 = vdwg.mxu0
    %v3820 = vsel %vm461, %v3740, 0
    %v3823 = vsel %vm461, %v3816, 0
    %3825 = vmatprep.subr.mxu0 0.0
    %3826 = vmatpush1.msra.mxu0 0.0
    %3827 = vmatprep.subr.mxu0 0.0
    %3828 = vmatpush1.msra.mxu0 0.0
    %3829 = vmatprep.subr.mxu0 0.0
    %3830 = vmatpush1.msra.mxu0 0.0
    %3831 = vmatprep.subr.mxu0 0.0
    %3832 = vmatpush1.msra.mxu0 0.0
    %3833 = vmatprep.subr.mxu0 0.0
    %3834 = vmatpush1.msra.mxu0 0.0
    %3835 = vmatprep.subr.mxu0 0.0
    %3836 = vmatpush1.msra.mxu0 0.0
    %3837 = vmatprep.subr.mxu0 0.0
    %3838 = vmatpush1.msra.mxu0 0.0
    %3839 = vmatprep.subr.mxu0 0.0
    %3840 = vmatpush1.msra.mxu0 0.0
    %3841 = vmatprep.subr.mxu0 0.0
    %3842 = vmatpush1.msra.mxu0 0.0
    %3843 = vmatprep.subr.mxu0 0.0
    %3844 = vmatpush1.msra.mxu0 0.0
    %3845 = vmatprep.subr.mxu0 0.0
    %3846 = vmatpush1.msra.mxu0 0.0
    %3847 = vmatprep.subr.mxu0 0.0
    %3848 = vmatpush1.msra.mxu0 0.0
    %3849 = vmatprep.subr.mxu0 0.0
    %3850 = vmatpush1.msra.mxu0 0.0
    %3851 = vmatprep.subr.mxu0 0.0
    %3852 = vmatpush1.msra.mxu0 0.0
    %3853 = vmatprep.subr.mxu0 0.0
    %3854 = vmatpush1.msra.mxu0 0.0
    %3855 = vmatprep.subr.mxu0 0.0
    %3856 = vmatpush1.msra.mxu0 %v2673
    %3857 = vmatprep.subr.mxu0 0.0
    %3858 = vmatpush2.msra.mxu0 0.0
    %3859 = vmatprep.subr.mxu0 0.0
    %3860 = vmatpush2.msra.mxu0 0.0
    %3861 = vmatprep.subr.mxu0 0.0
    %3862 = vmatpush2.msra.mxu0 0.0
    %3863 = vmatprep.subr.mxu0 0.0
    %3864 = vmatpush2.msra.mxu0 0.0
    %3865 = vmatprep.subr.mxu0 0.0
    %3866 = vmatpush2.msra.mxu0 0.0
    %3867 = vmatprep.subr.mxu0 0.0
    %3868 = vmatpush2.msra.mxu0 0.0
    %3869 = vmatprep.subr.mxu0 0.0
    %3870 = vmatpush2.msra.mxu0 0.0
    %3871 = vmatprep.subr.mxu0 0.0
    %3872 = vmatpush2.msra.mxu0 0.0
    %3873 = vmatprep.subr.mxu0 0.0
    %3874 = vmatpush2.msra.mxu0 0.0
    %3875 = vmatprep.subr.mxu0 0.0
    %3876 = vmatpush2.msra.mxu0 0.0
    %3877 = vmatprep.subr.mxu0 0.0
    %3878 = vmatpush2.msra.mxu0 0.0
    %3879 = vmatprep.subr.mxu0 0.0
    %3880 = vmatpush2.msra.mxu0 0.0
    %3881 = vmatprep.subr.mxu0 0.0
    %3882 = vmatpush2.msra.mxu0 0.0
    %3883 = vmatprep.subr.mxu0 0.0
    %3884 = vmatpush2.msra.mxu0 0.0
    %3885 = vmatprep.subr.mxu0 0.0
    %3886 = vmatpush2.msra.mxu0 0.0
    %3887 = vmatprep.subr.mxu0 0.0
    %3888 = vmatpush2.msra.mxu0 0.0
    %3889 = vmatprep.mubr.f32.mxu0 0.0
    %3890 = vmatmul.mubr.f32.gmra.mxu0 %v3820
    %v3891 = vpop.f32.mrf.mxu0
    %v3892 = vadd.f32 0.0, %v3891
    %v3893 = vpop.f32.mrf.mxu0
    %3894 = vmatprep.mubr.f32.mxu0 0.0
    %3895 = vmatmul.mubr.f32.gmra.mxu0 %v3823
    %v3896 = vpop.f32.mrf.mxu0
    %v3897 = vadd.f32 0.0, %v3896
    %v3898 = vpop.f32.mrf.mxu0
    %3899 = vdwg.mxu0
    %v3900 = vadd.f32 %v3481, %v3892
    %v3901 = vadd.f32 %v3486, %v3897
    %3902 = vrot.lane.b32.xlu0 %v2486, 104
    %v3903 = vpop.permute.xlu0 %3902
    %3904 = vrot.lane.b32.xlu0 %v2574, 104
    %v3905 = vpop.permute.xlu0 %3904
    %v3906 = vsel %vm461, %v3903, 0
    %v3908 = vsel %vm461, %v3905, 0
    %3910 = vmatprep.subr.mxu0 0.0
    %3911 = vmatpush1.xpose.msra.mxu0 0.0
    %3912 = vmatprep.subr.mxu0 0.0
    %3913 = vmatpush1.xpose.msra.mxu0 0.0
    %3914 = vmatprep.subr.mxu0 0.0
    %3915 = vmatpush1.xpose.msra.mxu0 0.0
    %3916 = vmatprep.subr.mxu0 0.0
    %3917 = vmatpush1.xpose.msra.mxu0 0.0
    %3918 = vmatprep.subr.mxu0 0.0
    %3919 = vmatpush1.xpose.msra.mxu0 0.0
    %3920 = vmatprep.subr.mxu0 0.0
    %3921 = vmatpush1.xpose.msra.mxu0 0.0
    %3922 = vmatprep.subr.mxu0 0.0
    %3923 = vmatpush1.xpose.msra.mxu0 0.0
    %3924 = vmatprep.subr.mxu0 0.0
    %3925 = vmatpush1.xpose.msra.mxu0 0.0
    %3926 = vmatprep.subr.mxu0 0.0
    %3927 = vmatpush1.xpose.msra.mxu0 0.0
    %3928 = vmatprep.subr.mxu0 0.0
    %3929 = vmatpush1.xpose.msra.mxu0 0.0
    %3930 = vmatprep.subr.mxu0 0.0
    %3931 = vmatpush1.xpose.msra.mxu0 0.0
    %3932 = vmatprep.subr.mxu0 0.0
    %3933 = vmatpush1.xpose.msra.mxu0 0.0
    %3934 = vmatprep.subr.mxu0 0.0
    %3935 = vmatpush1.xpose.msra.mxu0 0.0
    %3936 = vmatprep.subr.mxu0 0.0
    %3937 = vmatpush1.xpose.msra.mxu0 0.0
    %3938 = vmatprep.subr.mxu0 0.0
    %3939 = vmatpush1.xpose.msra.mxu0 0.0
    %3940 = vmatprep.subr.mxu0 0.0
    %3941 = vmatpush1.xpose.msra.mxu0 %v3908
    %3942 = vmatprep.subr.mxu0 0.0
    %3943 = vmatpush2.xpose.msra.mxu0 0.0
    %3944 = vmatprep.subr.mxu0 0.0
    %3945 = vmatpush2.xpose.msra.mxu0 0.0
    %3946 = vmatprep.subr.mxu0 0.0
    %3947 = vmatpush2.xpose.msra.mxu0 0.0
    %3948 = vmatprep.subr.mxu0 0.0
    %3949 = vmatpush2.xpose.msra.mxu0 0.0
    %3950 = vmatprep.subr.mxu0 0.0
    %3951 = vmatpush2.xpose.msra.mxu0 0.0
    %3952 = vmatprep.subr.mxu0 0.0
    %3953 = vmatpush2.xpose.msra.mxu0 0.0
    %3954 = vmatprep.subr.mxu0 0.0
    %3955 = vmatpush2.xpose.msra.mxu0 0.0
    %3956 = vmatprep.subr.mxu0 0.0
    %3957 = vmatpush2.xpose.msra.mxu0 0.0
    %3958 = vmatprep.subr.mxu0 0.0
    %3959 = vmatpush2.xpose.msra.mxu0 0.0
    %3960 = vmatprep.subr.mxu0 0.0
    %3961 = vmatpush2.xpose.msra.mxu0 0.0
    %3962 = vmatprep.subr.mxu0 0.0
    %3963 = vmatpush2.xpose.msra.mxu0 0.0
    %3964 = vmatprep.subr.mxu0 0.0
    %3965 = vmatpush2.xpose.msra.mxu0 0.0
    %3966 = vmatprep.subr.mxu0 0.0
    %3967 = vmatpush2.xpose.msra.mxu0 0.0
    %3968 = vmatprep.subr.mxu0 0.0
    %3969 = vmatpush2.xpose.msra.mxu0 0.0
    %3970 = vmatprep.subr.mxu0 0.0
    %3971 = vmatpush2.xpose.msra.mxu0 0.0
    %3972 = vmatprep.subr.mxu0 0.0
    %3973 = vmatpush2.xpose.msra.mxu0 0.0
    %3974 = vmatprep.mubr.f32.mxu0 0.0
    %3975 = vmatmul.mubr.f32.gmra.mxu0 %v3906
    %v3976 = vpop.f32.mrf.mxu0
    %v3977 = vadd.f32 %v454, %v3976
    %v3978 = vpop.f32.mrf.mxu0
    %3979 = vdwg.mxu0
    %3980 = vrot.lane.b32.xlu0 %v2491, 104
    %v3981 = vpop.permute.xlu0 %3980
    %3982 = vrot.lane.b32.xlu0 %v2579, 104
    %v3983 = vpop.permute.xlu0 %3982
    %v3984 = vsel %vm461, %v3981, 0
    %v3986 = vsel %vm461, %v3983, 0
    %3988 = vmatprep.subr.mxu0 0.0
    %3989 = vmatpush1.xpose.msra.mxu0 0.0
    %3990 = vmatprep.subr.mxu0 0.0
    %3991 = vmatpush1.xpose.msra.mxu0 0.0
    %3992 = vmatprep.subr.mxu0 0.0
    %3993 = vmatpush1.xpose.msra.mxu0 0.0
    %3994 = vmatprep.subr.mxu0 0.0
    %3995 = vmatpush1.xpose.msra.mxu0 0.0
    %3996 = vmatprep.subr.mxu0 0.0
    %3997 = vmatpush1.xpose.msra.mxu0 0.0
    %3998 = vmatprep.subr.mxu0 0.0
    %3999 = vmatpush1.xpose.msra.mxu0 0.0
    %4000 = vmatprep.subr.mxu0 0.0
    %4001 = vmatpush1.xpose.msra.mxu0 0.0
    %4002 = vmatprep.subr.mxu0 0.0
    %4003 = vmatpush1.xpose.msra.mxu0 0.0
    %4004 = vmatprep.subr.mxu0 0.0
    %4005 = vmatpush1.xpose.msra.mxu0 0.0
    %4006 = vmatprep.subr.mxu0 0.0
    %4007 = vmatpush1.xpose.msra.mxu0 0.0
    %4008 = vmatprep.subr.mxu0 0.0
    %4009 = vmatpush1.xpose.msra.mxu0 0.0
    %4010 = vmatprep.subr.mxu0 0.0
    %4011 = vmatpush1.xpose.msra.mxu0 0.0
    %4012 = vmatprep.subr.mxu0 0.0
    %4013 = vmatpush1.xpose.msra.mxu0 0.0
    %4014 = vmatprep.subr.mxu0 0.0
    %4015 = vmatpush1.xpose.msra.mxu0 0.0
    %4016 = vmatprep.subr.mxu0 0.0
    %4017 = vmatpush1.xpose.msra.mxu0 0.0
    %4018 = vmatprep.subr.mxu0 0.0
    %4019 = vmatpush1.xpose.msra.mxu0 %v3986
    %4020 = vmatprep.subr.mxu0 0.0
    %4021 = vmatpush2.xpose.msra.mxu0 0.0
    %4022 = vmatprep.subr.mxu0 0.0
    %4023 = vmatpush2.xpose.msra.mxu0 0.0
    %4024 = vmatprep.subr.mxu0 0.0
    %4025 = vmatpush2.xpose.msra.mxu0 0.0
    %4026 = vmatprep.subr.mxu0 0.0
    %4027 = vmatpush2.xpose.msra.mxu0 0.0
    %4028 = vmatprep.subr.mxu0 0.0
    %4029 = vmatpush2.xpose.msra.mxu0 0.0
    %4030 = vmatprep.subr.mxu0 0.0
    %4031 = vmatpush2.xpose.msra.mxu0 0.0
    %4032 = vmatprep.subr.mxu0 0.0
    %4033 = vmatpush2.xpose.msra.mxu0 0.0
    %4034 = vmatprep.subr.mxu0 0.0
    %4035 = vmatpush2.xpose.msra.mxu0 0.0
    %4036 = vmatprep.subr.mxu0 0.0
    %4037 = vmatpush2.xpose.msra.mxu0 0.0
    %4038 = vmatprep.subr.mxu0 0.0
    %4039 = vmatpush2.xpose.msra.mxu0 0.0
    %4040 = vmatprep.subr.mxu0 0.0
    %4041 = vmatpush2.xpose.msra.mxu0 0.0
    %4042 = vmatprep.subr.mxu0 0.0
    %4043 = vmatpush2.xpose.msra.mxu0 0.0
    %4044 = vmatprep.subr.mxu0 0.0
    %4045 = vmatpush2.xpose.msra.mxu0 0.0
    %4046 = vmatprep.subr.mxu0 0.0
    %4047 = vmatpush2.xpose.msra.mxu0 0.0
    %4048 = vmatprep.subr.mxu0 0.0
    %4049 = vmatpush2.xpose.msra.mxu0 0.0
    %4050 = vmatprep.subr.mxu0 0.0
    %4051 = vmatpush2.xpose.msra.mxu0 0.0
    %4052 = vmatprep.mubr.f32.mxu0 0.0
    %4053 = vmatmul.mubr.f32.gmra.mxu0 %v3984
    %v4054 = vpop.f32.mrf.mxu0
    %v4055 = vadd.f32 %v458, %v4054
    %v4056 = vpop.f32.mrf.mxu0
    %4057 = vdwg.mxu0
    %v4058 = vsel %vm461, %v3977, -inf
    %4059 = vmax.xlane.f32.xlu0 %v4058
    %v4060 = vpop.xlane.xlu0 %4059
    %v4061 = vsel %vm461, %v4055, -inf
    %4062 = vmax.xlane.f32.xlu0 %v4061
    %v4063 = vpop.xlane.xlu0 %4062
    %v4064 = vsub.f32 %v3977, %v4060
    %v4065 = vsub.f32 %v4055, %v4063
    %v4066 = vmul.f32 %v4064, 1.442695
    %v4067 = vpow.pop %v4066
    %v4068 = vmul.f32 %v4065, 1.442695
    %v4069 = vpow.pop %v4068
    %v4070 = vsel %vm461, %v4067, 0.0
    %4071 = vadd.xlane.f32.xlu0 %v4070
    %v4072 = vpop.xlane.xlu0 %4071
    %v4073 = vsel %vm461, %v4069, 0.0
    %4074 = vadd.xlane.f32.xlu0 %v4073
    %v4075 = vpop.xlane.xlu0 %4074
    %v4076 = vrcp.pop %v4072
    %v4077 = vmul.f32 %v4067, %v4076
    %v4078 = vrcp.pop %v4075
    %v4079 = vmul.f32 %v4069, %v4078
    %4080 = vrot.lane.b32.xlu0 %v2662, 104
    %v4081 = vpop.permute.xlu0 %4080
    %v4084 = vsel %vm461, %v4077, 0
    %4086 = vmatprep.subr.mxu0 0.0
    %4087 = vmatpush1.msra.mxu0 0.0
    %4088 = vmatprep.subr.mxu0 0.0
    %4089 = vmatpush1.msra.mxu0 0.0
    %4090 = vmatprep.subr.mxu0 0.0
    %4091 = vmatpush1.msra.mxu0 0.0
    %4092 = vmatprep.subr.mxu0 0.0
    %4093 = vmatpush1.msra.mxu0 0.0
    %4094 = vmatprep.subr.mxu0 0.0
    %4095 = vmatpush1.msra.mxu0 0.0
    %4096 = vmatprep.subr.mxu0 0.0
    %4097 = vmatpush1.msra.mxu0 0.0
    %4098 = vmatprep.subr.mxu0 0.0
    %4099 = vmatpush1.msra.mxu0 0.0
    %4100 = vmatprep.subr.mxu0 0.0
    %4101 = vmatpush1.msra.mxu0 0.0
    %4102 = vmatprep.subr.mxu0 0.0
    %4103 = vmatpush1.msra.mxu0 0.0
    %4104 = vmatprep.subr.mxu0 0.0
    %4105 = vmatpush1.msra.mxu0 0.0
    %4106 = vmatprep.subr.mxu0 0.0
    %4107 = vmatpush1.msra.mxu0 0.0
    %4108 = vmatprep.subr.mxu0 0.0
    %4109 = vmatpush1.msra.mxu0 0.0
    %4110 = vmatprep.subr.mxu0 0.0
    %4111 = vmatpush1.msra.mxu0 0.0
    %4112 = vmatprep.subr.mxu0 0.0
    %4113 = vmatpush1.msra.mxu0 0.0
    %4114 = vmatprep.subr.mxu0 0.0
    %4115 = vmatpush1.msra.mxu0 0.0
    %4116 = vmatprep.subr.mxu0 0.0
    %4117 = vmatpush1.msra.mxu0 %v4081
    %4118 = vmatprep.subr.mxu0 0.0
    %4119 = vmatpush2.msra.mxu0 0.0
    %4120 = vmatprep.subr.mxu0 0.0
    %4121 = vmatpush2.msra.mxu0 0.0
    %4122 = vmatprep.subr.mxu0 0.0
    %4123 = vmatpush2.msra.mxu0 0.0
    %4124 = vmatprep.subr.mxu0 0.0
    %4125 = vmatpush2.msra.mxu0 0.0
    %4126 = vmatprep.subr.mxu0 0.0
    %4127 = vmatpush2.msra.mxu0 0.0
    %4128 = vmatprep.subr.mxu0 0.0
    %4129 = vmatpush2.msra.mxu0 0.0
    %4130 = vmatprep.subr.mxu0 0.0
    %4131 = vmatpush2.msra.mxu0 0.0
    %4132 = vmatprep.subr.mxu0 0.0
    %4133 = vmatpush2.msra.mxu0 0.0
    %4134 = vmatprep.subr.mxu0 0.0
    %4135 = vmatpush2.msra.mxu0 0.0
    %4136 = vmatprep.subr.mxu0 0.0
    %4137 = vmatpush2.msra.mxu0 0.0
    %4138 = vmatprep.subr.mxu0 0.0
    %4139 = vmatpush2.msra.mxu0 0.0
    %4140 = vmatprep.subr.mxu0 0.0
    %4141 = vmatpush2.msra.mxu0 0.0
    %4142 = vmatprep.subr.mxu0 0.0
    %4143 = vmatpush2.msra.mxu0 0.0
    %4144 = vmatprep.subr.mxu0 0.0
    %4145 = vmatpush2.msra.mxu0 0.0
    %4146 = vmatprep.subr.mxu0 0.0
    %4147 = vmatpush2.msra.mxu0 0.0
    %4148 = vmatprep.subr.mxu0 0.0
    %4149 = vmatpush2.msra.mxu0 0.0
    %4150 = vmatprep.mubr.f32.mxu0 0.0
    %4151 = vmatmul.mubr.f32.gmra.mxu0 %v4084
    %v4152 = vpop.f32.mrf.mxu0
    %v4153 = vadd.f32 0.0, %v4152
    %v4154 = vpop.f32.mrf.mxu0
    %4155 = vdwg.mxu0
    %4156 = vrot.lane.b32.xlu0 %v2667, 104
    %v4157 = vpop.permute.xlu0 %4156
    %v4160 = vsel %vm461, %v4079, 0
    %4162 = vmatprep.subr.mxu0 0.0
    %4163 = vmatpush1.msra.mxu0 0.0
    %4164 = vmatprep.subr.mxu0 0.0
    %4165 = vmatpush1.msra.mxu0 0.0
    %4166 = vmatprep.subr.mxu0 0.0
    %4167 = vmatpush1.msra.mxu0 0.0
    %4168 = vmatprep.subr.mxu0 0.0
    %4169 = vmatpush1.msra.mxu0 0.0
    %4170 = vmatprep.subr.mxu0 0.0
    %4171 = vmatpush1.msra.mxu0 0.0
    %4172 = vmatprep.subr.mxu0 0.0
    %4173 = vmatpush1.msra.mxu0 0.0
    %4174 = vmatprep.subr.mxu0 0.0
    %4175 = vmatpush1.msra.mxu0 0.0
    %4176 = vmatprep.subr.mxu0 0.0
    %4177 = vmatpush1.msra.mxu0 0.0
    %4178 = vmatprep.subr.mxu0 0.0
    %4179 = vmatpush1.msra.mxu0 0.0
    %4180 = vmatprep.subr.mxu0 0.0
    %4181 = vmatpush1.msra.mxu0 0.0
    %4182 = vmatprep.subr.mxu0 0.0
    %4183 = vmatpush1.msra.mxu0 0.0
    %4184 = vmatprep.subr.mxu0 0.0
    %4185 = vmatpush1.msra.mxu0 0.0
    %4186 = vmatprep.subr.mxu0 0.0
    %4187 = vmatpush1.msra.mxu0 0.0
    %4188 = vmatprep.subr.mxu0 0.0
    %4189 = vmatpush1.msra.mxu0 0.0
    %4190 = vmatprep.subr.mxu0 0.0
    %4191 = vmatpush1.msra.mxu0 0.0
    %4192 = vmatprep.subr.mxu0 0.0
    %4193 = vmatpush1.msra.mxu0 %v4157
    %4194 = vmatprep.subr.mxu0 0.0
    %4195 = vmatpush2.msra.mxu0 0.0
    %4196 = vmatprep.subr.mxu0 0.0
    %4197 = vmatpush2.msra.mxu0 0.0
    %4198 = vmatprep.subr.mxu0 0.0
    %4199 = vmatpush2.msra.mxu0 0.0
    %4200 = vmatprep.subr.mxu0 0.0
    %4201 = vmatpush2.msra.mxu0 0.0
    %4202 = vmatprep.subr.mxu0 0.0
    %4203 = vmatpush2.msra.mxu0 0.0
    %4204 = vmatprep.subr.mxu0 0.0
    %4205 = vmatpush2.msra.mxu0 0.0
    %4206 = vmatprep.subr.mxu0 0.0
    %4207 = vmatpush2.msra.mxu0 0.0
    %4208 = vmatprep.subr.mxu0 0.0
    %4209 = vmatpush2.msra.mxu0 0.0
    %4210 = vmatprep.subr.mxu0 0.0
    %4211 = vmatpush2.msra.mxu0 0.0
    %4212 = vmatprep.subr.mxu0 0.0
    %4213 = vmatpush2.msra.mxu0 0.0
    %4214 = vmatprep.subr.mxu0 0.0
    %4215 = vmatpush2.msra.mxu0 0.0
    %4216 = vmatprep.subr.mxu0 0.0
    %4217 = vmatpush2.msra.mxu0 0.0
    %4218 = vmatprep.subr.mxu0 0.0
    %4219 = vmatpush2.msra.mxu0 0.0
    %4220 = vmatprep.subr.mxu0 0.0
    %4221 = vmatpush2.msra.mxu0 0.0
    %4222 = vmatprep.subr.mxu0 0.0
    %4223 = vmatpush2.msra.mxu0 0.0
    %4224 = vmatprep.subr.mxu0 0.0
    %4225 = vmatpush2.msra.mxu0 0.0
    %4226 = vmatprep.mubr.f32.mxu0 0.0
    %4227 = vmatmul.mubr.f32.gmra.mxu0 %v4160
    %v4228 = vpop.f32.mrf.mxu0
    %v4229 = vadd.f32 0.0, %v4228
    %v4230 = vpop.f32.mrf.mxu0
    %4231 = vdwg.mxu0
    %v4233 = vsel %vm461, %v4153, 0
    %v4236 = vsel %vm461, %v4229, 0
    %4238 = vmatprep.subr.mxu0 0.0
    %4239 = vmatpush1.msra.mxu0 0.0
    %4240 = vmatprep.subr.mxu0 0.0
    %4241 = vmatpush1.msra.mxu0 0.0
    %4242 = vmatprep.subr.mxu0 0.0
    %4243 = vmatpush1.msra.mxu0 0.0
    %4244 = vmatprep.subr.mxu0 0.0
    %4245 = vmatpush1.msra.mxu0 0.0
    %4246 = vmatprep.subr.mxu0 0.0
    %4247 = vmatpush1.msra.mxu0 0.0
    %4248 = vmatprep.subr.mxu0 0.0
    %4249 = vmatpush1.msra.mxu0 0.0
    %4250 = vmatprep.subr.mxu0 0.0
    %4251 = vmatpush1.msra.mxu0 0.0
    %4252 = vmatprep.subr.mxu0 0.0
    %4253 = vmatpush1.msra.mxu0 0.0
    %4254 = vmatprep.subr.mxu0 0.0
    %4255 = vmatpush1.msra.mxu0 0.0
    %4256 = vmatprep.subr.mxu0 0.0
    %4257 = vmatpush1.msra.mxu0 0.0
    %4258 = vmatprep.subr.mxu0 0.0
    %4259 = vmatpush1.msra.mxu0 0.0
    %4260 = vmatprep.subr.mxu0 0.0
    %4261 = vmatpush1.msra.mxu0 0.0
    %4262 = vmatprep.subr.mxu0 0.0
    %4263 = vmatpush1.msra.mxu0 0.0
    %4264 = vmatprep.subr.mxu0 0.0
    %4265 = vmatpush1.msra.mxu0 0.0
    %4266 = vmatprep.subr.mxu0 0.0
    %4267 = vmatpush1.msra.mxu0 0.0
    %4268 = vmatprep.subr.mxu0 0.0
    %4269 = vmatpush1.msra.mxu0 %v2674
    %4270 = vmatprep.subr.mxu0 0.0
    %4271 = vmatpush2.msra.mxu0 0.0
    %4272 = vmatprep.subr.mxu0 0.0
    %4273 = vmatpush2.msra.mxu0 0.0
    %4274 = vmatprep.subr.mxu0 0.0
    %4275 = vmatpush2.msra.mxu0 0.0
    %4276 = vmatprep.subr.mxu0 0.0
    %4277 = vmatpush2.msra.mxu0 0.0
    %4278 = vmatprep.subr.mxu0 0.0
    %4279 = vmatpush2.msra.mxu0 0.0
    %4280 = vmatprep.subr.mxu0 0.0
    %4281 = vmatpush2.msra.mxu0 0.0
    %4282 = vmatprep.subr.mxu0 0.0
    %4283 = vmatpush2.msra.mxu0 0.0
    %4284 = vmatprep.subr.mxu0 0.0
    %4285 = vmatpush2.msra.mxu0 0.0
    %4286 = vmatprep.subr.mxu0 0.0
    %4287 = vmatpush2.msra.mxu0 0.0
    %4288 = vmatprep.subr.mxu0 0.0
    %4289 = vmatpush2.msra.mxu0 0.0
    %4290 = vmatprep.subr.mxu0 0.0
    %4291 = vmatpush2.msra.mxu0 0.0
    %4292 = vmatprep.subr.mxu0 0.0
    %4293 = vmatpush2.msra.mxu0 0.0
    %4294 = vmatprep.subr.mxu0 0.0
    %4295 = vmatpush2.msra.mxu0 0.0
    %4296 = vmatprep.subr.mxu0 0.0
    %4297 = vmatpush2.msra.mxu0 0.0
    %4298 = vmatprep.subr.mxu0 0.0
    %4299 = vmatpush2.msra.mxu0 0.0
    %4300 = vmatprep.subr.mxu0 0.0
    %4301 = vmatpush2.msra.mxu0 0.0
    %4302 = vmatprep.mubr.f32.mxu0 0.0
    %4303 = vmatmul.mubr.f32.gmra.mxu0 %v4233
    %v4304 = vpop.f32.mrf.mxu0
    %v4305 = vadd.f32 0.0, %v4304
    %v4306 = vpop.f32.mrf.mxu0
    %4307 = vmatprep.mubr.f32.mxu0 0.0
    %4308 = vmatmul.mubr.f32.gmra.mxu0 %v4236
    %v4309 = vpop.f32.mrf.mxu0
    %v4310 = vadd.f32 0.0, %v4309
    %v4311 = vpop.f32.mrf.mxu0
    %4312 = vdwg.mxu0
    %v4313 = vadd.f32 %v3900, %v4305
    %v4314 = vadd.f32 %v3901, %v4310
    %s4315 = scalar_lea.vmem %s10, 1
    %v4316 = vld [vmem:[%s4315] sm:$0x1]
    %v4318 = vlaneseq
    %v4319 = vshrl.u32 %v4318, 7
    %v4320 = vsub.s32 0, %v4319
    %v4321 = vrot.slane %v4316, %v4320
    %v4323 = vadd.f32 %v4313, %v4321
    %v4324 = vadd.f32 %v4314, %v4321
    %4325 = vst.msk [vmem:[#allocation2 + $0x1] sm:$0xff] %vm146, %v4323
    %4326 = vst.msk [vmem:[#allocation2 + $0x11] sm:$0xff] %vm146, %v4324
    %v4327 = vld [vmem:[#allocation2] sm:$0xff]
    %v4328 = vld [vmem:[#allocation2 + $0x10] sm:$0xff]
    %s4329 = scalar_lea.vmem [#allocation14], 96
    %v4330 = vld [vmem:[%s4329] sm:$0xff]
    %v4331 = vld [vmem:[%s4329 + $0x8] sm:$0xff]
    %v4332 = vld [vmem:[%s4329 + $0x10] sm:$0xff]
    %v4333 = vld [vmem:[%s4329 + $0x18] sm:$0xff]
    %v4334 = vld [vmem:[#allocation2 + $0x1] sm:$0xff]
    %v4335 = vld [vmem:[#allocation2 + $0x11] sm:$0xff]
    %s4336 = scalar_lea.vmem [#allocation14], 128
    %v4337 = vld [vmem:[%s4336] sm:$0xff]
    %v4338 = vld [vmem:[%s4336 + $0x8] sm:$0xff]
    %v4339 = vld [vmem:[%s4336 + $0x10] sm:$0xff]
    %v4340 = vld [vmem:[%s4336 + $0x18] sm:$0xff]
    %v4342 = vsel %vm146, %v4334, 0
    %v4345 = vsel %vm146, %v4335, 0
    %4347 = vmatprep.subr.mxu0 0.0
    %4348 = vmatpush1.msra.mxu0 0.0
    %4349 = vmatprep.subr.mxu0 0.0
    %4350 = vmatpush1.msra.mxu0 0.0
    %4351 = vmatprep.subr.mxu0 0.0
    %4352 = vmatpush1.msra.mxu0 0.0
    %4353 = vmatprep.subr.mxu0 0.0
    %4354 = vmatpush1.msra.mxu0 0.0
    %4355 = vmatprep.subr.mxu0 0.0
    %4356 = vmatpush1.msra.mxu0 0.0
    %4357 = vmatprep.subr.mxu0 0.0
    %4358 = vmatpush1.msra.mxu0 0.0
    %4359 = vmatprep.subr.mxu0 0.0
    %4360 = vmatpush1.msra.mxu0 0.0
    %4361 = vmatprep.subr.mxu0 0.0
    %4362 = vmatpush1.msra.mxu0 0.0
    %4363 = vmatprep.subr.mxu0 0.0
    %4364 = vmatpush1.msra.mxu0 0.0
    %4365 = vmatprep.subr.mxu0 0.0
    %4366 = vmatpush1.msra.mxu0 0.0
    %4367 = vmatprep.subr.mxu0 0.0
    %4368 = vmatpush1.msra.mxu0 0.0
    %4369 = vmatprep.subr.mxu0 0.0
    %4370 = vmatpush1.msra.mxu0 0.0
    %4371 = vmatprep.subr.mxu0 0.0
    %4372 = vmatpush1.msra.mxu0 %v4340
    %4373 = vmatprep.subr.mxu0 0.0
    %4374 = vmatpush1.msra.mxu0 %v4339
    %4375 = vmatprep.subr.mxu0 0.0
    %4376 = vmatpush1.msra.mxu0 %v4338
    %4377 = vmatprep.subr.mxu0 0.0
    %4378 = vmatpush1.msra.mxu0 %v4337
    %4379 = vmatprep.subr.mxu0 0.0
    %4380 = vmatpush2.msra.mxu0 0.0
    %4381 = vmatprep.subr.mxu0 0.0
    %4382 = vmatpush2.msra.mxu0 0.0
    %4383 = vmatprep.subr.mxu0 0.0
    %4384 = vmatpush2.msra.mxu0 0.0
    %4385 = vmatprep.subr.mxu0 0.0
    %4386 = vmatpush2.msra.mxu0 0.0
    %4387 = vmatprep.subr.mxu0 0.0
    %4388 = vmatpush2.msra.mxu0 0.0
    %4389 = vmatprep.subr.mxu0 0.0
    %4390 = vmatpush2.msra.mxu0 0.0
    %4391 = vmatprep.subr.mxu0 0.0
    %4392 = vmatpush2.msra.mxu0 0.0
    %4393 = vmatprep.subr.mxu0 0.0
    %4394 = vmatpush2.msra.mxu0 0.0
    %4395 = vmatprep.subr.mxu0 0.0
    %4396 = vmatpush2.msra.mxu0 0.0
    %4397 = vmatprep.subr.mxu0 0.0
    %4398 = vmatpush2.msra.mxu0 0.0
    %4399 = vmatprep.subr.mxu0 0.0
    %4400 = vmatpush2.msra.mxu0 0.0
    %4401 = vmatprep.subr.mxu0 0.0
    %4402 = vmatpush2.msra.mxu0 0.0
    %4403 = vmatprep.subr.mxu0 0.0
    %4404 = vmatpush2.msra.mxu0 0.0
    %4405 = vmatprep.subr.mxu0 0.0
    %4406 = vmatpush2.msra.mxu0 0.0
    %4407 = vmatprep.subr.mxu0 0.0
    %4408 = vmatpush2.msra.mxu0 0.0
    %4409 = vmatprep.subr.mxu0 0.0
    %4410 = vmatpush2.msra.mxu0 0.0
    %4411 = vmatprep.mubr.f32.mxu0 0.0
    %4412 = vmatmul.mubr.f32.gmra.mxu0 %v4342
    %v4413 = vpop.f32.mrf.mxu0
    %v4414 = vadd.f32 0.0, %v4413
    %v4415 = vpop.f32.mrf.mxu0
    %4416 = vmatprep.mubr.f32.mxu0 0.0
    %4417 = vmatmul.mubr.f32.gmra.mxu0 %v4345
    %v4418 = vpop.f32.mrf.mxu0
    %v4419 = vadd.f32 0.0, %v4418
    %v4420 = vpop.f32.mrf.mxu0
    %4421 = vdwg.mxu0
    %v4423 = vsel %vm146, %v4327, 0
    %v4426 = vsel %vm146, %v4328, 0
    %4428 = vmatprep.subr.mxu0 0.0
    %4429 = vmatpush1.msra.mxu0 0.0
    %4430 = vmatprep.subr.mxu0 0.0
    %4431 = vmatpush1.msra.mxu0 0.0
    %4432 = vmatprep.subr.mxu0 0.0
    %4433 = vmatpush1.msra.mxu0 0.0
    %4434 = vmatprep.subr.mxu0 0.0
    %4435 = vmatpush1.msra.mxu0 0.0
    %4436 = vmatprep.subr.mxu0 0.0
    %4437 = vmatpush1.msra.mxu0 0.0
    %4438 = vmatprep.subr.mxu0 0.0
    %4439 = vmatpush1.msra.mxu0 0.0
    %4440 = vmatprep.subr.mxu0 0.0
    %4441 = vmatpush1.msra.mxu0 0.0
    %4442 = vmatprep.subr.mxu0 0.0
    %4443 = vmatpush1.msra.mxu0 0.0
    %4444 = vmatprep.subr.mxu0 0.0
    %4445 = vmatpush1.msra.mxu0 0.0
    %4446 = vmatprep.subr.mxu0 0.0
    %4447 = vmatpush1.msra.mxu0 0.0
    %4448 = vmatprep.subr.mxu0 0.0
    %4449 = vmatpush1.msra.mxu0 0.0
    %4450 = vmatprep.subr.mxu0 0.0
    %4451 = vmatpush1.msra.mxu0 0.0
    %4452 = vmatprep.subr.mxu0 0.0
    %4453 = vmatpush1.msra.mxu0 %v4333
    %4454 = vmatprep.subr.mxu0 0.0
    %4455 = vmatpush1.msra.mxu0 %v4332
    %4456 = vmatprep.subr.mxu0 0.0
    %4457 = vmatpush1.msra.mxu0 %v4331
    %4458 = vmatprep.subr.mxu0 0.0
    %4459 = vmatpush1.msra.mxu0 %v4330
    %4460 = vmatprep.subr.mxu0 0.0
    %4461 = vmatpush2.msra.mxu0 0.0
    %4462 = vmatprep.subr.mxu0 0.0
    %4463 = vmatpush2.msra.mxu0 0.0
    %4464 = vmatprep.subr.mxu0 0.0
    %4465 = vmatpush2.msra.mxu0 0.0
    %4466 = vmatprep.subr.mxu0 0.0
    %4467 = vmatpush2.msra.mxu0 0.0
    %4468 = vmatprep.subr.mxu0 0.0
    %4469 = vmatpush2.msra.mxu0 0.0
    %4470 = vmatprep.subr.mxu0 0.0
    %4471 = vmatpush2.msra.mxu0 0.0
    %4472 = vmatprep.subr.mxu0 0.0
    %4473 = vmatpush2.msra.mxu0 0.0
    %4474 = vmatprep.subr.mxu0 0.0
    %4475 = vmatpush2.msra.mxu0 0.0
    %4476 = vmatprep.subr.mxu0 0.0
    %4477 = vmatpush2.msra.mxu0 0.0
    %4478 = vmatprep.subr.mxu0 0.0
    %4479 = vmatpush2.msra.mxu0 0.0
    %4480 = vmatprep.subr.mxu0 0.0
    %4481 = vmatpush2.msra.mxu0 0.0
    %4482 = vmatprep.subr.mxu0 0.0
    %4483 = vmatpush2.msra.mxu0 0.0
    %4484 = vmatprep.subr.mxu0 0.0
    %4485 = vmatpush2.msra.mxu0 0.0
    %4486 = vmatprep.subr.mxu0 0.0
    %4487 = vmatpush2.msra.mxu0 0.0
    %4488 = vmatprep.subr.mxu0 0.0
    %4489 = vmatpush2.msra.mxu0 0.0
    %4490 = vmatprep.subr.mxu0 0.0
    %4491 = vmatpush2.msra.mxu0 0.0
    %4492 = vmatprep.mubr.f32.mxu0 0.0
    %4493 = vmatmul.mubr.f32.gmra.mxu0 %v4423
    %v4494 = vpop.f32.mrf.mxu0
    %v4495 = vadd.f32 %v4414, %v4494
    %v4496 = vpop.f32.mrf.mxu0
    %4497 = vmatprep.mubr.f32.mxu0 0.0
    %4498 = vmatmul.mubr.f32.gmra.mxu0 %v4426
    %v4499 = vpop.f32.mrf.mxu0
    %v4500 = vadd.f32 %v4419, %v4499
    %v4501 = vpop.f32.mrf.mxu0
    %4502 = vdwg.mxu0
    %v4503 = vld [vmem:[#allocation2 + $0x2] sm:$0xff]
    %v4504 = vld [vmem:[#allocation2 + $0x12] sm:$0xff]
    %s4505 = scalar_lea.vmem [#allocation14], 160
    %v4506 = vld [vmem:[%s4505] sm:$0xff]
    %v4507 = vld [vmem:[%s4505 + $0x8] sm:$0xff]
    %v4508 = vld [vmem:[%s4505 + $0x10] sm:$0xff]
    %v4509 = vld [vmem:[%s4505 + $0x18] sm:$0xff]
    %v4511 = vsel %vm146, %v4503, 0
    %v4514 = vsel %vm146, %v4504, 0
    %4516 = vmatprep.subr.mxu0 0.0
    %4517 = vmatpush1.msra.mxu0 0.0
    %4518 = vmatprep.subr.mxu0 0.0
    %4519 = vmatpush1.msra.mxu0 0.0
    %4520 = vmatprep.subr.mxu0 0.0
    %4521 = vmatpush1.msra.mxu0 0.0
    %4522 = vmatprep.subr.mxu0 0.0
    %4523 = vmatpush1.msra.mxu0 0.0
    %4524 = vmatprep.subr.mxu0 0.0
    %4525 = vmatpush1.msra.mxu0 0.0
    %4526 = vmatprep.subr.mxu0 0.0
    %4527 = vmatpush1.msra.mxu0 0.0
    %4528 = vmatprep.subr.mxu0 0.0
    %4529 = vmatpush1.msra.mxu0 0.0
    %4530 = vmatprep.subr.mxu0 0.0
    %4531 = vmatpush1.msra.mxu0 0.0
    %4532 = vmatprep.subr.mxu0 0.0
    %4533 = vmatpush1.msra.mxu0 0.0
    %4534 = vmatprep.subr.mxu0 0.0
    %4535 = vmatpush1.msra.mxu0 0.0
    %4536 = vmatprep.subr.mxu0 0.0
    %4537 = vmatpush1.msra.mxu0 0.0
    %4538 = vmatprep.subr.mxu0 0.0
    %4539 = vmatpush1.msra.mxu0 0.0
    %4540 = vmatprep.subr.mxu0 0.0
    %4541 = vmatpush1.msra.mxu0 %v4509
    %4542 = vmatprep.subr.mxu0 0.0
    %4543 = vmatpush1.msra.mxu0 %v4508
    %4544 = vmatprep.subr.mxu0 0.0
    %4545 = vmatpush1.msra.mxu0 %v4507
    %4546 = vmatprep.subr.mxu0 0.0
    %4547 = vmatpush1.msra.mxu0 %v4506
    %4548 = vmatprep.subr.mxu0 0.0
    %4549 = vmatpush2.msra.mxu0 0.0
    %4550 = vmatprep.subr.mxu0 0.0
    %4551 = vmatpush2.msra.mxu0 0.0
    %4552 = vmatprep.subr.mxu0 0.0
    %4553 = vmatpush2.msra.mxu0 0.0
    %4554 = vmatprep.subr.mxu0 0.0
    %4555 = vmatpush2.msra.mxu0 0.0
    %4556 = vmatprep.subr.mxu0 0.0
    %4557 = vmatpush2.msra.mxu0 0.0
    %4558 = vmatprep.subr.mxu0 0.0
    %4559 = vmatpush2.msra.mxu0 0.0
    %4560 = vmatprep.subr.mxu0 0.0
    %4561 = vmatpush2.msra.mxu0 0.0
    %4562 = vmatprep.subr.mxu0 0.0
    %4563 = vmatpush2.msra.mxu0 0.0
    %4564 = vmatprep.subr.mxu0 0.0
    %4565 = vmatpush2.msra.mxu0 0.0
    %4566 = vmatprep.subr.mxu0 0.0
    %4567 = vmatpush2.msra.mxu0 0.0
    %4568 = vmatprep.subr.mxu0 0.0
    %4569 = vmatpush2.msra.mxu0 0.0
    %4570 = vmatprep.subr.mxu0 0.0
    %4571 = vmatpush2.msra.mxu0 0.0
    %4572 = vmatprep.subr.mxu0 0.0
    %4573 = vmatpush2.msra.mxu0 0.0
    %4574 = vmatprep.subr.mxu0 0.0
    %4575 = vmatpush2.msra.mxu0 0.0
    %4576 = vmatprep.subr.mxu0 0.0
    %4577 = vmatpush2.msra.mxu0 0.0
    %4578 = vmatprep.subr.mxu0 0.0
    %4579 = vmatpush2.msra.mxu0 0.0
    %4580 = vmatprep.mubr.f32.mxu0 0.0
    %4581 = vmatmul.mubr.f32.gmra.mxu0 %v4511
    %v4582 = vpop.f32.mrf.mxu0
    %v4583 = vadd.f32 0.0, %v4582
    %v4584 = vpop.f32.mrf.mxu0
    %4585 = vmatprep.mubr.f32.mxu0 0.0
    %4586 = vmatmul.mubr.f32.gmra.mxu0 %v4514
    %v4587 = vpop.f32.mrf.mxu0
    %v4588 = vadd.f32 0.0, %v4587
    %v4589 = vpop.f32.mrf.mxu0
    %4590 = vdwg.mxu0
    %v4591 = vadd.f32 %v4495, %v4583
    %v4592 = vadd.f32 %v4500, %v4588
    %s4593 = scalar_lea.vmem %s12, 1
    %v4594 = vld [vmem:[%s4593] sm:$0x1]
    %v4596 = vlaneseq
    %v4597 = vshrl.u32 %v4596, 7
    %v4598 = vsub.s32 0, %v4597
    %v4599 = vrot.slane %v4594, %v4598
    %v4601 = vmul.f32 %v4591, %v4599
    %v4602 = vmul.f32 %v4592, %v4599
    %s4603 = scalar_lea.vmem %s13, 1
    %v4604 = vld [vmem:[%s4603] sm:$0x1]
    %v4606 = vlaneseq
    %v4607 = vshrl.u32 %v4606, 7
    %v4608 = vsub.s32 0, %v4607
    %v4609 = vrot.slane %v4604, %v4608
    %v4611 = vadd.f32 %v4601, %v4609
    %v4612 = vadd.f32 %v4602, %v4609
    %v4613 = vmax.f32 %v4611, 0.0
    %v4614 = vmax.f32 %v4612, 0.0
    %v4615 = vadd.f32 %v4613, %v2398
    %v4616 = vadd.f32 %v4614, %v2399
    %4617 = vst.msk [vmem:[#allocation15] sm:$0xff] %vm146, %v4615
    %4618 = vst.msk [vmem:[#allocation15 + $0x8] sm:$0xff] %vm146, %v4616
    // Predicated region
    $region86: #{tpu_custom_call.1} parent=1 // pred_check
      _
    $region87: #{tpu_custom_call.1} parent=1 // pred_check_branch
      %4620 = sbr.rel (0) target = $region89
    $region88: #{tpu_custom_call.1} parent=1 // pred_region
      %s4622 = ssub.s32 256, 256
      %4623 = vsyncadd [#allocation5], %s4622
      %s4624 = sshll.u32 [#allocation15], 4
      %s4625 = int_to_ptr.vmem [resolvable:$true] %s4624
      %4630 = dma.vmem_to_hbm [thread:$0]  %s4625, 256, %s14, [#allocation5], 128, 128, 8
    $region89: #{tpu_custom_call.1} parent=1 // pred_fallthru
      _
    // Predicated region
    $region90: #{tpu_custom_call.1} parent=1 // pred_check
      _
    $region91: #{tpu_custom_call.1} parent=1 // pred_check_branch
      %4632 = sbr.rel (0) target = $region93
    $region92: #{tpu_custom_call.1} parent=1 // pred_region
      %4633 = dma.done [#allocation5], 256
    $region93: #{tpu_custom_call.1} parent=1 // pred_fallthru
      _
    %4634 = vsyncpa [#allocation4], 1
    %4635 = vsyncpa [#allocation7], 1
    %4636 = vsyncpa [#allocation10], 1
    %4637 = vsyncpa [#allocation13], 1
    %4638 = vsyncpa [#allocation5], 1

</llo_original>
